<compile_context>
chip_gen: v7x
topology: tpu7x:2x2x1
jax: 0.10.0
libtpu: 0.0.40
codegen_flags: <defaults>
</compile_context>

<pallas_src>
import jax
import jax.numpy as jnp
from jax.experimental import pallas as pl
from jax.experimental.pallas import tpu as pltpu


# ----------------------------- Pallas kernel ------------------------------ #
def _learner_kernel(x_ref, a_ref, m1_ref, t1_ref, wp_ref, t2_ref,
                    wfc_ref, vmask_ref, ssel_ref, rsum_ref, bfc_ref,
                    logits_ref, feat_ref):
    bf16 = jnp.bfloat16
    f32 = jnp.float32
    x = x_ref[...]                                   # (B*V, CinT_pad) bf16
    A = a_ref[...]                                   # (B*V, B*V)      bf16

    # conv1 (1x3, 'same') with BN scale folded into the matrix; shift + ReLU.
    # Output lane layout: [zero C1-block | t=0..T-1 C1-blocks | zero C1-block].
    h1 = jnp.dot(x, m1_ref[...], preferred_element_type=f32)
    h1 = jnp.maximum(h1 + t1_ref[...], 0.0)          # (B*V, (T+2)*C1)

    # graph aggregation 1: block-diagonal A @ h (zero pad blocks preserved).
    g1 = jnp.dot(A, h1.astype(bf16), preferred_element_type=f32)
    g1 = g1.astype(bf16)

    # conv2 + folded BN + ReLU + temporal mean, two output frames per matmul.
    C1 = wp_ref.shape[0] // 4
    C2 = wp_ref.shape[1] // 2
    n_pairs = (g1.shape[1] - 2 * C1) // (2 * C1)     # == T // 2
    wp = wp_ref[...]                                 # (4*C1, 2*C2) bf16
    t2 = t2_ref[...]                                 # (1, 2*C2)    f32
    z = jnp.zeros((x.shape[0], C2), f32)
    for j in range(n_pairs):
        lo = 2 * C1 * j                              # 128-aligned for C1 = 64
        win = g1[:, lo:lo + 4 * C1]                  # (B*V, 4*C1) value slice
        h2p = jnp.maximum(jnp.dot(win, wp, preferred_element_type=f32) + t2, 0.0)
        z = z + h2p[:, :C2] + h2p[:, C2:]
    z = z * (1.0 / (2 * n_pairs))                    # temporal mean

    # graph aggregation 2 (mean over t commutes with A): feat = A @ z.
    feat = jnp.dot(A, z.astype(bf16), preferred_element_type=f32)    # (B*V, C2)
    feat_ref[...] = feat.astype(feat_ref.dtype)

    # FC head, all on the MXU:
    #   G[(b,v), k*V+v'] = feat[(b,v),:] . Wfc[k,v',:]
    #   vmask keeps v == v', ssel row-sums per sample, rsum lane-sums per class.
    G = jnp.dot(feat.astype(bf16), wfc_ref[...], preferred_element_type=f32)
    Gm = G.astype(bf16) * vmask_ref[...]             # (B*V, KVp) bf16
    cols = jnp.dot(ssel_ref[...], Gm, preferred_element_type=f32)     # (B, KVp)
    logits = jnp.dot(cols.astype(bf16), rsum_ref[...],
                     preferred_element_type=f32) + bfc_ref[...]       # (B, Kp)
    logits_ref[...] = logits.astype(logits_ref.dtype)


# ------------------------------ glue helpers ------------------------------ #
def _fold_bn(bias, gamma, beta, mean, var, eps=1e-5):
    """Fold conv bias + eval-mode BatchNorm into a per-channel (scale, shift)."""
    scale = gamma / jnp.sqrt(var + eps)
    shift = beta - mean * scale
    return scale, bias * scale + shift


def _conv1_banded_matrix(w, scale, T, rows_pad):
    """w: (C1, Cin, 1, 3) -> (rows_pad, (T+2)*C1) matrix, (t,c) layout both sides.

    Rows: (t_in, ci) zero-padded to rows_pad; columns: one zero C1-block,
    then t_out = 0..T-1 blocks, then one zero C1-block (so downstream
    windows of the output are 128-lane aligned)."""
    C1, Cin, _, K = w.shape
    M = jnp.zeros((T, Cin, T + 2, C1), jnp.float32)
    for t_out in range(T):
        for k in range(K):
            t_in = t_out + k - 1                      # 'same' zero padding
            if 0 <= t_in < T:
                M = M.at[t_in, :, t_out + 1, :].set(w[:, :, 0, k].T * scale[None, :])
    M = M.reshape(T * Cin, (T + 2) * C1)
    return jnp.pad(M, ((0, rows_pad - T * Cin), (0, 0)))


def _conv2_pair_matrix(w, scale):
    """w: (C2, C1, 1, 3) -> shared (4*C1, 2*C2) matrix for one output-frame pair.

    Input window blocks dt = 0..3 are times t'-1..t'+2; output o = 0/1 are
    times t'+o; tap index k = dt - o (valid 0..2)."""
    C2, C1, _, K = w.shape
    assert K == 3, "pairwise conv lowering assumes a 3-tap temporal kernel"
    M = jnp.zeros((4, C1, 2, C2), jnp.float32)
    for dt in range(4):
        for o in range(2):
            k = dt - o
            if 0 <= k < K:
                M = M.at[dt, :, o, :].set(w[:, :, 0, k].T * scale[None, :])
    return M.reshape(4 * C1, 2 * C2)


# ------------------------------ forward pass ------------------------------ #
def learner_forward_pallas(x, A, p, samples_per_step=8):
    """x: (N, Cin, T, V, M) f32, A: (N, V, V) f32 -> (logits (N,K), features (N,V,C2))."""
    N, Cin, T, V, M = x.shape
    C1 = p['w1'].shape[0]
    C2 = p['w2'].shape[0]
    K = p['fc_w'].shape[0]
    assert T % 2 == 0, "pairwise conv2 lowering needs even T"
    bf16, f32 = jnp.bfloat16, jnp.float32

    Kp = 128 * (-(-K // 128))                          # lane-dense logits slab
    KV = K * V
    KVp = 128 * (-(-KV // 128))
    CinT = Cin * T
    CinT_pad = 128 * (-(-CinT // 128))                 # pad contraction to 128
    # Keep Nb (grid length) >= 2 so both v7x TensorCores get work.
    B = max(1, min(samples_per_step, N))
    Nb = -(-N // B)
    Npad = Nb * B
    BV = B * V

    # -------- activations: rows = (b, v), lanes = (t, c), padded to 128 ----- #
    x0 = x.mean(axis=-1)                               # (N, Cin, T, V)
    x0 = x0.transpose(0, 3, 2, 1).reshape(N, V, CinT)  # (N, V, T*Cin)
    x0 = jnp.pad(x0, ((0, Npad - N), (0, 0), (0, CinT_pad - CinT)))
    x0g = x0.reshape(Nb, BV, CinT_pad).astype(bf16)

    # -------- block-diagonal A per step: fused broadcast + block mask ------- #
    A_pad = jnp.pad(A, ((0, Npad - N), (0, 0), (0, 0))).astype(bf16)
    A_resh = A_pad.reshape(Nb, B, V, V)
    blk_eq = (jnp.arange(B)[:, None, None, None] ==
              jnp.arange(B)[None, None, :, None])      # (B, 1, B, 1)
    A_blk = jnp.where(blk_eq, A_resh[:, :, :, None, :],
                      jnp.zeros((), bf16)).reshape(Nb, BV, BV)

    # -------- parameters (weights only): conv/BN folds, FC constants -------- #
    s1, t1v = _fold_bn(p['b1'], p['bn1_w'], p['bn1_b'], p['bn1_m'], p['bn1_v'])
    M1p = _conv1_banded_matrix(p['w1'], s1, T, CinT_pad).astype(bf16)
    t1p = jnp.concatenate([jnp.zeros((C1,), f32), jnp.tile(t1v, T),
                           jnp.zeros((C1,), f32)])[None, :]          # (1,(T+2)*C1)

    s2, t2v = _fold_bn(p['b2'], p['bn2_w'], p['bn2_b'], p['bn2_m'], p['bn2_v'])
    Wpair = _conv2_pair_matrix(p['w2'], s2).astype(bf16)             # (4*C1, 2*C2)
    t2p = jnp.tile(t2v, 2)[None, :]                                  # (1, 2*C2)

    # FC head constants (untiled over B).
    wfc3 = p['fc_w'].reshape(K, V, C2)                               # flat = (v, c)
    Wfc = jnp.transpose(wfc3, (2, 0, 1)).reshape(C2, KV)
    Wfc = jnp.pad(Wfc, ((0, 0), (0, KVp - KV))).astype(bf16)         # (C2, KVp)
    col_ok = jnp.arange(KVp) < KV
    vmask = ((jnp.arange(BV)[:, None] % V == jnp.arange(KVp)[None, :] % V)
             & col_ok[None, :]).astype(bf16)                         # (BV, KVp)
    ssel = jnp.repeat(jnp.eye(B, dtype=f32), V, axis=1).astype(bf16) # (B, BV)
    rsum = ((jnp.arange(KVp)[:, None] // V == jnp.arange(Kp)[None, :])
            & col_ok[:, None]).astype(bf16)                          # (KVp, Kp)
    bfc = jnp.zeros((1, Kp), f32).at[0, :K].set(p['fc_b'])

    const2 = lambda g: (0, 0)
    in_specs = [
        pl.BlockSpec((None, BV, CinT_pad), lambda g: (g, 0, 0)),     # x per step
        pl.BlockSpec((None, BV, BV), lambda g: (g, 0, 0)),           # block-diag A
        pl.BlockSpec((CinT_pad, (T + 2) * C1), const2),              # conv1 matrix
        pl.BlockSpec((1, (T + 2) * C1), const2),                     # shift1 (padded)
        pl.BlockSpec((4 * C1, 2 * C2), const2),                      # conv2 pair matrix
        pl.BlockSpec((1, 2 * C2), const2),                           # shift2 (pair)
        pl.BlockSpec((C2, KVp), const2),                             # fc weight matrix
        pl.BlockSpec((BV, KVp), const2),                             # diagonal-v mask
        pl.BlockSpec((B, BV), const2),                               # per-sample row sum
        pl.BlockSpec((KVp, Kp), const2),                             # per-class lane sum
        pl.BlockSpec((1, Kp), const2),                               # fc bias (padded)
    ]
    out_specs = (
        pl.BlockSpec((None, B, Kp), lambda g: (g, 0, 0)),            # logits (padded)
        pl.BlockSpec((None, BV, C2), lambda g: (g, 0, 0)),           # features
    )
    out_shape = (
        jax.ShapeDtypeStruct((Nb, B, Kp), f32),
        jax.ShapeDtypeStruct((Nb, BV, C2), f32),
    )

    logits_o, feats_o = pl.pallas_call(
        _learner_kernel,
        grid=(Nb,),
        in_specs=in_specs,
        out_specs=out_specs,
        out_shape=out_shape,
        compiler_params=pltpu.CompilerParams(dimension_semantics=("parallel",)),
    )(x0g, A_blk, M1p, t1p, Wpair, t2p, Wfc, vmask, ssel, rsum, bfc)

    logits = logits_o.reshape(Npad, Kp)[:N, :K]                      # (N, K)
    feats = feats_o.reshape(Npad, V, C2)[:N]                         # (N, V, C2)
    return logits, feats


# --------------------------- pure-JAX reference --------------------------- #
def _reference_forward(x, A, p, eps=1e-5):
    N, Cin, T, V, M = x.shape
    h = x.mean(axis=-1).transpose(0, 1, 3, 2)                        # (N, C, V, T)

    def conv_bn_relu(h, w, b, gamma, beta, mean, var):
        y = jax.lax.conv_general_dilated(
            h, w, window_strides=(1, 1), padding=((0, 0), (1, 1)),
            dimension_numbers=('NCHW', 'OIHW', 'NCHW'))
        y = y + b[None, :, None, None]
        scale = gamma / jnp.sqrt(var + eps)
        shift = beta - mean * scale
        y = y * scale[None, :, None, None] + shift[None, :, None, None]
        return jnp.maximum(y, 0.0)

    h = conv_bn_relu(h, p['w1'], p['b1'], p['bn1_w'], p['bn1_b'], p['bn1_m'], p['bn1_v'])
    h = h.transpose(0, 2, 1, 3)
    h = jnp.einsum('bij,bjct->bict', A, h)
    h = h.transpose(0, 2, 1, 3)
    h = conv_bn_relu(h, p['w2'], p['b2'], p['bn2_w'], p['bn2_b'], p['bn2_m'], p['bn2_v'])
    h = h.transpose(0, 2, 1, 3)
    h = jnp.einsum('bij,bjct->bict', A, h)
    feat = h.mean(axis=3)                                            # (N, V, C2)
    logits = feat.reshape(N, -1) @ p['fc_w'].T + p['fc_b']
    return logits, feat


# ---------------------------------- main ----------------------------------- #
if __name__ == "__main__":
    num_joints, in_channels, out_channels, num_classes = 25, 3, 128, 5
    C1 = 64
    N, T, M = 16, 8, 2
    f32 = jnp.float32

    keys = jax.random.split(jax.random.PRNGKey(0), 16)
    p = {
        'w1': 0.1 * jax.random.normal(keys[0], (C1, in_channels, 1, 3), f32),
        'b1': 0.1 * jax.random.normal(keys[1], (C1,), f32),
        'bn1_w': 1.0 + 0.1 * jax.random.normal(keys[2], (C1,), f32),
        'bn1_b': 0.1 * jax.random.normal(keys[3], (C1,), f32),
        'bn1_m': 0.1 * jax.random.normal(keys[4], (C1,), f32),
        'bn1_v': 1.0 + 0.5 * jax.random.uniform(keys[5], (C1,), f32),
        'w2': 0.05 * jax.random.normal(keys[6], (out_channels, C1, 1, 3), f32),
        'b2': 0.1 * jax.random.normal(keys[7], (out_channels,), f32),
        'bn2_w': 1.0 + 0.1 * jax.random.normal(keys[8], (out_channels,), f32),
        'bn2_b': 0.1 * jax.random.normal(keys[9], (out_channels,), f32),
        'bn2_m': 0.1 * jax.random.normal(keys[10], (out_channels,), f32),
        'bn2_v': 1.0 + 0.5 * jax.random.uniform(keys[11], (out_channels,), f32),
        'fc_w': 0.02 * jax.random.normal(keys[12], (num_classes, out_channels * num_joints), f32),
        'fc_b': 0.1 * jax.random.normal(keys[13], (num_classes,), f32),
    }

    x = jax.random.normal(keys[14], (N, in_channels, T, num_joints, M), f32)
    A_raw = jax.random.uniform(keys[15], (N, num_joints, num_joints), f32)
    A = A_raw / A_raw.sum(axis=-1, keepdims=True)

    logits, feats = jax.jit(learner_forward_pallas)(x, A, p)
    logits = jax.block_until_ready(logits)
    feats = jax.block_until_ready(feats)

    ref_logits, ref_feats = _reference_forward(x, A, p)
    assert logits.shape == (N, num_classes)
    assert feats.shape == (N, num_joints, out_channels)
    assert bool(jnp.allclose(logits, ref_logits, atol=5e-2, rtol=5e-2))
    assert bool(jnp.allclose(feats, ref_feats, atol=5e-2, rtol=5e-2))
    print("KERNEL_OK")
</pallas_src>

<mosaic_0001>
module attributes {stable_mosaic.version = 11 : i64} {
  func.func @_learner_kernel(%arg0: i32, %arg1: memref<1x200x128xbf16, #tpu.memory_space<vmem>>, %arg2: memref<1x200x200xbf16, #tpu.memory_space<vmem>>, %arg3: memref<128x640xbf16, #tpu.memory_space<vmem>>, %arg4: memref<1x640xf32, #tpu.memory_space<vmem>>, %arg5: memref<256x256xbf16, #tpu.memory_space<vmem>>, %arg6: memref<1x256xf32, #tpu.memory_space<vmem>>, %arg7: memref<128x128xbf16, #tpu.memory_space<vmem>>, %arg8: memref<200x128xbf16, #tpu.memory_space<vmem>>, %arg9: memref<8x200xbf16, #tpu.memory_space<vmem>>, %arg10: memref<128x128xbf16, #tpu.memory_space<vmem>>, %arg11: memref<1x128xf32, #tpu.memory_space<vmem>>, %arg12: memref<1x8x128xf32, #tpu.memory_space<vmem>>, %arg13: memref<1x200x128xf32, #tpu.memory_space<vmem>>) attributes {dimension_semantics = [#tpu.dimension_semantics<parallel>], iteration_bounds = array<i64: 2>, scalar_prefetch = 0 : i64, scratch_operands = 0 : i64, tpu.core_type = #tpu.core_type<tc>, window_params = [{transform_indices = @transform_0, window_bounds = array<i64: 1, 200, 128>}, {transform_indices = @transform_1, window_bounds = array<i64: 1, 200, 200>}, {pipeline_mode = #tpu.pipeline_mode<synchronous>, transform_indices = @transform_2, window_bounds = array<i64: 128, 640>}, {pipeline_mode = #tpu.pipeline_mode<synchronous>, transform_indices = @transform_3, window_bounds = array<i64: 1, 640>}, {pipeline_mode = #tpu.pipeline_mode<synchronous>, transform_indices = @transform_4, window_bounds = array<i64: 256, 256>}, {pipeline_mode = #tpu.pipeline_mode<synchronous>, transform_indices = @transform_5, window_bounds = array<i64: 1, 256>}, {pipeline_mode = #tpu.pipeline_mode<synchronous>, transform_indices = @transform_6, window_bounds = array<i64: 128, 128>}, {pipeline_mode = #tpu.pipeline_mode<synchronous>, transform_indices = @transform_7, window_bounds = array<i64: 200, 128>}, {pipeline_mode = #tpu.pipeline_mode<synchronous>, transform_indices = @transform_8, window_bounds = array<i64: 8, 200>}, {pipeline_mode = #tpu.pipeline_mode<synchronous>, transform_indices = @transform_9, window_bounds = array<i64: 128, 128>}, {pipeline_mode = #tpu.pipeline_mode<synchronous>, transform_indices = @transform_10, window_bounds = array<i64: 1, 128>}, {transform_indices = @transform_11, window_bounds = array<i64: 1, 8, 128>}, {transform_indices = @transform_12, window_bounds = array<i64: 1, 200, 128>}]} {
    %c0 = arith.constant 0 : index
    %c0_0 = arith.constant 0 : index
    %c0_1 = arith.constant 0 : index
    %0 = vector.load %arg1[%c0, %c0_0, %c0_1] : memref<1x200x128xbf16, #tpu.memory_space<vmem>>, vector<1x200x128xbf16>
    %1 = vector.shape_cast %0 : vector<1x200x128xbf16> to vector<200x128xbf16>
    %c0_2 = arith.constant 0 : index
    %c0_3 = arith.constant 0 : index
    %c0_4 = arith.constant 0 : index
    %2 = vector.load %arg2[%c0_2, %c0_3, %c0_4] : memref<1x200x200xbf16, #tpu.memory_space<vmem>>, vector<1x200x200xbf16>
    %3 = vector.shape_cast %2 : vector<1x200x200xbf16> to vector<200x200xbf16>
    %c0_5 = arith.constant 0 : index
    %c0_6 = arith.constant 0 : index
    %4 = vector.load %arg3[%c0_5, %c0_6] : memref<128x640xbf16, #tpu.memory_space<vmem>>, vector<128x640xbf16>
    %cst = arith.constant dense<0.000000e+00> : vector<200x640xf32>
    %5 = tpu.matmul %1, %4, %cst {dimension_numbers = #tpu.dot_dimension_numbers<[1], [0], [0], [1], [0, 0, 1, 1], [], []>} : vector<200x128xbf16>, vector<128x640xbf16>, vector<200x640xf32> -> vector<200x640xf32>
    %c0_7 = arith.constant 0 : index
    %c0_8 = arith.constant 0 : index
    %6 = vector.load %arg4[%c0_7, %c0_8] : memref<1x640xf32, #tpu.memory_space<vmem>>, vector<1x640xf32>
    %7 = vector.broadcast %6 : vector<1x640xf32> to vector<200x640xf32>
    %8 = arith.addf %5, %7 : vector<200x640xf32>
    %cst_9 = arith.constant 0.000000e+00 : f32
    %9 = vector.broadcast %cst_9 : f32 to vector<200x640xf32>
    %10 = arith.maximumf %8, %9 : vector<200x640xf32>
    %11 = arith.truncf %10 : vector<200x640xf32> to vector<200x640xbf16>
    %cst_10 = arith.constant dense<0.000000e+00> : vector<200x640xf32>
    %12 = tpu.matmul %3, %11, %cst_10 {dimension_numbers = #tpu.dot_dimension_numbers<[1], [0], [0], [1], [0, 0, 1, 1], [], []>} : vector<200x200xbf16>, vector<200x640xbf16>, vector<200x640xf32> -> vector<200x640xf32>
    %13 = arith.truncf %12 : vector<200x640xf32> to vector<200x640xbf16>
    %c0_11 = arith.constant 0 : index
    %c0_12 = arith.constant 0 : index
    %14 = vector.load %arg5[%c0_11, %c0_12] : memref<256x256xbf16, #tpu.memory_space<vmem>>, vector<256x256xbf16>
    %c0_13 = arith.constant 0 : index
    %c0_14 = arith.constant 0 : index
    %15 = vector.load %arg6[%c0_13, %c0_14] : memref<1x256xf32, #tpu.memory_space<vmem>>, vector<1x256xf32>
    %cst_15 = arith.constant 0.000000e+00 : f32
    %16 = vector.broadcast %cst_15 : f32 to vector<200x128xf32>
    %17 = vector.extract_strided_slice %13 {offsets = [0, 0], sizes = [200, 256], strides = [1, 1]} : vector<200x640xbf16> to vector<200x256xbf16>
    %cst_16 = arith.constant dense<0.000000e+00> : vector<200x256xf32>
    %18 = tpu.matmul %17, %14, %cst_16 {dimension_numbers = #tpu.dot_dimension_numbers<[1], [0], [0], [1], [0, 0, 1, 1], [], []>} : vector<200x256xbf16>, vector<256x256xbf16>, vector<200x256xf32> -> vector<200x256xf32>
    %19 = vector.broadcast %15 : vector<1x256xf32> to vector<200x256xf32>
    %20 = arith.addf %18, %19 : vector<200x256xf32>
    %cst_17 = arith.constant 0.000000e+00 : f32
    %21 = vector.broadcast %cst_17 : f32 to vector<200x256xf32>
    %22 = arith.maximumf %20, %21 : vector<200x256xf32>
    %23 = vector.extract_strided_slice %22 {offsets = [0, 0], sizes = [200, 128], strides = [1, 1]} : vector<200x256xf32> to vector<200x128xf32>
    %24 = arith.addf %16, %23 : vector<200x128xf32>
    %25 = vector.extract_strided_slice %22 {offsets = [0, 128], sizes = [200, 128], strides = [1, 1]} : vector<200x256xf32> to vector<200x128xf32>
    %26 = arith.addf %24, %25 : vector<200x128xf32>
    %27 = vector.extract_strided_slice %13 {offsets = [0, 128], sizes = [200, 256], strides = [1, 1]} : vector<200x640xbf16> to vector<200x256xbf16>
    %cst_18 = arith.constant dense<0.000000e+00> : vector<200x256xf32>
    %28 = tpu.matmul %27, %14, %cst_18 {dimension_numbers = #tpu.dot_dimension_numbers<[1], [0], [0], [1], [0, 0, 1, 1], [], []>} : vector<200x256xbf16>, vector<256x256xbf16>, vector<200x256xf32> -> vector<200x256xf32>
    %29 = vector.broadcast %15 : vector<1x256xf32> to vector<200x256xf32>
    %30 = arith.addf %28, %29 : vector<200x256xf32>
    %cst_19 = arith.constant 0.000000e+00 : f32
    %31 = vector.broadcast %cst_19 : f32 to vector<200x256xf32>
    %32 = arith.maximumf %30, %31 : vector<200x256xf32>
    %33 = vector.extract_strided_slice %32 {offsets = [0, 0], sizes = [200, 128], strides = [1, 1]} : vector<200x256xf32> to vector<200x128xf32>
    %34 = arith.addf %26, %33 : vector<200x128xf32>
    %35 = vector.extract_strided_slice %32 {offsets = [0, 128], sizes = [200, 128], strides = [1, 1]} : vector<200x256xf32> to vector<200x128xf32>
    %36 = arith.addf %34, %35 : vector<200x128xf32>
    %37 = vector.extract_strided_slice %13 {offsets = [0, 256], sizes = [200, 256], strides = [1, 1]} : vector<200x640xbf16> to vector<200x256xbf16>
    %cst_20 = arith.constant dense<0.000000e+00> : vector<200x256xf32>
    %38 = tpu.matmul %37, %14, %cst_20 {dimension_numbers = #tpu.dot_dimension_numbers<[1], [0], [0], [1], [0, 0, 1, 1], [], []>} : vector<200x256xbf16>, vector<256x256xbf16>, vector<200x256xf32> -> vector<200x256xf32>
    %39 = vector.broadcast %15 : vector<1x256xf32> to vector<200x256xf32>
    %40 = arith.addf %38, %39 : vector<200x256xf32>
    %cst_21 = arith.constant 0.000000e+00 : f32
    %41 = vector.broadcast %cst_21 : f32 to vector<200x256xf32>
    %42 = arith.maximumf %40, %41 : vector<200x256xf32>
    %43 = vector.extract_strided_slice %42 {offsets = [0, 0], sizes = [200, 128], strides = [1, 1]} : vector<200x256xf32> to vector<200x128xf32>
    %44 = arith.addf %36, %43 : vector<200x128xf32>
    %45 = vector.extract_strided_slice %42 {offsets = [0, 128], sizes = [200, 128], strides = [1, 1]} : vector<200x256xf32> to vector<200x128xf32>
    %46 = arith.addf %44, %45 : vector<200x128xf32>
    %47 = vector.extract_strided_slice %13 {offsets = [0, 384], sizes = [200, 256], strides = [1, 1]} : vector<200x640xbf16> to vector<200x256xbf16>
    %cst_22 = arith.constant dense<0.000000e+00> : vector<200x256xf32>
    %48 = tpu.matmul %47, %14, %cst_22 {dimension_numbers = #tpu.dot_dimension_numbers<[1], [0], [0], [1], [0, 0, 1, 1], [], []>} : vector<200x256xbf16>, vector<256x256xbf16>, vector<200x256xf32> -> vector<200x256xf32>
    %49 = vector.broadcast %15 : vector<1x256xf32> to vector<200x256xf32>
    %50 = arith.addf %48, %49 : vector<200x256xf32>
    %cst_23 = arith.constant 0.000000e+00 : f32
    %51 = vector.broadcast %cst_23 : f32 to vector<200x256xf32>
    %52 = arith.maximumf %50, %51 : vector<200x256xf32>
    %53 = vector.extract_strided_slice %52 {offsets = [0, 0], sizes = [200, 128], strides = [1, 1]} : vector<200x256xf32> to vector<200x128xf32>
    %54 = arith.addf %46, %53 : vector<200x128xf32>
    %55 = vector.extract_strided_slice %52 {offsets = [0, 128], sizes = [200, 128], strides = [1, 1]} : vector<200x256xf32> to vector<200x128xf32>
    %56 = arith.addf %54, %55 : vector<200x128xf32>
    %cst_24 = arith.constant 1.250000e-01 : f32
    %57 = vector.broadcast %cst_24 : f32 to vector<200x128xf32>
    %58 = arith.mulf %56, %57 : vector<200x128xf32>
    %59 = arith.truncf %58 : vector<200x128xf32> to vector<200x128xbf16>
    %cst_25 = arith.constant dense<0.000000e+00> : vector<200x128xf32>
    %60 = tpu.matmul %3, %59, %cst_25 {dimension_numbers = #tpu.dot_dimension_numbers<[1], [0], [0], [1], [0, 0, 1, 1], [], []>} : vector<200x200xbf16>, vector<200x128xbf16>, vector<200x128xf32> -> vector<200x128xf32>
    %c0_26 = arith.constant 0 : index
    %c0_27 = arith.constant 0 : index
    %c0_28 = arith.constant 0 : index
    %61 = vector.load %arg13[%c0_26, %c0_27, %c0_28] : memref<1x200x128xf32, #tpu.memory_space<vmem>>, vector<1x200x128xf32>
    %62 = vector.shape_cast %61 : vector<1x200x128xf32> to vector<200x128xf32>
    %63 = vector.shape_cast %60 : vector<200x128xf32> to vector<1x200x128xf32>
    tpu.vector_store %arg13[%c0_26, %c0_27, %c0_28], %63 {strides = array<i32>} : memref<1x200x128xf32, #tpu.memory_space<vmem>>, vector<1x200x128xf32>,
    %64 = arith.truncf %60 : vector<200x128xf32> to vector<200x128xbf16>
    %c0_29 = arith.constant 0 : index
    %c0_30 = arith.constant 0 : index
    %65 = vector.load %arg7[%c0_29, %c0_30] : memref<128x128xbf16, #tpu.memory_space<vmem>>, vector<128x128xbf16>
    %cst_31 = arith.constant dense<0.000000e+00> : vector<200x128xf32>
    %66 = tpu.matmul %64, %65, %cst_31 {dimension_numbers = #tpu.dot_dimension_numbers<[1], [0], [0], [1], [0, 0, 1, 1], [], []>} : vector<200x128xbf16>, vector<128x128xbf16>, vector<200x128xf32> -> vector<200x128xf32>
    %67 = arith.truncf %66 : vector<200x128xf32> to vector<200x128xbf16>
    %c0_32 = arith.constant 0 : index
    %c0_33 = arith.constant 0 : index
    %68 = vector.load %arg8[%c0_32, %c0_33] : memref<200x128xbf16, #tpu.memory_space<vmem>>, vector<200x128xbf16>
    %69 = arith.mulf %67, %68 : vector<200x128xbf16>
    %c0_34 = arith.constant 0 : index
    %c0_35 = arith.constant 0 : index
    %70 = vector.load %arg9[%c0_34, %c0_35] : memref<8x200xbf16, #tpu.memory_space<vmem>>, vector<8x200xbf16>
    %cst_36 = arith.constant dense<0.000000e+00> : vector<8x128xf32>
    %71 = tpu.matmul %70, %69, %cst_36 {dimension_numbers = #tpu.dot_dimension_numbers<[1], [0], [0], [1], [0, 0, 1, 1], [], []>} : vector<8x200xbf16>, vector<200x128xbf16>, vector<8x128xf32> -> vector<8x128xf32>
    %72 = arith.truncf %71 : vector<8x128xf32> to vector<8x128xbf16>
    %c0_37 = arith.constant 0 : index
    %c0_38 = arith.constant 0 : index
    %73 = vector.load %arg10[%c0_37, %c0_38] : memref<128x128xbf16, #tpu.memory_space<vmem>>, vector<128x128xbf16>
    %cst_39 = arith.constant dense<0.000000e+00> : vector<8x128xf32>
    %74 = tpu.matmul %72, %73, %cst_39 {dimension_numbers = #tpu.dot_dimension_numbers<[1], [0], [0], [1], [0, 0, 1, 1], [], []>} : vector<8x128xbf16>, vector<128x128xbf16>, vector<8x128xf32> -> vector<8x128xf32>
    %c0_40 = arith.constant 0 : index
    %c0_41 = arith.constant 0 : index
    %75 = vector.load %arg11[%c0_40, %c0_41] : memref<1x128xf32, #tpu.memory_space<vmem>>, vector<1x128xf32>
    %76 = vector.broadcast %75 : vector<1x128xf32> to vector<8x128xf32>
    %77 = arith.addf %74, %76 : vector<8x128xf32>
    %c0_42 = arith.constant 0 : index
    %c0_43 = arith.constant 0 : index
    %c0_44 = arith.constant 0 : index
    %78 = vector.load %arg12[%c0_42, %c0_43, %c0_44] : memref<1x8x128xf32, #tpu.memory_space<vmem>>, vector<1x8x128xf32>
    %79 = vector.shape_cast %78 : vector<1x8x128xf32> to vector<8x128xf32>
    %80 = vector.shape_cast %77 : vector<8x128xf32> to vector<1x8x128xf32>
    tpu.vector_store %arg12[%c0_42, %c0_43, %c0_44], %80 {strides = array<i32>} : memref<1x8x128xf32, #tpu.memory_space<vmem>>, vector<1x8x128xf32>,
    return
  }
  func.func @transform_0(%arg0: i32) -> (i32, i32, i32) {
    %c0_i32 = arith.constant 0 : i32
    %c0_i32_0 = arith.constant 0 : i32
    %c0_i32_1 = arith.constant 0 : i32
    return %arg0, %c0_i32, %c0_i32_0 : i32, i32, i32
  }
  func.func @transform_1(%arg0: i32) -> (i32, i32, i32) {
    %c0_i32 = arith.constant 0 : i32
    %c0_i32_0 = arith.constant 0 : i32
    %c0_i32_1 = arith.constant 0 : i32
    return %arg0, %c0_i32, %c0_i32_0 : i32, i32, i32
  }
  func.func @transform_2(%arg0: i32) -> (i32, i32) {
    %c0_i32 = arith.constant 0 : i32
    %c0_i32_0 = arith.constant 0 : i32
    %c0_i32_1 = arith.constant 0 : i32
    return %c0_i32, %c0_i32_0 : i32, i32
  }
  func.func @transform_3(%arg0: i32) -> (i32, i32) {
    %c0_i32 = arith.constant 0 : i32
    %c0_i32_0 = arith.constant 0 : i32
    %c0_i32_1 = arith.constant 0 : i32
    return %c0_i32, %c0_i32_0 : i32, i32
  }
  func.func @transform_4(%arg0: i32) -> (i32, i32) {
    %c0_i32 = arith.constant 0 : i32
    %c0_i32_0 = arith.constant 0 : i32
    %c0_i32_1 = arith.constant 0 : i32
    return %c0_i32, %c0_i32_0 : i32, i32
  }
  func.func @transform_5(%arg0: i32) -> (i32, i32) {
    %c0_i32 = arith.constant 0 : i32
    %c0_i32_0 = arith.constant 0 : i32
    %c0_i32_1 = arith.constant 0 : i32
    return %c0_i32, %c0_i32_0 : i32, i32
  }
  func.func @transform_6(%arg0: i32) -> (i32, i32) {
    %c0_i32 = arith.constant 0 : i32
    %c0_i32_0 = arith.constant 0 : i32
    %c0_i32_1 = arith.constant 0 : i32
    return %c0_i32, %c0_i32_0 : i32, i32
  }
  func.func @transform_7(%arg0: i32) -> (i32, i32) {
    %c0_i32 = arith.constant 0 : i32
    %c0_i32_0 = arith.constant 0 : i32
    %c0_i32_1 = arith.constant 0 : i32
    return %c0_i32, %c0_i32_0 : i32, i32
  }
  func.func @transform_8(%arg0: i32) -> (i32, i32) {
    %c0_i32 = arith.constant 0 : i32
    %c0_i32_0 = arith.constant 0 : i32
    %c0_i32_1 = arith.constant 0 : i32
    return %c0_i32, %c0_i32_0 : i32, i32
  }
  func.func @transform_9(%arg0: i32) -> (i32, i32) {
    %c0_i32 = arith.constant 0 : i32
    %c0_i32_0 = arith.constant 0 : i32
    %c0_i32_1 = arith.constant 0 : i32
    return %c0_i32, %c0_i32_0 : i32, i32
  }
  func.func @transform_10(%arg0: i32) -> (i32, i32) {
    %c0_i32 = arith.constant 0 : i32
    %c0_i32_0 = arith.constant 0 : i32
    %c0_i32_1 = arith.constant 0 : i32
    return %c0_i32, %c0_i32_0 : i32, i32
  }
  func.func @transform_11(%arg0: i32) -> (i32, i32, i32) {
    %c0_i32 = arith.constant 0 : i32
    %c0_i32_0 = arith.constant 0 : i32
    %c0_i32_1 = arith.constant 0 : i32
    return %arg0, %c0_i32, %c0_i32_0 : i32, i32, i32
  }
  func.func @transform_12(%arg0: i32) -> (i32, i32, i32) {
    %c0_i32 = arith.constant 0 : i32
    %c0_i32_0 = arith.constant 0 : i32
    %c0_i32_1 = arith.constant 0 : i32
    return %arg0, %c0_i32, %c0_i32_0 : i32, i32, i32
  }
}

</mosaic_0001>

<llo_original>
// kernel: tile.13
$region0: #{tile.13}
  #allocation0 [shape = 's32[1]{0}', space=sflag, size = 0x4, scoped, tag = 'scoped memory for tile.13']
  %s0 = inlined_call_operand.vmem [shape: f32[64], index: 0, kind: input, shape index: {}]
  %s1 = inlined_call_operand.vmem [shape: f32[8,64], index: 1, kind: output, shape index: {}]
  // Predicated region
  $region2: #{tile.13} parent=0 // pred_check
    _
  $region3: #{tile.13} parent=0 // pred_check_branch
    %3 = sbr.rel (0) target = $region5
  $region4: #{tile.13} parent=0 // pred_region
    _
  $region5: #{tile.13} parent=0 // pred_fallthru
    _
  %v4 = vld [vmem:[%s0] ss:$0 sm:$0xff]
  %5 = vst [vmem:[%s1] sm:$0xff] %v4

// kernel: tile.14
$region0: #{tile.14}
  %s0 = inlined_call_operand.vmem [shape: f32[8,64], index: 0, kind: input, shape index: {}]
  %s1 = inlined_call_operand.vmem [shape: f32[512], index: 1, kind: output, shape index: {}]
  $region1: #{tile.14} parent=0
    #allocation0 [shape = 'u8[4096]{0}', space=vmem, size = 0x1000, scoped, tag = 'scoped mem for output reshape']
    %v2 = vld [vmem:[%s0] ss:$2 sm:$0xf]
    %vm3 = vcmask 523264
    %4 = vst.msk [vmem:[#allocation0] sm:$0xf] %vm3, %v2
    %s5 = scalar_lea.vmem %s0, 1
    %v6 = vld [vmem:[%s5] ss:$2 sm:$0xf]
    %7 = vrot.lane.b32.xlu0 %v6, 64
    %v8 = vpop.permute.xlu0 %7
    %vm9 = vcmask 1048064
    %10 = vst.msk [vmem:[#allocation0] sm:$0xf] %vm9, %v8
    %s12 = sshllo.u32 0, 4
    %v14 = vld [vmem:[#allocation0] sm:%s12]
    %s15 = sshllo.u32 0, 4
    %16 = vst [vmem:[%s1] sm:%s15] %v14

// kernel: tile.18
$region0: #{tile.18}
  #allocation0 [shape = 's32[1]{0}', space=sflag, size = 0x4, scoped, tag = 'scoped memory for tile.18']
  %s0 = inlined_call_operand.vmem [shape: f32[128], index: 0, kind: input, shape index: {}]
  %s1 = inlined_call_operand.vmem [shape: f32[2,128], index: 1, kind: output, shape index: {}]
  // Predicated region
  $region2: #{tile.18} parent=0 // pred_check
    _
  $region3: #{tile.18} parent=0 // pred_check_branch
    %3 = sbr.rel (0) target = $region5
  $region4: #{tile.18} parent=0 // pred_region
    _
  $region5: #{tile.18} parent=0 // pred_fallthru
    _
  %v4 = vld [vmem:[%s0] ss:$0 sm:$0xff]
  %5 = vst [vmem:[%s1] sm:$0x3] %v4

// kernel: learner_forward_pallas.1
$region0: #{learner_forward_pallas.1}
  #allocation0 [shape = 'u32[]', space=smem, size = 0x4, offset = 0x4, fixed_abs, tag = 'smem constant byte address 0x4 - core index']
  #allocation1 [shape = 'u32[144,128]{1,0:T(1,128)}', space=vmem, size = 0x12000, scoped, tag = 'internal scratch']
  %s0 = inlined_call_operand.vmem [shape: bf16[2,200,128], index: 0, kind: input, shape index: {}]
  %s1 = inlined_call_operand.vmem [shape: bf16[2,200,200], index: 1, kind: input, shape index: {}]
  %s2 = inlined_call_operand.vmem [shape: bf16[128,640], index: 2, kind: input, shape index: {}]
  %s3 = inlined_call_operand.vmem [shape: f32[1,640], index: 3, kind: input, shape index: {}]
  %s4 = inlined_call_operand.vmem [shape: bf16[256,256], index: 4, kind: input, shape index: {}]
  %s5 = inlined_call_operand.vmem [shape: f32[1,256], index: 5, kind: input, shape index: {}]
  %s6 = inlined_call_operand.vmem [shape: bf16[128,128], index: 6, kind: input, shape index: {}]
  %s7 = inlined_call_operand.vmem [shape: bf16[200,128], index: 7, kind: input, shape index: {}]
  %s8 = inlined_call_operand.vmem [shape: bf16[8,200], index: 8, kind: input, shape index: {}]
  %s9 = inlined_call_operand.vmem [shape: bf16[128,128], index: 9, kind: input, shape index: {}]
  %s10 = inlined_call_operand.vmem [shape: f32[1,128], index: 10, kind: input, shape index: {}]
  %s11 = inlined_call_operand.vmem [shape: f32[2,8,128], index: 11, kind: output, shape index: {0}]
  %s12 = inlined_call_operand.vmem [shape: f32[2,200,128], index: 12, kind: output, shape index: {1}]
  %13 = xla_tuple %s11, %s12
  %s14 = sld [smem:[#allocation0]]
  $region85: #{learner_forward_pallas.1} parent=0
    _
  %s16 = ssub.s32 1, %s14
  %s17 = scalar_select 0, %s16, %s14
  loop: start=0, step=1, limit=4
  $region2: #{learner_forward_pallas.1} parent=0 // loop_pre_header
    _
  $region3: #{learner_forward_pallas.1} parent=0 // loop_header
    %s19 = sphi 0, %s23
    %p20 = scmp.ge.s32.totalorder %s19, 4
    %s29 = sphi 0, %s31
    %s32 = sphi 0, %s29
    %s33 = sphi 0, %s32
    %s49 = sphi 0, %s33
    %s55 = sphi 0, %s57
    %s58 = sphi 0, %s55
    %s59 = sphi 0, %s58
    %s75 = sphi 0, %s59
    %s79 = sphi 0, %s79
    %s81 = sphi 0, %s79
    %s82 = sphi 0, %s81
    %s96 = sphi 0, %s82
    %s100 = sphi 0, %s100
    %s102 = sphi 0, %s100
    %s103 = sphi 0, %s102
    %s117 = sphi 0, %s103
    %s121 = sphi 0, %s121
    %s123 = sphi 0, %s121
    %s124 = sphi 0, %s123
    %s138 = sphi 0, %s124
    %s142 = sphi 0, %s142
    %s144 = sphi 0, %s142
    %s145 = sphi 0, %s144
    %s159 = sphi 0, %s145
    %s163 = sphi 0, %s163
    %s165 = sphi 0, %s163
    %s166 = sphi 0, %s165
    %s180 = sphi 0, %s166
    %s184 = sphi 0, %s184
    %s186 = sphi 0, %s184
    %s187 = sphi 0, %s186
    %s201 = sphi 0, %s187
    %s205 = sphi 0, %s205
    %s207 = sphi 0, %s205
    %s208 = sphi 0, %s207
    %s222 = sphi 0, %s208
    %s226 = sphi 0, %s226
    %s228 = sphi 0, %s226
    %s229 = sphi 0, %s228
    %s243 = sphi 0, %s229
    %s247 = sphi 0, %s247
    %s249 = sphi 0, %s247
    %s250 = sphi 0, %s249
    %s264 = sphi 0, %s250
    %s270 = sphi 0, %s272
    %s273 = sphi 0, %s270
    %s274 = sphi 0, %s273
    %s290 = sphi 0, %s274
    %s296 = sphi 0, %s298
    %s299 = sphi 0, %s296
    %s300 = sphi 0, %s299
    %s316 = sphi 0, %s300
  $region4: #{learner_forward_pallas.1} parent=0 // loop_header_branch
    %22 = sbr.rel (%p20) target = $region8
  $region5: #{learner_forward_pallas.1} parent=0 // loop_body
    %s24 = ssub.s32 %s19, 1
    %s25 = ssub.s32 %s19, 2
    %s26 = sadd.s32 %s19, 1
    %s27 = ssub.s32 %s19, %s26
    %p28 = scmp.eq.s32.totalorder %s27, 0
    %s30 = sadd.s32 %s29, 1
    %s31 = scalar_select %p28, %s29, %s30
    %p34 = pneg %p28
    %p35 = scmp.eq.s32.totalorder %s19, 1
    %p36 = por %p34, %p35
    %p37 = scmp.ne.s32.totalorder %s29, %s32
    %p38 = scmp.eq.s32.totalorder %s19, 0
    %p39 = por %p37, %p38
    %p40 = scmp.ne.s32.totalorder %s29, %s32
    %p41 = scmp.eq.s32.totalorder %s24, 1
    %p42 = por %p40, %p41
    %p43 = scmp.ne.s32.totalorder %s32, %s33
    %p44 = scmp.eq.s32.totalorder %s24, 0
    %p45 = por %p43, %p44
    %p46 = scmp.ne.s32.totalorder %s32, %s33
    %p47 = scmp.eq.s32.totalorder %s25, 1
    %p48 = por %p46, %p47
    %p50 = scmp.ne.s32.totalorder %s33, %s49
    %p51 = scmp.eq.s32.totalorder %s25, 0
    %p52 = por %p50, %p51
    %s53 = ssub.s32 %s19, %s26
    %p54 = scmp.eq.s32.totalorder %s53, 0
    %s56 = sadd.s32 %s55, 1
    %s57 = scalar_select %p54, %s55, %s56
    %p60 = pneg %p54
    %p61 = scmp.eq.s32.totalorder %s19, 1
    %p62 = por %p60, %p61
    %p63 = scmp.ne.s32.totalorder %s55, %s58
    %p64 = scmp.eq.s32.totalorder %s19, 0
    %p65 = por %p63, %p64
    %p66 = scmp.ne.s32.totalorder %s55, %s58
    %p67 = scmp.eq.s32.totalorder %s24, 1
    %p68 = por %p66, %p67
    %p69 = scmp.ne.s32.totalorder %s58, %s59
    %p70 = scmp.eq.s32.totalorder %s24, 0
    %p71 = por %p69, %p70
    %p72 = scmp.ne.s32.totalorder %s58, %s59
    %p73 = scmp.eq.s32.totalorder %s25, 1
    %p74 = por %p72, %p73
    %p76 = scmp.ne.s32.totalorder %s59, %s75
    %p77 = scmp.eq.s32.totalorder %s25, 0
    %p78 = por %p76, %p77
    %s80 = sadd.s32 %s79, 1
    %p83 = scmp.eq.s32.totalorder %s19, 1
    %p84 = scmp.ne.s32.totalorder %s79, %s81
    %p85 = scmp.eq.s32.totalorder %s19, 0
    %p86 = por %p84, %p85
    %p87 = scmp.ne.s32.totalorder %s79, %s81
    %p88 = scmp.eq.s32.totalorder %s24, 1
    %p89 = por %p87, %p88
    %p90 = scmp.ne.s32.totalorder %s81, %s82
    %p91 = scmp.eq.s32.totalorder %s24, 0
    %p92 = por %p90, %p91
    %p93 = scmp.ne.s32.totalorder %s81, %s82
    %p94 = scmp.eq.s32.totalorder %s25, 1
    %p95 = por %p93, %p94
    %p97 = scmp.ne.s32.totalorder %s82, %s96
    %p98 = scmp.eq.s32.totalorder %s25, 0
    %p99 = por %p97, %p98
    %s101 = sadd.s32 %s100, 1
    %p104 = scmp.eq.s32.totalorder %s19, 1
    %p105 = scmp.ne.s32.totalorder %s100, %s102
    %p106 = scmp.eq.s32.totalorder %s19, 0
    %p107 = por %p105, %p106
    %p108 = scmp.ne.s32.totalorder %s100, %s102
    %p109 = scmp.eq.s32.totalorder %s24, 1
    %p110 = por %p108, %p109
    %p111 = scmp.ne.s32.totalorder %s102, %s103
    %p112 = scmp.eq.s32.totalorder %s24, 0
    %p113 = por %p111, %p112
    %p114 = scmp.ne.s32.totalorder %s102, %s103
    %p115 = scmp.eq.s32.totalorder %s25, 1
    %p116 = por %p114, %p115
    %p118 = scmp.ne.s32.totalorder %s103, %s117
    %p119 = scmp.eq.s32.totalorder %s25, 0
    %p120 = por %p118, %p119
    %s122 = sadd.s32 %s121, 1
    %p125 = scmp.eq.s32.totalorder %s19, 1
    %p126 = scmp.ne.s32.totalorder %s121, %s123
    %p127 = scmp.eq.s32.totalorder %s19, 0
    %p128 = por %p126, %p127
    %p129 = scmp.ne.s32.totalorder %s121, %s123
    %p130 = scmp.eq.s32.totalorder %s24, 1
    %p131 = por %p129, %p130
    %p132 = scmp.ne.s32.totalorder %s123, %s124
    %p133 = scmp.eq.s32.totalorder %s24, 0
    %p134 = por %p132, %p133
    %p135 = scmp.ne.s32.totalorder %s123, %s124
    %p136 = scmp.eq.s32.totalorder %s25, 1
    %p137 = por %p135, %p136
    %p139 = scmp.ne.s32.totalorder %s124, %s138
    %p140 = scmp.eq.s32.totalorder %s25, 0
    %p141 = por %p139, %p140
    %s143 = sadd.s32 %s142, 1
    %p146 = scmp.eq.s32.totalorder %s19, 1
    %p147 = scmp.ne.s32.totalorder %s142, %s144
    %p148 = scmp.eq.s32.totalorder %s19, 0
    %p149 = por %p147, %p148
    %p150 = scmp.ne.s32.totalorder %s142, %s144
    %p151 = scmp.eq.s32.totalorder %s24, 1
    %p152 = por %p150, %p151
    %p153 = scmp.ne.s32.totalorder %s144, %s145
    %p154 = scmp.eq.s32.totalorder %s24, 0
    %p155 = por %p153, %p154
    %p156 = scmp.ne.s32.totalorder %s144, %s145
    %p157 = scmp.eq.s32.totalorder %s25, 1
    %p158 = por %p156, %p157
    %p160 = scmp.ne.s32.totalorder %s145, %s159
    %p161 = scmp.eq.s32.totalorder %s25, 0
    %p162 = por %p160, %p161
    %s164 = sadd.s32 %s163, 1
    %p167 = scmp.eq.s32.totalorder %s19, 1
    %p168 = scmp.ne.s32.totalorder %s163, %s165
    %p169 = scmp.eq.s32.totalorder %s19, 0
    %p170 = por %p168, %p169
    %p171 = scmp.ne.s32.totalorder %s163, %s165
    %p172 = scmp.eq.s32.totalorder %s24, 1
    %p173 = por %p171, %p172
    %p174 = scmp.ne.s32.totalorder %s165, %s166
    %p175 = scmp.eq.s32.totalorder %s24, 0
    %p176 = por %p174, %p175
    %p177 = scmp.ne.s32.totalorder %s165, %s166
    %p178 = scmp.eq.s32.totalorder %s25, 1
    %p179 = por %p177, %p178
    %p181 = scmp.ne.s32.totalorder %s166, %s180
    %p182 = scmp.eq.s32.totalorder %s25, 0
    %p183 = por %p181, %p182
    %s185 = sadd.s32 %s184, 1
    %p188 = scmp.eq.s32.totalorder %s19, 1
    %p189 = scmp.ne.s32.totalorder %s184, %s186
    %p190 = scmp.eq.s32.totalorder %s19, 0
    %p191 = por %p189, %p190
    %p192 = scmp.ne.s32.totalorder %s184, %s186
    %p193 = scmp.eq.s32.totalorder %s24, 1
    %p194 = por %p192, %p193
    %p195 = scmp.ne.s32.totalorder %s186, %s187
    %p196 = scmp.eq.s32.totalorder %s24, 0
    %p197 = por %p195, %p196
    %p198 = scmp.ne.s32.totalorder %s186, %s187
    %p199 = scmp.eq.s32.totalorder %s25, 1
    %p200 = por %p198, %p199
    %p202 = scmp.ne.s32.totalorder %s187, %s201
    %p203 = scmp.eq.s32.totalorder %s25, 0
    %p204 = por %p202, %p203
    %s206 = sadd.s32 %s205, 1
    %p209 = scmp.eq.s32.totalorder %s19, 1
    %p210 = scmp.ne.s32.totalorder %s205, %s207
    %p211 = scmp.eq.s32.totalorder %s19, 0
    %p212 = por %p210, %p211
    %p213 = scmp.ne.s32.totalorder %s205, %s207
    %p214 = scmp.eq.s32.totalorder %s24, 1
    %p215 = por %p213, %p214
    %p216 = scmp.ne.s32.totalorder %s207, %s208
    %p217 = scmp.eq.s32.totalorder %s24, 0
    %p218 = por %p216, %p217
    %p219 = scmp.ne.s32.totalorder %s207, %s208
    %p220 = scmp.eq.s32.totalorder %s25, 1
    %p221 = por %p219, %p220
    %p223 = scmp.ne.s32.totalorder %s208, %s222
    %p224 = scmp.eq.s32.totalorder %s25, 0
    %p225 = por %p223, %p224
    %s227 = sadd.s32 %s226, 1
    %p230 = scmp.eq.s32.totalorder %s19, 1
    %p231 = scmp.ne.s32.totalorder %s226, %s228
    %p232 = scmp.eq.s32.totalorder %s19, 0
    %p233 = por %p231, %p232
    %p234 = scmp.ne.s32.totalorder %s226, %s228
    %p235 = scmp.eq.s32.totalorder %s24, 1
    %p236 = por %p234, %p235
    %p237 = scmp.ne.s32.totalorder %s228, %s229
    %p238 = scmp.eq.s32.totalorder %s24, 0
    %p239 = por %p237, %p238
    %p240 = scmp.ne.s32.totalorder %s228, %s229
    %p241 = scmp.eq.s32.totalorder %s25, 1
    %p242 = por %p240, %p241
    %p244 = scmp.ne.s32.totalorder %s229, %s243
    %p245 = scmp.eq.s32.totalorder %s25, 0
    %p246 = por %p244, %p245
    %s248 = sadd.s32 %s247, 1
    %p251 = scmp.eq.s32.totalorder %s19, 1
    %p252 = scmp.ne.s32.totalorder %s247, %s249
    %p253 = scmp.eq.s32.totalorder %s19, 0
    %p254 = por %p252, %p253
    %p255 = scmp.ne.s32.totalorder %s247, %s249
    %p256 = scmp.eq.s32.totalorder %s24, 1
    %p257 = por %p255, %p256
    %p258 = scmp.ne.s32.totalorder %s249, %s250
    %p259 = scmp.eq.s32.totalorder %s24, 0
    %p260 = por %p258, %p259
    %p261 = scmp.ne.s32.totalorder %s249, %s250
    %p262 = scmp.eq.s32.totalorder %s25, 1
    %p263 = por %p261, %p262
    %p265 = scmp.ne.s32.totalorder %s250, %s264
    %p266 = scmp.eq.s32.totalorder %s25, 0
    %p267 = por %p265, %p266
    %s268 = ssub.s32 %s19, %s26
    %p269 = scmp.eq.s32.totalorder %s268, 0
    %s271 = sadd.s32 %s270, 1
    %s272 = scalar_select %p269, %s270, %s271
    %p275 = pneg %p269
    %p276 = scmp.eq.s32.totalorder %s19, 1
    %p277 = por %p275, %p276
    %p278 = scmp.ne.s32.totalorder %s270, %s273
    %p279 = scmp.eq.s32.totalorder %s19, 0
    %p280 = por %p278, %p279
    %p281 = scmp.ne.s32.totalorder %s270, %s273
    %p282 = scmp.eq.s32.totalorder %s24, 1
    %p283 = por %p281, %p282
    %p284 = scmp.ne.s32.totalorder %s273, %s274
    %p285 = scmp.eq.s32.totalorder %s24, 0
    %p286 = por %p284, %p285
    %p287 = scmp.ne.s32.totalorder %s273, %s274
    %p288 = scmp.eq.s32.totalorder %s25, 1
    %p289 = por %p287, %p288
    %p291 = scmp.ne.s32.totalorder %s274, %s290
    %p292 = scmp.eq.s32.totalorder %s25, 0
    %p293 = por %p291, %p292
    %s294 = ssub.s32 %s19, %s26
    %p295 = scmp.eq.s32.totalorder %s294, 0
    %s297 = sadd.s32 %s296, 1
    %s298 = scalar_select %p295, %s296, %s297
    %p301 = pneg %p295
    %p302 = scmp.eq.s32.totalorder %s19, 1
    %p303 = por %p301, %p302
    %p304 = scmp.ne.s32.totalorder %s296, %s299
    %p305 = scmp.eq.s32.totalorder %s19, 0
    %p306 = por %p304, %p305
    %p307 = scmp.ne.s32.totalorder %s296, %s299
    %p308 = scmp.eq.s32.totalorder %s24, 1
    %p309 = por %p307, %p308
    %p310 = scmp.ne.s32.totalorder %s299, %s300
    %p311 = scmp.eq.s32.totalorder %s24, 0
    %p312 = por %p310, %p311
    %p313 = scmp.ne.s32.totalorder %s299, %s300
    %p314 = scmp.eq.s32.totalorder %s25, 1
    %p315 = por %p313, %p314
    %p317 = scmp.ne.s32.totalorder %s300, %s316
    %p318 = scmp.eq.s32.totalorder %s25, 0
    %p319 = por %p317, %p318
    %p320 = scmp.le.s32.totalorder 1, %s19
    %p321 = scmp.lt.s32.totalorder %s19, 3
    %p322 = pnand %p320, %p321
    %p323 = pneg %p322
    // Predicated region
    $region9: #{learner_forward_pallas.1} parent=5 // pred_check
      _
    $region10: #{learner_forward_pallas.1} parent=5 // pred_check_branch
      %325 = sbr.rel (%p322) target = $region12
    $region11: #{learner_forward_pallas.1} parent=5 // pred_region
      %s326 = ssub.s32 %s19, 1
      // Predicated region
      $region13: #{learner_forward_pallas.1} parent=11 // pred_check
        %p327 = pneg %p92
      $region14: #{learner_forward_pallas.1} parent=11 // pred_check_branch
        %329 = sbr.rel (%p327) target = $region16
      $region15: #{learner_forward_pallas.1} parent=11 // pred_region
        _
      $region16: #{learner_forward_pallas.1} parent=11 // pred_fallthru
        _
      // Predicated region
      $region17: #{learner_forward_pallas.1} parent=11 // pred_check
        %p330 = pneg %p113
      $region18: #{learner_forward_pallas.1} parent=11 // pred_check_branch
        %332 = sbr.rel (%p330) target = $region20
      $region19: #{learner_forward_pallas.1} parent=11 // pred_region
        _
      $region20: #{learner_forward_pallas.1} parent=11 // pred_fallthru
        _
      // Predicated region
      $region21: #{learner_forward_pallas.1} parent=11 // pred_check
        %p333 = pneg %p134
      $region22: #{learner_forward_pallas.1} parent=11 // pred_check_branch
        %335 = sbr.rel (%p333) target = $region24
      $region23: #{learner_forward_pallas.1} parent=11 // pred_region
        _
      $region24: #{learner_forward_pallas.1} parent=11 // pred_fallthru
        _
      // Predicated region
      $region25: #{learner_forward_pallas.1} parent=11 // pred_check
        %p336 = pneg %p155
      $region26: #{learner_forward_pallas.1} parent=11 // pred_check_branch
        %338 = sbr.rel (%p336) target = $region28
      $region27: #{learner_forward_pallas.1} parent=11 // pred_region
        _
      $region28: #{learner_forward_pallas.1} parent=11 // pred_fallthru
        _
      // Predicated region
      $region29: #{learner_forward_pallas.1} parent=11 // pred_check
        %p339 = pneg %p176
      $region30: #{learner_forward_pallas.1} parent=11 // pred_check_branch
        %341 = sbr.rel (%p339) target = $region32
      $region31: #{learner_forward_pallas.1} parent=11 // pred_region
        _
      $region32: #{learner_forward_pallas.1} parent=11 // pred_fallthru
        _
      // Predicated region
      $region33: #{learner_forward_pallas.1} parent=11 // pred_check
        %p342 = pneg %p197
      $region34: #{learner_forward_pallas.1} parent=11 // pred_check_branch
        %344 = sbr.rel (%p342) target = $region36
      $region35: #{learner_forward_pallas.1} parent=11 // pred_region
        _
      $region36: #{learner_forward_pallas.1} parent=11 // pred_fallthru
        _
      // Predicated region
      $region37: #{learner_forward_pallas.1} parent=11 // pred_check
        %p345 = pneg %p218
      $region38: #{learner_forward_pallas.1} parent=11 // pred_check_branch
        %347 = sbr.rel (%p345) target = $region40
      $region39: #{learner_forward_pallas.1} parent=11 // pred_region
        _
      $region40: #{learner_forward_pallas.1} parent=11 // pred_fallthru
        _
      // Predicated region
      $region41: #{learner_forward_pallas.1} parent=11 // pred_check
        %p348 = pneg %p239
      $region42: #{learner_forward_pallas.1} parent=11 // pred_check_branch
        %350 = sbr.rel (%p348) target = $region44
      $region43: #{learner_forward_pallas.1} parent=11 // pred_region
        _
      $region44: #{learner_forward_pallas.1} parent=11 // pred_fallthru
        _
      // Predicated region
      $region45: #{learner_forward_pallas.1} parent=11 // pred_check
        %p351 = pneg %p260
      $region46: #{learner_forward_pallas.1} parent=11 // pred_check_branch
        %353 = sbr.rel (%p351) target = $region48
      $region47: #{learner_forward_pallas.1} parent=11 // pred_region
        _
      $region48: #{learner_forward_pallas.1} parent=11 // pred_fallthru
        _
    $region12: #{learner_forward_pallas.1} parent=5 // pred_fallthru
      _
    %p354 = scmp.lt.s32.totalorder %s19, 2
    // Predicated region
    $region49: #{learner_forward_pallas.1} parent=5 // pred_check
      %p355 = pneg %p354
    $region50: #{learner_forward_pallas.1} parent=5 // pred_check_branch
      %357 = sbr.rel (%p355) target = $region52
    $region51: #{learner_forward_pallas.1} parent=5 // pred_region
      // Predicated region
      $region53: #{learner_forward_pallas.1} parent=51 // pred_check
        %p358 = pneg %p39
      $region54: #{learner_forward_pallas.1} parent=51 // pred_check_branch
        %360 = sbr.rel (%p358) target = $region56
      $region55: #{learner_forward_pallas.1} parent=51 // pred_region
        %p361 = scmp.lt.s32.totalorder %s19, 1
        %s362 = scalar_select %p361, %s19, 1
        %s363 = smul.addr %s362, 25
        %s364 = smul.addr %s363, 4
        %s365 = scalar_lea.vmem %s0, %s364
      $region56: #{learner_forward_pallas.1} parent=51 // pred_fallthru
        _
      // Predicated region
      $region57: #{learner_forward_pallas.1} parent=51 // pred_check
        %p366 = pneg %p65
      $region58: #{learner_forward_pallas.1} parent=51 // pred_check_branch
        %368 = sbr.rel (%p366) target = $region60
      $region59: #{learner_forward_pallas.1} parent=51 // pred_region
        %p369 = scmp.lt.s32.totalorder %s19, 1
        %s370 = scalar_select %p369, %s19, 1
        %s371 = smul.addr %s370, 50
        %s372 = smul.addr %s371, 4
        %s373 = scalar_lea.vmem %s1, %s372
      $region60: #{learner_forward_pallas.1} parent=51 // pred_fallthru
        _
    $region52: #{learner_forward_pallas.1} parent=5 // pred_fallthru
      _
    %p374 = scmp.le.s32.totalorder 1, %s19
    %p375 = scmp.lt.s32.totalorder %s19, 3
    %p376 = pnand %p374, %p375
    %p377 = pneg %p376
    // Predicated region
    $region61: #{learner_forward_pallas.1} parent=5 // pred_check
      _
    $region62: #{learner_forward_pallas.1} parent=5 // pred_check_branch
      %379 = sbr.rel (%p376) target = $region64
    $region63: #{learner_forward_pallas.1} parent=5 // pred_region
      %s380 = ssub.s32 %s19, 1
      %p381 = scmp.lt.s32.totalorder %s24, 1
      %s382 = scalar_select %p381, %s24, 1
      %s383 = smul.addr %s382, 25
      %s384 = smul.addr %s383, 4
      %s385 = scalar_lea.vmem %s0, %s384
      %p386 = pneg %p45
      %p387 = pneg %p42
      %p388 = scmp.lt.s32.totalorder %s24, 1
      %s389 = scalar_select %p388, %s24, 1
      %s390 = smul.addr %s389, 50
      %s391 = smul.addr %s390, 4
      %s392 = scalar_lea.vmem %s1, %s391
      %p393 = pneg %p71
      %p394 = pneg %p68
      %p395 = pneg %p92
      %p396 = pneg %p89
      %p397 = pneg %p113
      %p398 = pneg %p110
      %p399 = pneg %p134
      %p400 = pneg %p131
      %p401 = pneg %p155
      %p402 = pneg %p152
      %p403 = pneg %p176
      %p404 = pneg %p173
      %p405 = pneg %p197
      %p406 = pneg %p194
      %p407 = pneg %p218
      %p408 = pneg %p215
      %p409 = pneg %p239
      %p410 = pneg %p236
      %p411 = pneg %p260
      %p412 = pneg %p257
      %p413 = pneg %p286
      %p414 = pneg %p283
      %p415 = scmp.lt.s32.totalorder %s24, 1
      %s416 = scalar_select %p415, %s24, 1
      %s417 = smul.addr %s416, 8
      %s418 = scalar_lea.vmem %s11, %s417
      %p419 = pneg %p312
      %p420 = pneg %p309
      %p421 = scmp.lt.s32.totalorder %s24, 1
      %s422 = scalar_select %p421, %s24, 1
      %s423 = smul.addr %s422, 25
      %s424 = smul.addr %s423, 8
      %s425 = scalar_lea.vmem %s12, %s424
      %p426 = scmp.lt.s32.totalorder %s24, 1
      %s427 = scalar_select %p426, %s24, 1
      %s428 = smul.addr %s427, 25
      %s429 = smul.addr %s428, 4
      %s430 = scalar_lea.vmem %s0, %s429
      %p431 = scmp.lt.s32.totalorder %s24, 1
      %s432 = scalar_select %p431, %s24, 1
      %s433 = smul.addr %s432, 50
      %s434 = smul.addr %s433, 4
      %s435 = scalar_lea.vmem %s1, %s434
      %p436 = scmp.lt.s32.totalorder %s24, 1
      %s437 = scalar_select %p436, %s24, 1
      %s438 = smul.addr %s437, 8
      %s439 = scalar_lea.vmem %s11, %s438
      %p440 = scmp.lt.s32.totalorder %s24, 1
      %s441 = scalar_select %p440, %s24, 1
      %s442 = smul.addr %s441, 25
      %s443 = smul.addr %s442, 8
      %s444 = scalar_lea.vmem %s12, %s443
      %v446 = vld [vmem:[%s430] sm:$0xf]
      %v447 = vld [vmem:[%s430 + $0x4] sm:$0xf]
      %v448 = vld [vmem:[%s430 + $0x8] sm:$0xf]
      %v449 = vld [vmem:[%s430 + $0xc] sm:$0xf]
      %v450 = vld [vmem:[%s430 + $0x10] sm:$0xf]
      %v451 = vld [vmem:[%s430 + $0x14] sm:$0xf]
      %v452 = vld [vmem:[%s430 + $0x18] sm:$0xf]
      %v453 = vld [vmem:[%s430 + $0x1c] sm:$0xf]
      %v454 = vld [vmem:[%s430 + $0x20] sm:$0xf]
      %v455 = vld [vmem:[%s430 + $0x24] sm:$0xf]
      %v456 = vld [vmem:[%s430 + $0x28] sm:$0xf]
      %v457 = vld [vmem:[%s430 + $0x2c] sm:$0xf]
      %v458 = vld [vmem:[%s430 + $0x30] sm:$0xf]
      %v459 = vld [vmem:[%s430 + $0x34] sm:$0xf]
      %v460 = vld [vmem:[%s430 + $0x38] sm:$0xf]
      %v461 = vld [vmem:[%s430 + $0x3c] sm:$0xf]
      %v462 = vld [vmem:[%s430 + $0x40] sm:$0xf]
      %v463 = vld [vmem:[%s430 + $0x44] sm:$0xf]
      %v464 = vld [vmem:[%s430 + $0x48] sm:$0xf]
      %v465 = vld [vmem:[%s430 + $0x4c] sm:$0xf]
      %v466 = vld [vmem:[%s430 + $0x50] sm:$0xf]
      %v467 = vld [vmem:[%s430 + $0x54] sm:$0xf]
      %v468 = vld [vmem:[%s430 + $0x58] sm:$0xf]
      %v469 = vld [vmem:[%s430 + $0x5c] sm:$0xf]
      %v470 = vld [vmem:[%s430 + $0x60] sm:$0xf]
      %v471 = vld [vmem:[%s435] sm:$0xff]
      %v472 = vld [vmem:[%s435 + $0x8] sm:$0xff]
      %v473 = vld [vmem:[%s435 + $0x10] sm:$0xff]
      %v474 = vld [vmem:[%s435 + $0x18] sm:$0xff]
      %v475 = vld [vmem:[%s435 + $0x20] sm:$0xff]
      %v476 = vld [vmem:[%s435 + $0x28] sm:$0xff]
      %v477 = vld [vmem:[%s435 + $0x30] sm:$0xff]
      %v478 = vld [vmem:[%s435 + $0x38] sm:$0xff]
      %v479 = vld [vmem:[%s435 + $0x40] sm:$0xff]
      %v480 = vld [vmem:[%s435 + $0x48] sm:$0xff]
      %v481 = vld [vmem:[%s435 + $0x50] sm:$0xff]
      %v482 = vld [vmem:[%s435 + $0x58] sm:$0xff]
      %v483 = vld [vmem:[%s435 + $0x60] sm:$0xff]
      %v484 = vld [vmem:[%s435 + $0x68] sm:$0xff]
      %v485 = vld [vmem:[%s435 + $0x70] sm:$0xff]
      %v486 = vld [vmem:[%s435 + $0x78] sm:$0xff]
      %v487 = vld [vmem:[%s435 + $0x80] sm:$0xff]
      %v488 = vld [vmem:[%s435 + $0x88] sm:$0xff]
      %v489 = vld [vmem:[%s435 + $0x90] sm:$0xff]
      %v490 = vld [vmem:[%s435 + $0x98] sm:$0xff]
      %v491 = vld [vmem:[%s435 + $0xa0] sm:$0xff]
      %v492 = vld [vmem:[%s435 + $0xa8] sm:$0xff]
      %v493 = vld [vmem:[%s435 + $0xb0] sm:$0xff]
      %v494 = vld [vmem:[%s435 + $0xb8] sm:$0xff]
      %v495 = vld [vmem:[%s435 + $0xc0] sm:$0xff]
      %v496 = vld [vmem:[%s2] sm:$0xff]
      %v497 = vld [vmem:[%s2 + $0x8] sm:$0xff]
      %v498 = vld [vmem:[%s2 + $0x10] sm:$0xf]
      %v499 = vld [vmem:[%s2 + $0x14] sm:$0xff]
      %v500 = vld [vmem:[%s2 + $0x1c] sm:$0xff]
      %v501 = vld [vmem:[%s2 + $0x24] sm:$0xf]
      %v502 = vld [vmem:[%s2 + $0x28] sm:$0xff]
      %v503 = vld [vmem:[%s2 + $0x30] sm:$0xff]
      %v504 = vld [vmem:[%s2 + $0x38] sm:$0xf]
      %v505 = vld [vmem:[%s2 + $0x3c] sm:$0xff]
      %v506 = vld [vmem:[%s2 + $0x44] sm:$0xff]
      %v507 = vld [vmem:[%s2 + $0x4c] sm:$0xf]
      %v508 = vld [vmem:[%s2 + $0x50] sm:$0xff]
      %v509 = vld [vmem:[%s2 + $0x58] sm:$0xff]
      %v510 = vld [vmem:[%s2 + $0x60] sm:$0xf]
      %v511 = vld [vmem:[%s2 + $0x64] sm:$0xff]
      %v512 = vld [vmem:[%s2 + $0x6c] sm:$0xff]
      %v513 = vld [vmem:[%s2 + $0x74] sm:$0xf]
      %v514 = vld [vmem:[%s2 + $0x78] sm:$0xff]
      %v515 = vld [vmem:[%s2 + $0x80] sm:$0xff]
      %v516 = vld [vmem:[%s2 + $0x88] sm:$0xf]
      %v517 = vld [vmem:[%s2 + $0x8c] sm:$0xff]
      %v518 = vld [vmem:[%s2 + $0x94] sm:$0xff]
      %v519 = vld [vmem:[%s2 + $0x9c] sm:$0xf]
      %v520 = vld [vmem:[%s2 + $0xa0] sm:$0xff]
      %v521 = vld [vmem:[%s2 + $0xa8] sm:$0xff]
      %v522 = vld [vmem:[%s2 + $0xb0] sm:$0xf]
      %v523 = vld [vmem:[%s2 + $0xb4] sm:$0xff]
      %v524 = vld [vmem:[%s2 + $0xbc] sm:$0xff]
      %v525 = vld [vmem:[%s2 + $0xc4] sm:$0xf]
      %v526 = vld [vmem:[%s2 + $0xc8] sm:$0xff]
      %v527 = vld [vmem:[%s2 + $0xd0] sm:$0xff]
      %v528 = vld [vmem:[%s2 + $0xd8] sm:$0xf]
      %v529 = vld [vmem:[%s2 + $0xdc] sm:$0xff]
      %v530 = vld [vmem:[%s2 + $0xe4] sm:$0xff]
      %v531 = vld [vmem:[%s2 + $0xec] sm:$0xf]
      %v532 = vld [vmem:[%s2 + $0xf0] sm:$0xff]
      %v533 = vld [vmem:[%s2 + $0xf8] sm:$0xff]
      %v534 = vld [vmem:[%s2 + $0x100] sm:$0xf]
      %v535 = vld [vmem:[%s2 + $0x104] sm:$0xff]
      %v536 = vld [vmem:[%s2 + $0x10c] sm:$0xff]
      %v537 = vld [vmem:[%s2 + $0x114] sm:$0xf]
      %v538 = vld [vmem:[%s2 + $0x118] sm:$0xff]
      %v539 = vld [vmem:[%s2 + $0x120] sm:$0xff]
      %v540 = vld [vmem:[%s2 + $0x128] sm:$0xf]
      %v541 = vld [vmem:[%s2 + $0x12c] sm:$0xff]
      %v542 = vld [vmem:[%s2 + $0x134] sm:$0xff]
      %v543 = vld [vmem:[%s2 + $0x13c] sm:$0xf]
      %v544 = vld [vmem:[%s3] sm:$0x1f]
      %v546 = vlaneseq
      %v547 = vshrl.u32 %v546, 7
      %v548 = vsub.s32 0, %v547
      %v549 = vrot.slane %v544, %v548
      %v550 = vlaneseq
      %v551 = vshrl.u32 %v550, 7
      %v552 = vsub.s32 1, %v551
      %v553 = vrot.slane %v544, %v552
      %v554 = vlaneseq
      %v555 = vshrl.u32 %v554, 7
      %v556 = vsub.s32 2, %v555
      %v557 = vrot.slane %v544, %v556
      %v558 = vlaneseq
      %v559 = vshrl.u32 %v558, 7
      %v560 = vsub.s32 3, %v559
      %v561 = vrot.slane %v544, %v560
      %v562 = vlaneseq
      %v563 = vshrl.u32 %v562, 7
      %v564 = vsub.s32 4, %v563
      %v565 = vrot.slane %v544, %v564
      %v596 = vunpack.c.l.b16 %v446
      %v597 = vunpack.c.l.b16 %v447
      %v598 = vunpack.c.l.b16 %v448
      %v599 = vunpack.c.l.b16 %v449
      %v600 = vunpack.c.l.b16 %v450
      %v601 = vunpack.c.l.b16 %v451
      %v602 = vunpack.c.l.b16 %v452
      %v603 = vunpack.c.l.b16 %v453
      %v604 = vunpack.c.l.b16 %v454
      %v605 = vunpack.c.l.b16 %v455
      %v606 = vunpack.c.l.b16 %v456
      %v607 = vunpack.c.l.b16 %v457
      %v608 = vunpack.c.l.b16 %v458
      %v609 = vunpack.c.l.b16 %v459
      %v610 = vunpack.c.l.b16 %v460
      %v611 = vunpack.c.l.b16 %v461
      %v612 = vunpack.c.l.b16 %v462
      %v613 = vunpack.c.l.b16 %v463
      %v614 = vunpack.c.l.b16 %v464
      %v615 = vunpack.c.l.b16 %v465
      %v616 = vunpack.c.l.b16 %v466
      %v617 = vunpack.c.l.b16 %v467
      %v618 = vunpack.c.l.b16 %v468
      %v619 = vunpack.c.l.b16 %v469
      %v620 = vunpack.c.l.b16 %v470
      %v621 = vpack.c.b16 %v597, %v596
      %v622 = vpack.c.b16 %v599, %v598
      %v623 = vpack.c.b16 %v601, %v600
      %v624 = vpack.c.b16 %v603, %v602
      %v625 = vpack.c.b16 %v605, %v604
      %v626 = vpack.c.b16 %v607, %v606
      %v627 = vpack.c.b16 %v609, %v608
      %v628 = vpack.c.b16 %v611, %v610
      %v629 = vpack.c.b16 %v613, %v612
      %v630 = vpack.c.b16 %v615, %v614
      %v631 = vpack.c.b16 %v617, %v616
      %v632 = vpack.c.b16 %v619, %v618
      %v633 = vpack.c.b16 %v620, %v620
      %v695 = vunpack.c.l.b16 %v496
      %v696 = vunpack.c.h.b16 %v496
      %v697 = vunpack.c.l.b16 %v497
      %v698 = vunpack.c.h.b16 %v497
      %v699 = vunpack.c.l.b16 %v498
      %v700 = vunpack.c.l.b16 %v499
      %v701 = vunpack.c.h.b16 %v499
      %v702 = vunpack.c.l.b16 %v500
      %v703 = vunpack.c.h.b16 %v500
      %v704 = vunpack.c.l.b16 %v501
      %v705 = vunpack.c.l.b16 %v502
      %v706 = vunpack.c.h.b16 %v502
      %v707 = vunpack.c.l.b16 %v503
      %v708 = vunpack.c.h.b16 %v503
      %v709 = vunpack.c.l.b16 %v504
      %v710 = vunpack.c.l.b16 %v505
      %v711 = vunpack.c.h.b16 %v505
      %v712 = vunpack.c.l.b16 %v506
      %v713 = vunpack.c.h.b16 %v506
      %v714 = vunpack.c.l.b16 %v507
      %v715 = vunpack.c.l.b16 %v508
      %v716 = vunpack.c.h.b16 %v508
      %v717 = vunpack.c.l.b16 %v509
      %v718 = vunpack.c.h.b16 %v509
      %v719 = vunpack.c.l.b16 %v510
      %v720 = vunpack.c.l.b16 %v511
      %v721 = vunpack.c.h.b16 %v511
      %v722 = vunpack.c.l.b16 %v512
      %v723 = vunpack.c.h.b16 %v512
      %v724 = vunpack.c.l.b16 %v513
      %v725 = vunpack.c.l.b16 %v514
      %v726 = vunpack.c.h.b16 %v514
      %v727 = vunpack.c.l.b16 %v515
      %v728 = vunpack.c.h.b16 %v515
      %v729 = vunpack.c.l.b16 %v516
      %v730 = vunpack.c.l.b16 %v517
      %v731 = vunpack.c.h.b16 %v517
      %v732 = vunpack.c.l.b16 %v518
      %v733 = vunpack.c.h.b16 %v518
      %v734 = vunpack.c.l.b16 %v519
      %v735 = vunpack.c.l.b16 %v520
      %v736 = vunpack.c.h.b16 %v520
      %v737 = vunpack.c.l.b16 %v521
      %v738 = vunpack.c.h.b16 %v521
      %v739 = vunpack.c.l.b16 %v522
      %v740 = vunpack.c.l.b16 %v523
      %v741 = vunpack.c.h.b16 %v523
      %v742 = vunpack.c.l.b16 %v524
      %v743 = vunpack.c.h.b16 %v524
      %v744 = vunpack.c.l.b16 %v525
      %v745 = vunpack.c.l.b16 %v526
      %v746 = vunpack.c.h.b16 %v526
      %v747 = vunpack.c.l.b16 %v527
      %v748 = vunpack.c.h.b16 %v527
      %v749 = vunpack.c.l.b16 %v528
      %v750 = vunpack.c.l.b16 %v529
      %v751 = vunpack.c.h.b16 %v529
      %v752 = vunpack.c.l.b16 %v530
      %v753 = vunpack.c.h.b16 %v530
      %v754 = vunpack.c.l.b16 %v531
      %v755 = vunpack.c.l.b16 %v532
      %v756 = vunpack.c.h.b16 %v532
      %v757 = vunpack.c.l.b16 %v533
      %v758 = vunpack.c.h.b16 %v533
      %v759 = vunpack.c.l.b16 %v534
      %v760 = vunpack.c.l.b16 %v535
      %v761 = vunpack.c.h.b16 %v535
      %v762 = vunpack.c.l.b16 %v536
      %v763 = vunpack.c.h.b16 %v536
      %v764 = vunpack.c.l.b16 %v537
      %v765 = vunpack.c.l.b16 %v538
      %v766 = vunpack.c.h.b16 %v538
      %v767 = vunpack.c.l.b16 %v539
      %v768 = vunpack.c.h.b16 %v539
      %v769 = vunpack.c.l.b16 %v540
      %v770 = vunpack.c.l.b16 %v541
      %v771 = vunpack.c.h.b16 %v541
      %v772 = vunpack.c.l.b16 %v542
      %v773 = vunpack.c.h.b16 %v542
      %v774 = vunpack.c.l.b16 %v543
      %v775 = vpack.c.b16 %v700, %v695
      %v776 = vpack.c.b16 %v701, %v696
      %v777 = vpack.c.b16 %v702, %v697
      %v778 = vpack.c.b16 %v703, %v698
      %v779 = vpack.c.b16 %v704, %v699
      %v780 = vpack.c.b16 %v710, %v705
      %v781 = vpack.c.b16 %v711, %v706
      %v782 = vpack.c.b16 %v712, %v707
      %v783 = vpack.c.b16 %v713, %v708
      %v784 = vpack.c.b16 %v714, %v709
      %v785 = vpack.c.b16 %v720, %v715
      %v786 = vpack.c.b16 %v721, %v716
      %v787 = vpack.c.b16 %v722, %v717
      %v788 = vpack.c.b16 %v723, %v718
      %v789 = vpack.c.b16 %v724, %v719
      %v790 = vpack.c.b16 %v730, %v725
      %v791 = vpack.c.b16 %v731, %v726
      %v792 = vpack.c.b16 %v732, %v727
      %v793 = vpack.c.b16 %v733, %v728
      %v794 = vpack.c.b16 %v734, %v729
      %v795 = vpack.c.b16 %v740, %v735
      %v796 = vpack.c.b16 %v741, %v736
      %v797 = vpack.c.b16 %v742, %v737
      %v798 = vpack.c.b16 %v743, %v738
      %v799 = vpack.c.b16 %v744, %v739
      %v800 = vpack.c.b16 %v750, %v745
      %v801 = vpack.c.b16 %v751, %v746
      %v802 = vpack.c.b16 %v752, %v747
      %v803 = vpack.c.b16 %v753, %v748
      %v804 = vpack.c.b16 %v754, %v749
      %v805 = vpack.c.b16 %v760, %v755
      %v806 = vpack.c.b16 %v761, %v756
      %v807 = vpack.c.b16 %v762, %v757
      %v808 = vpack.c.b16 %v763, %v758
      %v809 = vpack.c.b16 %v764, %v759
      %v810 = vpack.c.b16 %v770, %v765
      %v811 = vpack.c.b16 %v771, %v766
      %v812 = vpack.c.b16 %v772, %v767
      %v813 = vpack.c.b16 %v773, %v768
      %v814 = vpack.c.b16 %v774, %v769
      %855 = vmatprep.subr.bf16.mxu0 %v776
      %856 = vmatpush1.bf16.msra.mxu0 %v775
      %857 = vmatprep.subr.bf16.mxu0 %v781
      %858 = vmatpush1.bf16.msra.mxu0 %v780
      %859 = vmatprep.subr.bf16.mxu0 %v786
      %860 = vmatpush1.bf16.msra.mxu0 %v785
      %861 = vmatprep.subr.bf16.mxu0 %v791
      %862 = vmatpush1.bf16.msra.mxu0 %v790
      %863 = vmatprep.subr.bf16.mxu0 %v796
      %864 = vmatpush1.bf16.msra.mxu0 %v795
      %865 = vmatprep.subr.bf16.mxu0 %v801
      %866 = vmatpush1.bf16.msra.mxu0 %v800
      %867 = vmatprep.subr.bf16.mxu0 %v806
      %868 = vmatpush1.bf16.msra.mxu0 %v805
      %869 = vmatprep.subr.bf16.mxu0 %v811
      %870 = vmatpush1.bf16.msra.mxu0 %v810
      %871 = vmatprep.subr.bf16.mxu0 0
      %872 = vmatpush1.bf16.msra.mxu0 0
      %873 = vmatprep.subr.bf16.mxu0 0
      %874 = vmatpush1.bf16.msra.mxu0 0
      %875 = vmatprep.subr.bf16.mxu0 0
      %876 = vmatpush1.bf16.msra.mxu0 0
      %877 = vmatprep.subr.bf16.mxu0 0
      %878 = vmatpush1.bf16.msra.mxu0 0
      %879 = vmatprep.subr.bf16.mxu0 0
      %880 = vmatpush1.bf16.msra.mxu0 0
      %881 = vmatprep.subr.bf16.mxu0 0
      %882 = vmatpush1.bf16.msra.mxu0 0
      %883 = vmatprep.subr.bf16.mxu0 0
      %884 = vmatpush1.bf16.msra.mxu0 0
      %885 = vmatprep.subr.bf16.mxu0 0
      %886 = vmatpush1.bf16.msra.mxu0 0
      %887 = vmatprep.mubr.bf16.mxu0 0
      %888 = vmatmul.mubr.bf16.gmra.mrb[0].mxu0 %v621
      %v889 = vpop.f32.mrb[0].mxu0
      %v890 = vadd.f32 %v549, %v889
      %v891 = vpop.f32.mrb[0].mxu0
      %v892 = vadd.f32 %v553, %v891
      %v893 = vpop.f32.mrb[0].mxu0
      %v894 = vadd.f32 %v549, %v893
      %v895 = vpop.f32.mrb[0].mxu0
      %v896 = vadd.f32 %v553, %v895
      %897 = vmatprep.mubr.bf16.mxu0 0
      %898 = vmatmul.mubr.bf16.gmra.mrb[0].mxu0 %v622
      %v899 = vpop.f32.mrb[0].mxu0
      %v900 = vadd.f32 %v549, %v899
      %v901 = vpop.f32.mrb[0].mxu0
      %v902 = vadd.f32 %v553, %v901
      %v903 = vpop.f32.mrb[0].mxu0
      %v904 = vadd.f32 %v549, %v903
      %v905 = vpop.f32.mrb[0].mxu0
      %v906 = vadd.f32 %v553, %v905
      %907 = vmatprep.mubr.bf16.mxu0 0
      %908 = vmatmul.mubr.bf16.gmra.mrb[0].mxu0 %v623
      %v909 = vpop.f32.mrb[0].mxu0
      %v910 = vadd.f32 %v549, %v909
      %v911 = vpop.f32.mrb[0].mxu0
      %v912 = vadd.f32 %v553, %v911
      %v913 = vpop.f32.mrb[0].mxu0
      %v914 = vadd.f32 %v549, %v913
      %v915 = vpop.f32.mrb[0].mxu0
      %v916 = vadd.f32 %v553, %v915
      %917 = vmatprep.mubr.bf16.mxu0 0
      %918 = vmatmul.mubr.bf16.gmra.mrb[0].mxu0 %v624
      %v919 = vpop.f32.mrb[0].mxu0
      %v920 = vadd.f32 %v549, %v919
      %v921 = vpop.f32.mrb[0].mxu0
      %v922 = vadd.f32 %v553, %v921
      %v923 = vpop.f32.mrb[0].mxu0
      %v924 = vadd.f32 %v549, %v923
      %v925 = vpop.f32.mrb[0].mxu0
      %v926 = vadd.f32 %v553, %v925
      %927 = vmatprep.mubr.bf16.mxu0 0
      %928 = vmatmul.mubr.bf16.gmra.mrb[0].mxu0 %v625
      %v929 = vpop.f32.mrb[0].mxu0
      %v930 = vadd.f32 %v549, %v929
      %v931 = vpop.f32.mrb[0].mxu0
      %v932 = vadd.f32 %v553, %v931
      %v933 = vpop.f32.mrb[0].mxu0
      %v934 = vadd.f32 %v549, %v933
      %v935 = vpop.f32.mrb[0].mxu0
      %v936 = vadd.f32 %v553, %v935
      %937 = vmatprep.mubr.bf16.mxu0 0
      %938 = vmatmul.mubr.bf16.gmra.mrb[0].mxu0 %v626
      %v939 = vpop.f32.mrb[0].mxu0
      %v940 = vadd.f32 %v549, %v939
      %v941 = vpop.f32.mrb[0].mxu0
      %v942 = vadd.f32 %v553, %v941
      %v943 = vpop.f32.mrb[0].mxu0
      %v944 = vadd.f32 %v549, %v943
      %v945 = vpop.f32.mrb[0].mxu0
      %v946 = vadd.f32 %v553, %v945
      %947 = vmatprep.mubr.bf16.mxu0 0
      %948 = vmatmul.mubr.bf16.gmra.mrb[0].mxu0 %v627
      %v949 = vpop.f32.mrb[0].mxu0
      %v950 = vadd.f32 %v549, %v949
      %v951 = vpop.f32.mrb[0].mxu0
      %v952 = vadd.f32 %v553, %v951
      %v953 = vpop.f32.mrb[0].mxu0
      %v954 = vadd.f32 %v549, %v953
      %v955 = vpop.f32.mrb[0].mxu0
      %v956 = vadd.f32 %v553, %v955
      %957 = vmatprep.mubr.bf16.mxu0 0
      %958 = vmatmul.mubr.bf16.gmra.mrb[0].mxu0 %v628
      %v959 = vpop.f32.mrb[0].mxu0
      %v960 = vadd.f32 %v549, %v959
      %v961 = vpop.f32.mrb[0].mxu0
      %v962 = vadd.f32 %v553, %v961
      %v963 = vpop.f32.mrb[0].mxu0
      %v964 = vadd.f32 %v549, %v963
      %v965 = vpop.f32.mrb[0].mxu0
      %v966 = vadd.f32 %v553, %v965
      %967 = vmatprep.mubr.bf16.mxu0 0
      %968 = vmatmul.mubr.bf16.gmra.mrb[0].mxu0 %v629
      %v969 = vpop.f32.mrb[0].mxu0
      %v970 = vadd.f32 %v549, %v969
      %v971 = vpop.f32.mrb[0].mxu0
      %v972 = vadd.f32 %v553, %v971
      %v973 = vpop.f32.mrb[0].mxu0
      %v974 = vadd.f32 %v549, %v973
      %v975 = vpop.f32.mrb[0].mxu0
      %v976 = vadd.f32 %v553, %v975
      %977 = vmatprep.mubr.bf16.mxu0 0
      %978 = vmatmul.mubr.bf16.gmra.mrb[0].mxu0 %v630
      %v979 = vpop.f32.mrb[0].mxu0
      %v980 = vadd.f32 %v549, %v979
      %v981 = vpop.f32.mrb[0].mxu0
      %v982 = vadd.f32 %v553, %v981
      %v983 = vpop.f32.mrb[0].mxu0
      %v984 = vadd.f32 %v549, %v983
      %v985 = vpop.f32.mrb[0].mxu0
      %v986 = vadd.f32 %v553, %v985
      %987 = vmatprep.mubr.bf16.mxu0 0
      %988 = vmatmul.mubr.bf16.gmra.mrb[0].mxu0 %v631
      %v989 = vpop.f32.mrb[0].mxu0
      %v990 = vadd.f32 %v549, %v989
      %v991 = vpop.f32.mrb[0].mxu0
      %v992 = vadd.f32 %v553, %v991
      %v993 = vpop.f32.mrb[0].mxu0
      %v994 = vadd.f32 %v549, %v993
      %v995 = vpop.f32.mrb[0].mxu0
      %v996 = vadd.f32 %v553, %v995
      %997 = vmatprep.mubr.bf16.mxu0 0
      %998 = vmatmul.mubr.bf16.gmra.mrb[0].mxu0 %v632
      %v999 = vpop.f32.mrb[0].mxu0
      %v1000 = vadd.f32 %v549, %v999
      %v1001 = vpop.f32.mrb[0].mxu0
      %v1002 = vadd.f32 %v553, %v1001
      %v1003 = vpop.f32.mrb[0].mxu0
      %v1004 = vadd.f32 %v549, %v1003
      %v1005 = vpop.f32.mrb[0].mxu0
      %v1006 = vadd.f32 %v553, %v1005
      %1007 = vmatprep.mubr.bf16.mxu0 0
      %1008 = vmatmul.mubr.bf16.gmra.mrb[0].mxu0 %v633
      %v1009 = vpop.f32.mrb[0].mxu0
      %v1010 = vadd.f32 %v549, %v1009
      %v1011 = vpop.f32.mrb[0].mxu0
      %v1012 = vadd.f32 %v553, %v1011
      %v1013 = vpop.f32.mrb[0].mxu0
      %v1014 = vpop.f32.mrb[0].mxu0
      %1015 = vdwg.mxu0
      %1016 = vmatprep.subr.bf16.mxu0 %v778
      %1017 = vmatpush1.bf16.msra.mxu0 %v777
      %1018 = vmatprep.subr.bf16.mxu0 %v783
      %1019 = vmatpush1.bf16.msra.mxu0 %v782
      %1020 = vmatprep.subr.bf16.mxu0 %v788
      %1021 = vmatpush1.bf16.msra.mxu0 %v787
      %1022 = vmatprep.subr.bf16.mxu0 %v793
      %1023 = vmatpush1.bf16.msra.mxu0 %v792
      %1024 = vmatprep.subr.bf16.mxu0 %v798
      %1025 = vmatpush1.bf16.msra.mxu0 %v797
      %1026 = vmatprep.subr.bf16.mxu0 %v803
      %1027 = vmatpush1.bf16.msra.mxu0 %v802
      %1028 = vmatprep.subr.bf16.mxu0 %v808
      %1029 = vmatpush1.bf16.msra.mxu0 %v807
      %1030 = vmatprep.subr.bf16.mxu0 %v813
      %1031 = vmatpush1.bf16.msra.mxu0 %v812
      %1032 = vmatprep.subr.bf16.mxu0 0
      %1033 = vmatpush1.bf16.msra.mxu0 0
      %1034 = vmatprep.subr.bf16.mxu0 0
      %1035 = vmatpush1.bf16.msra.mxu0 0
      %1036 = vmatprep.subr.bf16.mxu0 0
      %1037 = vmatpush1.bf16.msra.mxu0 0
      %1038 = vmatprep.subr.bf16.mxu0 0
      %1039 = vmatpush1.bf16.msra.mxu0 0
      %1040 = vmatprep.subr.bf16.mxu0 0
      %1041 = vmatpush1.bf16.msra.mxu0 0
      %1042 = vmatprep.subr.bf16.mxu0 0
      %1043 = vmatpush1.bf16.msra.mxu0 0
      %1044 = vmatprep.subr.bf16.mxu0 0
      %1045 = vmatpush1.bf16.msra.mxu0 0
      %1046 = vmatprep.subr.bf16.mxu0 0
      %1047 = vmatpush1.bf16.msra.mxu0 0
      %1048 = vmatprep.mubr.bf16.mxu0 0
      %1049 = vmatmul.mubr.bf16.gmra.mrb[0].mxu0 %v621
      %v1050 = vpop.f32.mrb[0].mxu0
      %v1051 = vadd.f32 %v557, %v1050
      %v1052 = vpop.f32.mrb[0].mxu0
      %v1053 = vadd.f32 %v561, %v1052
      %v1054 = vpop.f32.mrb[0].mxu0
      %v1055 = vadd.f32 %v557, %v1054
      %v1056 = vpop.f32.mrb[0].mxu0
      %v1057 = vadd.f32 %v561, %v1056
      %1058 = vmatprep.mubr.bf16.mxu0 0
      %1059 = vmatmul.mubr.bf16.gmra.mrb[0].mxu0 %v622
      %v1060 = vpop.f32.mrb[0].mxu0
      %v1061 = vadd.f32 %v557, %v1060
      %v1062 = vpop.f32.mrb[0].mxu0
      %v1063 = vadd.f32 %v561, %v1062
      %v1064 = vpop.f32.mrb[0].mxu0
      %v1065 = vadd.f32 %v557, %v1064
      %v1066 = vpop.f32.mrb[0].mxu0
      %v1067 = vadd.f32 %v561, %v1066
      %1068 = vmatprep.mubr.bf16.mxu0 0
      %1069 = vmatmul.mubr.bf16.gmra.mrb[0].mxu0 %v623
      %v1070 = vpop.f32.mrb[0].mxu0
      %v1071 = vadd.f32 %v557, %v1070
      %v1072 = vpop.f32.mrb[0].mxu0
      %v1073 = vadd.f32 %v561, %v1072
      %v1074 = vpop.f32.mrb[0].mxu0
      %v1075 = vadd.f32 %v557, %v1074
      %v1076 = vpop.f32.mrb[0].mxu0
      %v1077 = vadd.f32 %v561, %v1076
      %1078 = vmatprep.mubr.bf16.mxu0 0
      %1079 = vmatmul.mubr.bf16.gmra.mrb[0].mxu0 %v624
      %v1080 = vpop.f32.mrb[0].mxu0
      %v1081 = vadd.f32 %v557, %v1080
      %v1082 = vpop.f32.mrb[0].mxu0
      %v1083 = vadd.f32 %v561, %v1082
      %v1084 = vpop.f32.mrb[0].mxu0
      %v1085 = vadd.f32 %v557, %v1084
      %v1086 = vpop.f32.mrb[0].mxu0
      %v1087 = vadd.f32 %v561, %v1086
      %1088 = vmatprep.mubr.bf16.mxu0 0
      %1089 = vmatmul.mubr.bf16.gmra.mrb[0].mxu0 %v625
      %v1090 = vpop.f32.mrb[0].mxu0
      %v1091 = vadd.f32 %v557, %v1090
      %v1092 = vpop.f32.mrb[0].mxu0
      %v1093 = vadd.f32 %v561, %v1092
      %v1094 = vpop.f32.mrb[0].mxu0
      %v1095 = vadd.f32 %v557, %v1094
      %v1096 = vpop.f32.mrb[0].mxu0
      %v1097 = vadd.f32 %v561, %v1096
      %1098 = vmatprep.mubr.bf16.mxu0 0
      %1099 = vmatmul.mubr.bf16.gmra.mrb[0].mxu0 %v626
      %v1100 = vpop.f32.mrb[0].mxu0
      %v1101 = vadd.f32 %v557, %v1100
      %v1102 = vpop.f32.mrb[0].mxu0
      %v1103 = vadd.f32 %v561, %v1102
      %v1104 = vpop.f32.mrb[0].mxu0
      %v1105 = vadd.f32 %v557, %v1104
      %v1106 = vpop.f32.mrb[0].mxu0
      %v1107 = vadd.f32 %v561, %v1106
      %1108 = vmatprep.mubr.bf16.mxu0 0
      %1109 = vmatmul.mubr.bf16.gmra.mrb[0].mxu0 %v627
      %v1110 = vpop.f32.mrb[0].mxu0
      %v1111 = vadd.f32 %v557, %v1110
      %v1112 = vpop.f32.mrb[0].mxu0
      %v1113 = vadd.f32 %v561, %v1112
      %v1114 = vpop.f32.mrb[0].mxu0
      %v1115 = vadd.f32 %v557, %v1114
      %v1116 = vpop.f32.mrb[0].mxu0
      %v1117 = vadd.f32 %v561, %v1116
      %1118 = vmatprep.mubr.bf16.mxu0 0
      %1119 = vmatmul.mubr.bf16.gmra.mrb[0].mxu0 %v628
      %v1120 = vpop.f32.mrb[0].mxu0
      %v1121 = vadd.f32 %v557, %v1120
      %v1122 = vpop.f32.mrb[0].mxu0
      %v1123 = vadd.f32 %v561, %v1122
      %v1124 = vpop.f32.mrb[0].mxu0
      %v1125 = vadd.f32 %v557, %v1124
      %v1126 = vpop.f32.mrb[0].mxu0
      %v1127 = vadd.f32 %v561, %v1126
      %1128 = vmatprep.mubr.bf16.mxu0 0
      %1129 = vmatmul.mubr.bf16.gmra.mrb[0].mxu0 %v629
      %v1130 = vpop.f32.mrb[0].mxu0
      %v1131 = vadd.f32 %v557, %v1130
      %v1132 = vpop.f32.mrb[0].mxu0
      %v1133 = vadd.f32 %v561, %v1132
      %v1134 = vpop.f32.mrb[0].mxu0
      %v1135 = vadd.f32 %v557, %v1134
      %v1136 = vpop.f32.mrb[0].mxu0
      %v1137 = vadd.f32 %v561, %v1136
      %1138 = vmatprep.mubr.bf16.mxu0 0
      %1139 = vmatmul.mubr.bf16.gmra.mrb[0].mxu0 %v630
      %v1140 = vpop.f32.mrb[0].mxu0
      %v1141 = vadd.f32 %v557, %v1140
      %v1142 = vpop.f32.mrb[0].mxu0
      %v1143 = vadd.f32 %v561, %v1142
      %v1144 = vpop.f32.mrb[0].mxu0
      %v1145 = vadd.f32 %v557, %v1144
      %v1146 = vpop.f32.mrb[0].mxu0
      %v1147 = vadd.f32 %v561, %v1146
      %1148 = vmatprep.mubr.bf16.mxu0 0
      %1149 = vmatmul.mubr.bf16.gmra.mrb[0].mxu0 %v631
      %v1150 = vpop.f32.mrb[0].mxu0
      %v1151 = vadd.f32 %v557, %v1150
      %v1152 = vpop.f32.mrb[0].mxu0
      %v1153 = vadd.f32 %v561, %v1152
      %v1154 = vpop.f32.mrb[0].mxu0
      %v1155 = vadd.f32 %v557, %v1154
      %v1156 = vpop.f32.mrb[0].mxu0
      %v1157 = vadd.f32 %v561, %v1156
      %1158 = vmatprep.mubr.bf16.mxu0 0
      %1159 = vmatmul.mubr.bf16.gmra.mrb[0].mxu0 %v632
      %v1160 = vpop.f32.mrb[0].mxu0
      %v1161 = vadd.f32 %v557, %v1160
      %v1162 = vpop.f32.mrb[0].mxu0
      %v1163 = vadd.f32 %v561, %v1162
      %v1164 = vpop.f32.mrb[0].mxu0
      %v1165 = vadd.f32 %v557, %v1164
      %v1166 = vpop.f32.mrb[0].mxu0
      %v1167 = vadd.f32 %v561, %v1166
      %1168 = vmatprep.mubr.bf16.mxu0 0
      %1169 = vmatmul.mubr.bf16.gmra.mrb[0].mxu0 %v633
      %v1170 = vpop.f32.mrb[0].mxu0
      %v1171 = vadd.f32 %v557, %v1170
      %v1172 = vpop.f32.mrb[0].mxu0
      %v1173 = vadd.f32 %v561, %v1172
      %v1174 = vpop.f32.mrb[0].mxu0
      %v1175 = vpop.f32.mrb[0].mxu0
      %1176 = vdwg.mxu0
      %1177 = vmatprep.subr.bf16.mxu0 0
      %1178 = vmatpush1.bf16.msra.mxu0 %v779
      %1179 = vmatprep.subr.bf16.mxu0 0
      %1180 = vmatpush1.bf16.msra.mxu0 %v784
      %1181 = vmatprep.subr.bf16.mxu0 0
      %1182 = vmatpush1.bf16.msra.mxu0 %v789
      %1183 = vmatprep.subr.bf16.mxu0 0
      %1184 = vmatpush1.bf16.msra.mxu0 %v794
      %1185 = vmatprep.subr.bf16.mxu0 0
      %1186 = vmatpush1.bf16.msra.mxu0 %v799
      %1187 = vmatprep.subr.bf16.mxu0 0
      %1188 = vmatpush1.bf16.msra.mxu0 %v804
      %1189 = vmatprep.subr.bf16.mxu0 0
      %1190 = vmatpush1.bf16.msra.mxu0 %v809
      %1191 = vmatprep.subr.bf16.mxu0 0
      %1192 = vmatpush1.bf16.msra.mxu0 %v814
      %1193 = vmatprep.subr.bf16.mxu0 0
      %1194 = vmatpush1.bf16.msra.mxu0 0
      %1195 = vmatprep.subr.bf16.mxu0 0
      %1196 = vmatpush1.bf16.msra.mxu0 0
      %1197 = vmatprep.subr.bf16.mxu0 0
      %1198 = vmatpush1.bf16.msra.mxu0 0
      %1199 = vmatprep.subr.bf16.mxu0 0
      %1200 = vmatpush1.bf16.msra.mxu0 0
      %1201 = vmatprep.subr.bf16.mxu0 0
      %1202 = vmatpush1.bf16.msra.mxu0 0
      %1203 = vmatprep.subr.bf16.mxu0 0
      %1204 = vmatpush1.bf16.msra.mxu0 0
      %1205 = vmatprep.subr.bf16.mxu0 0
      %1206 = vmatpush1.bf16.msra.mxu0 0
      %1207 = vmatprep.subr.bf16.mxu0 0
      %1208 = vmatpush1.bf16.msra.mxu0 0
      %1209 = vmatprep.mubr.bf16.mxu0 0
      %1210 = vmatmul.mubr.bf16.gmra.mrb[0].mxu0 %v621
      %v1211 = vpop.f32.mrb[0].mxu0
      %v1212 = vadd.f32 %v565, %v1211
      %v1213 = vpop.f32.mrb[0].mxu0
      %v1214 = vpop.f32.mrb[0].mxu0
      %v1215 = vadd.f32 %v565, %v1214
      %v1216 = vpop.f32.mrb[0].mxu0
      %1217 = vmatprep.mubr.bf16.mxu0 0
      %1218 = vmatmul.mubr.bf16.gmra.mrb[0].mxu0 %v622
      %v1219 = vpop.f32.mrb[0].mxu0
      %v1220 = vadd.f32 %v565, %v1219
      %v1221 = vpop.f32.mrb[0].mxu0
      %v1222 = vpop.f32.mrb[0].mxu0
      %v1223 = vadd.f32 %v565, %v1222
      %v1224 = vpop.f32.mrb[0].mxu0
      %1225 = vmatprep.mubr.bf16.mxu0 0
      %1226 = vmatmul.mubr.bf16.gmra.mrb[0].mxu0 %v623
      %v1227 = vpop.f32.mrb[0].mxu0
      %v1228 = vadd.f32 %v565, %v1227
      %v1229 = vpop.f32.mrb[0].mxu0
      %v1230 = vpop.f32.mrb[0].mxu0
      %v1231 = vadd.f32 %v565, %v1230
      %v1232 = vpop.f32.mrb[0].mxu0
      %1233 = vmatprep.mubr.bf16.mxu0 0
      %1234 = vmatmul.mubr.bf16.gmra.mrb[0].mxu0 %v624
      %v1235 = vpop.f32.mrb[0].mxu0
      %v1236 = vadd.f32 %v565, %v1235
      %v1237 = vpop.f32.mrb[0].mxu0
      %v1238 = vpop.f32.mrb[0].mxu0
      %v1239 = vadd.f32 %v565, %v1238
      %v1240 = vpop.f32.mrb[0].mxu0
      %1241 = vmatprep.mubr.bf16.mxu0 0
      %1242 = vmatmul.mubr.bf16.gmra.mrb[0].mxu0 %v625
      %v1243 = vpop.f32.mrb[0].mxu0
      %v1244 = vadd.f32 %v565, %v1243
      %v1245 = vpop.f32.mrb[0].mxu0
      %v1246 = vpop.f32.mrb[0].mxu0
      %v1247 = vadd.f32 %v565, %v1246
      %v1248 = vpop.f32.mrb[0].mxu0
      %1249 = vmatprep.mubr.bf16.mxu0 0
      %1250 = vmatmul.mubr.bf16.gmra.mrb[0].mxu0 %v626
      %v1251 = vpop.f32.mrb[0].mxu0
      %v1252 = vadd.f32 %v565, %v1251
      %v1253 = vpop.f32.mrb[0].mxu0
      %v1254 = vpop.f32.mrb[0].mxu0
      %v1255 = vadd.f32 %v565, %v1254
      %v1256 = vpop.f32.mrb[0].mxu0
      %1257 = vmatprep.mubr.bf16.mxu0 0
      %1258 = vmatmul.mubr.bf16.gmra.mrb[0].mxu0 %v627
      %v1259 = vpop.f32.mrb[0].mxu0
      %v1260 = vadd.f32 %v565, %v1259
      %v1261 = vpop.f32.mrb[0].mxu0
      %v1262 = vpop.f32.mrb[0].mxu0
      %v1263 = vadd.f32 %v565, %v1262
      %v1264 = vpop.f32.mrb[0].mxu0
      %1265 = vmatprep.mubr.bf16.mxu0 0
      %1266 = vmatmul.mubr.bf16.gmra.mrb[0].mxu0 %v628
      %v1267 = vpop.f32.mrb[0].mxu0
      %v1268 = vadd.f32 %v565, %v1267
      %v1269 = vpop.f32.mrb[0].mxu0
      %v1270 = vpop.f32.mrb[0].mxu0
      %v1271 = vadd.f32 %v565, %v1270
      %v1272 = vpop.f32.mrb[0].mxu0
      %1273 = vmatprep.mubr.bf16.mxu0 0
      %1274 = vmatmul.mubr.bf16.gmra.mrb[0].mxu0 %v629
      %v1275 = vpop.f32.mrb[0].mxu0
      %v1276 = vadd.f32 %v565, %v1275
      %v1277 = vpop.f32.mrb[0].mxu0
      %v1278 = vpop.f32.mrb[0].mxu0
      %v1279 = vadd.f32 %v565, %v1278
      %v1280 = vpop.f32.mrb[0].mxu0
      %1281 = vmatprep.mubr.bf16.mxu0 0
      %1282 = vmatmul.mubr.bf16.gmra.mrb[0].mxu0 %v630
      %v1283 = vpop.f32.mrb[0].mxu0
      %v1284 = vadd.f32 %v565, %v1283
      %v1285 = vpop.f32.mrb[0].mxu0
      %v1286 = vpop.f32.mrb[0].mxu0
      %v1287 = vadd.f32 %v565, %v1286
      %v1288 = vpop.f32.mrb[0].mxu0
      %1289 = vmatprep.mubr.bf16.mxu0 0
      %1290 = vmatmul.mubr.bf16.gmra.mrb[0].mxu0 %v631
      %v1291 = vpop.f32.mrb[0].mxu0
      %v1292 = vadd.f32 %v565, %v1291
      %v1293 = vpop.f32.mrb[0].mxu0
      %v1294 = vpop.f32.mrb[0].mxu0
      %v1295 = vadd.f32 %v565, %v1294
      %v1296 = vpop.f32.mrb[0].mxu0
      %1297 = vmatprep.mubr.bf16.mxu0 0
      %1298 = vmatmul.mubr.bf16.gmra.mrb[0].mxu0 %v632
      %v1299 = vpop.f32.mrb[0].mxu0
      %v1300 = vadd.f32 %v565, %v1299
      %v1301 = vpop.f32.mrb[0].mxu0
      %v1302 = vpop.f32.mrb[0].mxu0
      %v1303 = vadd.f32 %v565, %v1302
      %v1304 = vpop.f32.mrb[0].mxu0
      %1305 = vmatprep.mubr.bf16.mxu0 0
      %1306 = vmatmul.mubr.bf16.gmra.mrb[0].mxu0 %v633
      %v1307 = vpop.f32.mrb[0].mxu0
      %v1308 = vadd.f32 %v565, %v1307
      %v1309 = vpop.f32.mrb[0].mxu0
      %v1310 = vpop.f32.mrb[0].mxu0
      %v1311 = vpop.f32.mrb[0].mxu0
      %1312 = vdwg.mxu0
      %v1313 = vmax.f32 %v890, 0.0
      %v1314 = vmax.f32 %v892, 0.0
      %v1315 = vmax.f32 %v1051, 0.0
      %v1316 = vmax.f32 %v1053, 0.0
      %v1317 = vmax.f32 %v1212, 0.0
      %v1318 = vmax.f32 %v894, 0.0
      %v1319 = vmax.f32 %v896, 0.0
      %v1320 = vmax.f32 %v1055, 0.0
      %v1321 = vmax.f32 %v1057, 0.0
      %v1322 = vmax.f32 %v1215, 0.0
      %v1323 = vmax.f32 %v900, 0.0
      %v1324 = vmax.f32 %v902, 0.0
      %v1325 = vmax.f32 %v1061, 0.0
      %v1326 = vmax.f32 %v1063, 0.0
      %v1327 = vmax.f32 %v1220, 0.0
      %v1328 = vmax.f32 %v904, 0.0
      %v1329 = vmax.f32 %v906, 0.0
      %v1330 = vmax.f32 %v1065, 0.0
      %v1331 = vmax.f32 %v1067, 0.0
      %v1332 = vmax.f32 %v1223, 0.0
      %v1333 = vmax.f32 %v910, 0.0
      %v1334 = vmax.f32 %v912, 0.0
      %v1335 = vmax.f32 %v1071, 0.0
      %v1336 = vmax.f32 %v1073, 0.0
      %v1337 = vmax.f32 %v1228, 0.0
      %v1338 = vmax.f32 %v914, 0.0
      %v1339 = vmax.f32 %v916, 0.0
      %v1340 = vmax.f32 %v1075, 0.0
      %v1341 = vmax.f32 %v1077, 0.0
      %v1342 = vmax.f32 %v1231, 0.0
      %v1343 = vmax.f32 %v920, 0.0
      %v1344 = vmax.f32 %v922, 0.0
      %v1345 = vmax.f32 %v1081, 0.0
      %v1346 = vmax.f32 %v1083, 0.0
      %v1347 = vmax.f32 %v1236, 0.0
      %v1348 = vmax.f32 %v924, 0.0
      %v1349 = vmax.f32 %v926, 0.0
      %v1350 = vmax.f32 %v1085, 0.0
      %v1351 = vmax.f32 %v1087, 0.0
      %v1352 = vmax.f32 %v1239, 0.0
      %v1353 = vmax.f32 %v930, 0.0
      %v1354 = vmax.f32 %v932, 0.0
      %v1355 = vmax.f32 %v1091, 0.0
      %v1356 = vmax.f32 %v1093, 0.0
      %v1357 = vmax.f32 %v1244, 0.0
      %v1358 = vmax.f32 %v934, 0.0
      %v1359 = vmax.f32 %v936, 0.0
      %v1360 = vmax.f32 %v1095, 0.0
      %v1361 = vmax.f32 %v1097, 0.0
      %v1362 = vmax.f32 %v1247, 0.0
      %v1363 = vmax.f32 %v940, 0.0
      %v1364 = vmax.f32 %v942, 0.0
      %v1365 = vmax.f32 %v1101, 0.0
      %v1366 = vmax.f32 %v1103, 0.0
      %v1367 = vmax.f32 %v1252, 0.0
      %v1368 = vmax.f32 %v944, 0.0
      %v1369 = vmax.f32 %v946, 0.0
      %v1370 = vmax.f32 %v1105, 0.0
      %v1371 = vmax.f32 %v1107, 0.0
      %v1372 = vmax.f32 %v1255, 0.0
      %v1373 = vmax.f32 %v950, 0.0
      %v1374 = vmax.f32 %v952, 0.0
      %v1375 = vmax.f32 %v1111, 0.0
      %v1376 = vmax.f32 %v1113, 0.0
      %v1377 = vmax.f32 %v1260, 0.0
      %v1378 = vmax.f32 %v954, 0.0
      %v1379 = vmax.f32 %v956, 0.0
      %v1380 = vmax.f32 %v1115, 0.0
      %v1381 = vmax.f32 %v1117, 0.0
      %v1382 = vmax.f32 %v1263, 0.0
      %v1383 = vmax.f32 %v960, 0.0
      %v1384 = vmax.f32 %v962, 0.0
      %v1385 = vmax.f32 %v1121, 0.0
      %v1386 = vmax.f32 %v1123, 0.0
      %v1387 = vmax.f32 %v1268, 0.0
      %v1388 = vmax.f32 %v964, 0.0
      %v1389 = vmax.f32 %v966, 0.0
      %v1390 = vmax.f32 %v1125, 0.0
      %v1391 = vmax.f32 %v1127, 0.0
      %v1392 = vmax.f32 %v1271, 0.0
      %v1393 = vmax.f32 %v970, 0.0
      %v1394 = vmax.f32 %v972, 0.0
      %v1395 = vmax.f32 %v1131, 0.0
      %v1396 = vmax.f32 %v1133, 0.0
      %v1397 = vmax.f32 %v1276, 0.0
      %v1398 = vmax.f32 %v974, 0.0
      %v1399 = vmax.f32 %v976, 0.0
      %v1400 = vmax.f32 %v1135, 0.0
      %v1401 = vmax.f32 %v1137, 0.0
      %v1402 = vmax.f32 %v1279, 0.0
      %v1403 = vmax.f32 %v980, 0.0
      %v1404 = vmax.f32 %v982, 0.0
      %v1405 = vmax.f32 %v1141, 0.0
      %v1406 = vmax.f32 %v1143, 0.0
      %v1407 = vmax.f32 %v1284, 0.0
      %v1408 = vmax.f32 %v984, 0.0
      %v1409 = vmax.f32 %v986, 0.0
      %v1410 = vmax.f32 %v1145, 0.0
      %v1411 = vmax.f32 %v1147, 0.0
      %v1412 = vmax.f32 %v1287, 0.0
      %v1413 = vmax.f32 %v990, 0.0
      %v1414 = vmax.f32 %v992, 0.0
      %v1415 = vmax.f32 %v1151, 0.0
      %v1416 = vmax.f32 %v1153, 0.0
      %v1417 = vmax.f32 %v1292, 0.0
      %v1418 = vmax.f32 %v994, 0.0
      %v1419 = vmax.f32 %v996, 0.0
      %v1420 = vmax.f32 %v1155, 0.0
      %v1421 = vmax.f32 %v1157, 0.0
      %v1422 = vmax.f32 %v1295, 0.0
      %v1423 = vmax.f32 %v1000, 0.0
      %v1424 = vmax.f32 %v1002, 0.0
      %v1425 = vmax.f32 %v1161, 0.0
      %v1426 = vmax.f32 %v1163, 0.0
      %v1427 = vmax.f32 %v1300, 0.0
      %v1428 = vmax.f32 %v1004, 0.0
      %v1429 = vmax.f32 %v1006, 0.0
      %v1430 = vmax.f32 %v1165, 0.0
      %v1431 = vmax.f32 %v1167, 0.0
      %v1432 = vmax.f32 %v1303, 0.0
      %v1433 = vmax.f32 %v1010, 0.0
      %v1434 = vmax.f32 %v1012, 0.0
      %v1435 = vmax.f32 %v1171, 0.0
      %v1436 = vmax.f32 %v1173, 0.0
      %v1437 = vmax.f32 %v1308, 0.0
      %v1438 = vpack.c.bf16 %v1318, %v1313
      %v1439 = vpack.c.bf16 %v1319, %v1314
      %v1440 = vpack.c.bf16 %v1320, %v1315
      %v1441 = vpack.c.bf16 %v1321, %v1316
      %v1442 = vpack.c.bf16 %v1322, %v1317
      %v1443 = vpack.c.bf16 %v1328, %v1323
      %v1444 = vpack.c.bf16 %v1329, %v1324
      %v1445 = vpack.c.bf16 %v1330, %v1325
      %v1446 = vpack.c.bf16 %v1331, %v1326
      %v1447 = vpack.c.bf16 %v1332, %v1327
      %v1448 = vpack.c.bf16 %v1338, %v1333
      %v1449 = vpack.c.bf16 %v1339, %v1334
      %v1450 = vpack.c.bf16 %v1340, %v1335
      %v1451 = vpack.c.bf16 %v1341, %v1336
      %v1452 = vpack.c.bf16 %v1342, %v1337
      %v1453 = vpack.c.bf16 %v1348, %v1343
      %v1454 = vpack.c.bf16 %v1349, %v1344
      %v1455 = vpack.c.bf16 %v1350, %v1345
      %v1456 = vpack.c.bf16 %v1351, %v1346
      %v1457 = vpack.c.bf16 %v1352, %v1347
      %v1458 = vpack.c.bf16 %v1358, %v1353
      %v1459 = vpack.c.bf16 %v1359, %v1354
      %v1460 = vpack.c.bf16 %v1360, %v1355
      %v1461 = vpack.c.bf16 %v1361, %v1356
      %v1462 = vpack.c.bf16 %v1362, %v1357
      %v1463 = vpack.c.bf16 %v1368, %v1363
      %v1464 = vpack.c.bf16 %v1369, %v1364
      %v1465 = vpack.c.bf16 %v1370, %v1365
      %v1466 = vpack.c.bf16 %v1371, %v1366
      %v1467 = vpack.c.bf16 %v1372, %v1367
      %v1468 = vpack.c.bf16 %v1378, %v1373
      %v1469 = vpack.c.bf16 %v1379, %v1374
      %v1470 = vpack.c.bf16 %v1380, %v1375
      %v1471 = vpack.c.bf16 %v1381, %v1376
      %v1472 = vpack.c.bf16 %v1382, %v1377
      %v1473 = vpack.c.bf16 %v1388, %v1383
      %v1474 = vpack.c.bf16 %v1389, %v1384
      %v1475 = vpack.c.bf16 %v1390, %v1385
      %v1476 = vpack.c.bf16 %v1391, %v1386
      %v1477 = vpack.c.bf16 %v1392, %v1387
      %v1478 = vpack.c.bf16 %v1398, %v1393
      %v1479 = vpack.c.bf16 %v1399, %v1394
      %v1480 = vpack.c.bf16 %v1400, %v1395
      %v1481 = vpack.c.bf16 %v1401, %v1396
      %v1482 = vpack.c.bf16 %v1402, %v1397
      %v1483 = vpack.c.bf16 %v1408, %v1403
      %v1484 = vpack.c.bf16 %v1409, %v1404
      %v1485 = vpack.c.bf16 %v1410, %v1405
      %v1486 = vpack.c.bf16 %v1411, %v1406
      %v1487 = vpack.c.bf16 %v1412, %v1407
      %v1488 = vpack.c.bf16 %v1418, %v1413
      %v1489 = vpack.c.bf16 %v1419, %v1414
      %v1490 = vpack.c.bf16 %v1420, %v1415
      %v1491 = vpack.c.bf16 %v1421, %v1416
      %v1492 = vpack.c.bf16 %v1422, %v1417
      %v1493 = vpack.c.bf16 %v1428, %v1423
      %v1494 = vpack.c.bf16 %v1429, %v1424
      %v1495 = vpack.c.bf16 %v1430, %v1425
      %v1496 = vpack.c.bf16 %v1431, %v1426
      %v1497 = vpack.c.bf16 %v1432, %v1427
      %v1498 = vpack.c.bf16 %v1433, %v1433
      %v1499 = vpack.c.bf16 %v1434, %v1434
      %v1500 = vpack.c.bf16 %v1435, %v1435
      %v1501 = vpack.c.bf16 %v1436, %v1436
      %v1502 = vpack.c.bf16 %v1437, %v1437
      %v1528 = vunpack.c.l.b16 %v471
      %v1529 = vunpack.c.h.b16 %v471
      %v1530 = vunpack.c.l.b16 %v472
      %v1531 = vunpack.c.h.b16 %v472
      %v1532 = vunpack.c.l.b16 %v473
      %v1533 = vunpack.c.h.b16 %v473
      %v1534 = vunpack.c.l.b16 %v474
      %v1535 = vunpack.c.h.b16 %v474
      %v1536 = vunpack.c.l.b16 %v475
      %v1537 = vunpack.c.h.b16 %v475
      %v1538 = vunpack.c.l.b16 %v476
      %v1539 = vunpack.c.h.b16 %v476
      %v1540 = vunpack.c.l.b16 %v477
      %v1541 = vunpack.c.h.b16 %v477
      %v1542 = vunpack.c.l.b16 %v478
      %v1543 = vunpack.c.h.b16 %v478
      %v1544 = vunpack.c.l.b16 %v479
      %v1545 = vunpack.c.h.b16 %v479
      %v1546 = vunpack.c.l.b16 %v480
      %v1547 = vunpack.c.h.b16 %v480
      %v1548 = vunpack.c.l.b16 %v481
      %v1549 = vunpack.c.h.b16 %v481
      %v1550 = vunpack.c.l.b16 %v482
      %v1551 = vunpack.c.h.b16 %v482
      %v1552 = vunpack.c.l.b16 %v483
      %v1553 = vunpack.c.h.b16 %v483
      %v1554 = vunpack.c.l.b16 %v484
      %v1555 = vunpack.c.h.b16 %v484
      %v1556 = vunpack.c.l.b16 %v485
      %v1557 = vunpack.c.h.b16 %v485
      %v1558 = vunpack.c.l.b16 %v486
      %v1559 = vunpack.c.h.b16 %v486
      %v1560 = vunpack.c.l.b16 %v487
      %v1561 = vunpack.c.h.b16 %v487
      %v1562 = vunpack.c.l.b16 %v488
      %v1563 = vunpack.c.h.b16 %v488
      %v1564 = vunpack.c.l.b16 %v489
      %v1565 = vunpack.c.h.b16 %v489
      %v1566 = vunpack.c.l.b16 %v490
      %v1567 = vunpack.c.h.b16 %v490
      %v1568 = vunpack.c.l.b16 %v491
      %v1569 = vunpack.c.h.b16 %v491
      %v1570 = vunpack.c.l.b16 %v492
      %v1571 = vunpack.c.h.b16 %v492
      %v1572 = vunpack.c.l.b16 %v493
      %v1573 = vunpack.c.h.b16 %v493
      %v1574 = vunpack.c.l.b16 %v494
      %v1575 = vunpack.c.h.b16 %v494
      %v1576 = vunpack.c.l.b16 %v495
      %v1577 = vunpack.c.h.b16 %v495
      %v1578 = vpack.c.b16 %v1530, %v1528
      %v1579 = vpack.c.b16 %v1531, %v1529
      %v1580 = vpack.c.b16 %v1534, %v1532
      %v1581 = vpack.c.b16 %v1535, %v1533
      %v1582 = vpack.c.b16 %v1538, %v1536
      %v1583 = vpack.c.b16 %v1539, %v1537
      %v1584 = vpack.c.b16 %v1542, %v1540
      %v1585 = vpack.c.b16 %v1543, %v1541
      %v1586 = vpack.c.b16 %v1546, %v1544
      %v1587 = vpack.c.b16 %v1547, %v1545
      %v1588 = vpack.c.b16 %v1550, %v1548
      %v1589 = vpack.c.b16 %v1551, %v1549
      %v1590 = vpack.c.b16 %v1554, %v1552
      %v1591 = vpack.c.b16 %v1555, %v1553
      %v1592 = vpack.c.b16 %v1558, %v1556
      %v1593 = vpack.c.b16 %v1559, %v1557
      %v1594 = vpack.c.b16 %v1562, %v1560
      %v1595 = vpack.c.b16 %v1563, %v1561
      %v1596 = vpack.c.b16 %v1566, %v1564
      %v1597 = vpack.c.b16 %v1567, %v1565
      %v1598 = vpack.c.b16 %v1570, %v1568
      %v1599 = vpack.c.b16 %v1571, %v1569
      %v1600 = vpack.c.b16 %v1574, %v1572
      %v1601 = vpack.c.b16 %v1575, %v1573
      %v1602 = vpack.c.b16 %v1576, %v1576
      %v1603 = vpack.c.b16 %v1577, %v1577
      %vm1617 = vcmask 588800
      %v1619 = vsel %vm1617, %v1579, 0
      %v1622 = vsel %vm1617, %v1581, 0
      %v1625 = vsel %vm1617, %v1583, 0
      %v1628 = vsel %vm1617, %v1585, 0
      %v1631 = vsel %vm1617, %v1587, 0
      %v1634 = vsel %vm1617, %v1589, 0
      %v1637 = vsel %vm1617, %v1591, 0
      %v1640 = vsel %vm1617, %v1593, 0
      %v1643 = vsel %vm1617, %v1595, 0
      %v1646 = vsel %vm1617, %v1597, 0
      %v1649 = vsel %vm1617, %v1599, 0
      %v1652 = vsel %vm1617, %v1601, 0
      %v1655 = vsel %vm1617, %v1603, 0
      %vm1657 = vcmask 1043456
      %v1659 = vsel %vm1657, %v1498, 0
      %v1662 = vsel %vm1657, %v1499, 0
      %v1665 = vsel %vm1657, %v1500, 0
      %v1668 = vsel %vm1657, %v1501, 0
      %v1671 = vsel %vm1657, %v1502, 0
      %1673 = vmatprep.subr.bf16.mxu0 %v1439
      %1674 = vmatpush1.bf16.msra.mxu0 %v1438
      %1675 = vmatprep.subr.bf16.mxu0 %v1444
      %1676 = vmatpush1.bf16.msra.mxu0 %v1443
      %1677 = vmatprep.subr.bf16.mxu0 %v1449
      %1678 = vmatpush1.bf16.msra.mxu0 %v1448
      %1679 = vmatprep.subr.bf16.mxu0 %v1454
      %1680 = vmatpush1.bf16.msra.mxu0 %v1453
      %1681 = vmatprep.subr.bf16.mxu0 %v1459
      %1682 = vmatpush1.bf16.msra.mxu0 %v1458
      %1683 = vmatprep.subr.bf16.mxu0 %v1464
      %1684 = vmatpush1.bf16.msra.mxu0 %v1463
      %1685 = vmatprep.subr.bf16.mxu0 %v1469
      %1686 = vmatpush1.bf16.msra.mxu0 %v1468
      %1687 = vmatprep.subr.bf16.mxu0 %v1474
      %1688 = vmatpush1.bf16.msra.mxu0 %v1473
      %1689 = vmatprep.subr.bf16.mxu0 %v1479
      %1690 = vmatpush1.bf16.msra.mxu0 %v1478
      %1691 = vmatprep.subr.bf16.mxu0 %v1484
      %1692 = vmatpush1.bf16.msra.mxu0 %v1483
      %1693 = vmatprep.subr.bf16.mxu0 %v1489
      %1694 = vmatpush1.bf16.msra.mxu0 %v1488
      %1695 = vmatprep.subr.bf16.mxu0 %v1494
      %1696 = vmatpush1.bf16.msra.mxu0 %v1493
      %1697 = vmatprep.subr.bf16.mxu0 %v1662
      %1698 = vmatpush1.bf16.msra.mxu0 %v1659
      %1699 = vmatprep.subr.bf16.mxu0 0
      %1700 = vmatpush1.bf16.msra.mxu0 0
      %1701 = vmatprep.subr.bf16.mxu0 0
      %1702 = vmatpush1.bf16.msra.mxu0 0
      %1703 = vmatprep.subr.bf16.mxu0 0
      %1704 = vmatpush1.bf16.msra.mxu0 0
      %1705 = vmatprep.mubr.bf16.mxu0 %v1619
      %1706 = vmatmul.mubr.bf16.gmra.mrb[0].mxu0 %v1578
      %v1707 = vpop.f32.mrb[0].mxu0
      %v1708 = vadd.f32 0.0, %v1707
      %v1709 = vpop.f32.mrb[0].mxu0
      %v1710 = vadd.f32 0.0, %v1709
      %v1711 = vpop.f32.mrb[0].mxu0
      %v1712 = vadd.f32 0.0, %v1711
      %v1713 = vpop.f32.mrb[0].mxu0
      %v1714 = vadd.f32 0.0, %v1713
      %1715 = vmatprep.mubr.bf16.mxu0 %v1622
      %1716 = vmatmul.mubr.bf16.gmra.mrb[0].mxu0 %v1580
      %v1717 = vpop.f32.mrb[0].mxu0
      %v1718 = vadd.f32 0.0, %v1717
      %v1719 = vpop.f32.mrb[0].mxu0
      %v1720 = vadd.f32 0.0, %v1719
      %v1721 = vpop.f32.mrb[0].mxu0
      %v1722 = vadd.f32 0.0, %v1721
      %v1723 = vpop.f32.mrb[0].mxu0
      %v1724 = vadd.f32 0.0, %v1723
      %1725 = vmatprep.mubr.bf16.mxu0 %v1625
      %1726 = vmatmul.mubr.bf16.gmra.mrb[0].mxu0 %v1582
      %v1727 = vpop.f32.mrb[0].mxu0
      %v1728 = vadd.f32 0.0, %v1727
      %v1729 = vpop.f32.mrb[0].mxu0
      %v1730 = vadd.f32 0.0, %v1729
      %v1731 = vpop.f32.mrb[0].mxu0
      %v1732 = vadd.f32 0.0, %v1731
      %v1733 = vpop.f32.mrb[0].mxu0
      %v1734 = vadd.f32 0.0, %v1733
      %1735 = vmatprep.mubr.bf16.mxu0 %v1628
      %1736 = vmatmul.mubr.bf16.gmra.mrb[0].mxu0 %v1584
      %v1737 = vpop.f32.mrb[0].mxu0
      %v1738 = vadd.f32 0.0, %v1737
      %v1739 = vpop.f32.mrb[0].mxu0
      %v1740 = vadd.f32 0.0, %v1739
      %v1741 = vpop.f32.mrb[0].mxu0
      %v1742 = vadd.f32 0.0, %v1741
      %v1743 = vpop.f32.mrb[0].mxu0
      %v1744 = vadd.f32 0.0, %v1743
      %1745 = vmatprep.mubr.bf16.mxu0 %v1631
      %1746 = vmatmul.mubr.bf16.gmra.mrb[0].mxu0 %v1586
      %v1747 = vpop.f32.mrb[0].mxu0
      %v1748 = vadd.f32 0.0, %v1747
      %v1749 = vpop.f32.mrb[0].mxu0
      %v1750 = vadd.f32 0.0, %v1749
      %v1751 = vpop.f32.mrb[0].mxu0
      %v1752 = vadd.f32 0.0, %v1751
      %v1753 = vpop.f32.mrb[0].mxu0
      %v1754 = vadd.f32 0.0, %v1753
      %1755 = vmatprep.mubr.bf16.mxu0 %v1634
      %1756 = vmatmul.mubr.bf16.gmra.mrb[0].mxu0 %v1588
      %v1757 = vpop.f32.mrb[0].mxu0
      %v1758 = vadd.f32 0.0, %v1757
      %v1759 = vpop.f32.mrb[0].mxu0
      %v1760 = vadd.f32 0.0, %v1759
      %v1761 = vpop.f32.mrb[0].mxu0
      %v1762 = vadd.f32 0.0, %v1761
      %v1763 = vpop.f32.mrb[0].mxu0
      %v1764 = vadd.f32 0.0, %v1763
      %1765 = vmatprep.mubr.bf16.mxu0 %v1637
      %1766 = vmatmul.mubr.bf16.gmra.mrb[0].mxu0 %v1590
      %v1767 = vpop.f32.mrb[0].mxu0
      %v1768 = vadd.f32 0.0, %v1767
      %v1769 = vpop.f32.mrb[0].mxu0
      %v1770 = vadd.f32 0.0, %v1769
      %v1771 = vpop.f32.mrb[0].mxu0
      %v1772 = vadd.f32 0.0, %v1771
      %v1773 = vpop.f32.mrb[0].mxu0
      %v1774 = vadd.f32 0.0, %v1773
      %1775 = vmatprep.mubr.bf16.mxu0 %v1640
      %1776 = vmatmul.mubr.bf16.gmra.mrb[0].mxu0 %v1592
      %v1777 = vpop.f32.mrb[0].mxu0
      %v1778 = vadd.f32 0.0, %v1777
      %v1779 = vpop.f32.mrb[0].mxu0
      %v1780 = vadd.f32 0.0, %v1779
      %v1781 = vpop.f32.mrb[0].mxu0
      %v1782 = vadd.f32 0.0, %v1781
      %v1783 = vpop.f32.mrb[0].mxu0
      %v1784 = vadd.f32 0.0, %v1783
      %1785 = vmatprep.mubr.bf16.mxu0 %v1643
      %1786 = vmatmul.mubr.bf16.gmra.mrb[0].mxu0 %v1594
      %v1787 = vpop.f32.mrb[0].mxu0
      %v1788 = vadd.f32 0.0, %v1787
      %v1789 = vpop.f32.mrb[0].mxu0
      %v1790 = vadd.f32 0.0, %v1789
      %v1791 = vpop.f32.mrb[0].mxu0
      %v1792 = vadd.f32 0.0, %v1791
      %v1793 = vpop.f32.mrb[0].mxu0
      %v1794 = vadd.f32 0.0, %v1793
      %1795 = vmatprep.mubr.bf16.mxu0 %v1646
      %1796 = vmatmul.mubr.bf16.gmra.mrb[0].mxu0 %v1596
      %v1797 = vpop.f32.mrb[0].mxu0
      %v1798 = vadd.f32 0.0, %v1797
      %v1799 = vpop.f32.mrb[0].mxu0
      %v1800 = vadd.f32 0.0, %v1799
      %v1801 = vpop.f32.mrb[0].mxu0
      %v1802 = vadd.f32 0.0, %v1801
      %v1803 = vpop.f32.mrb[0].mxu0
      %v1804 = vadd.f32 0.0, %v1803
      %1805 = vmatprep.mubr.bf16.mxu0 %v1649
      %1806 = vmatmul.mubr.bf16.gmra.mrb[0].mxu0 %v1598
      %v1807 = vpop.f32.mrb[0].mxu0
      %v1808 = vadd.f32 0.0, %v1807
      %v1809 = vpop.f32.mrb[0].mxu0
      %v1810 = vadd.f32 0.0, %v1809
      %v1811 = vpop.f32.mrb[0].mxu0
      %v1812 = vadd.f32 0.0, %v1811
      %v1813 = vpop.f32.mrb[0].mxu0
      %v1814 = vadd.f32 0.0, %v1813
      %1815 = vmatprep.mubr.bf16.mxu0 %v1652
      %1816 = vmatmul.mubr.bf16.gmra.mrb[0].mxu0 %v1600
      %v1817 = vpop.f32.mrb[0].mxu0
      %v1818 = vadd.f32 0.0, %v1817
      %v1819 = vpop.f32.mrb[0].mxu0
      %v1820 = vadd.f32 0.0, %v1819
      %v1821 = vpop.f32.mrb[0].mxu0
      %v1822 = vadd.f32 0.0, %v1821
      %v1823 = vpop.f32.mrb[0].mxu0
      %v1824 = vadd.f32 0.0, %v1823
      %1825 = vmatprep.mubr.bf16.mxu0 %v1655
      %1826 = vmatmul.mubr.bf16.gmra.mrb[0].mxu0 %v1602
      %v1827 = vpop.f32.mrb[0].mxu0
      %v1828 = vadd.f32 0.0, %v1827
      %v1829 = vpop.f32.mrb[0].mxu0
      %v1830 = vadd.f32 0.0, %v1829
      %v1831 = vpop.f32.mrb[0].mxu0
      %v1832 = vpop.f32.mrb[0].mxu0
      %1833 = vdwg.mxu0
      %1834 = vmatprep.subr.bf16.mxu0 %v1441
      %1835 = vmatpush1.bf16.msra.mxu0 %v1440
      %1836 = vmatprep.subr.bf16.mxu0 %v1446
      %1837 = vmatpush1.bf16.msra.mxu0 %v1445
      %1838 = vmatprep.subr.bf16.mxu0 %v1451
      %1839 = vmatpush1.bf16.msra.mxu0 %v1450
      %1840 = vmatprep.subr.bf16.mxu0 %v1456
      %1841 = vmatpush1.bf16.msra.mxu0 %v1455
      %1842 = vmatprep.subr.bf16.mxu0 %v1461
      %1843 = vmatpush1.bf16.msra.mxu0 %v1460
      %1844 = vmatprep.subr.bf16.mxu0 %v1466
      %1845 = vmatpush1.bf16.msra.mxu0 %v1465
      %1846 = vmatprep.subr.bf16.mxu0 %v1471
      %1847 = vmatpush1.bf16.msra.mxu0 %v1470
      %1848 = vmatprep.subr.bf16.mxu0 %v1476
      %1849 = vmatpush1.bf16.msra.mxu0 %v1475
      %1850 = vmatprep.subr.bf16.mxu0 %v1481
      %1851 = vmatpush1.bf16.msra.mxu0 %v1480
      %1852 = vmatprep.subr.bf16.mxu0 %v1486
      %1853 = vmatpush1.bf16.msra.mxu0 %v1485
      %1854 = vmatprep.subr.bf16.mxu0 %v1491
      %1855 = vmatpush1.bf16.msra.mxu0 %v1490
      %1856 = vmatprep.subr.bf16.mxu0 %v1496
      %1857 = vmatpush1.bf16.msra.mxu0 %v1495
      %1858 = vmatprep.subr.bf16.mxu0 %v1668
      %1859 = vmatpush1.bf16.msra.mxu0 %v1665
      %1860 = vmatprep.subr.bf16.mxu0 0
      %1861 = vmatpush1.bf16.msra.mxu0 0
      %1862 = vmatprep.subr.bf16.mxu0 0
      %1863 = vmatpush1.bf16.msra.mxu0 0
      %1864 = vmatprep.subr.bf16.mxu0 0
      %1865 = vmatpush1.bf16.msra.mxu0 0
      %1866 = vmatprep.mubr.bf16.mxu0 %v1619
      %1867 = vmatmul.mubr.bf16.gmra.mrb[0].mxu0 %v1578
      %v1868 = vpop.f32.mrb[0].mxu0
      %v1869 = vadd.f32 0.0, %v1868
      %v1870 = vpop.f32.mrb[0].mxu0
      %v1871 = vadd.f32 0.0, %v1870
      %v1872 = vpop.f32.mrb[0].mxu0
      %v1873 = vadd.f32 0.0, %v1872
      %v1874 = vpop.f32.mrb[0].mxu0
      %v1875 = vadd.f32 0.0, %v1874
      %1876 = vmatprep.mubr.bf16.mxu0 %v1622
      %1877 = vmatmul.mubr.bf16.gmra.mrb[0].mxu0 %v1580
      %v1878 = vpop.f32.mrb[0].mxu0
      %v1879 = vadd.f32 0.0, %v1878
      %v1880 = vpop.f32.mrb[0].mxu0
      %v1881 = vadd.f32 0.0, %v1880
      %v1882 = vpop.f32.mrb[0].mxu0
      %v1883 = vadd.f32 0.0, %v1882
      %v1884 = vpop.f32.mrb[0].mxu0
      %v1885 = vadd.f32 0.0, %v1884
      %1886 = vmatprep.mubr.bf16.mxu0 %v1625
      %1887 = vmatmul.mubr.bf16.gmra.mrb[0].mxu0 %v1582
      %v1888 = vpop.f32.mrb[0].mxu0
      %v1889 = vadd.f32 0.0, %v1888
      %v1890 = vpop.f32.mrb[0].mxu0
      %v1891 = vadd.f32 0.0, %v1890
      %v1892 = vpop.f32.mrb[0].mxu0
      %v1893 = vadd.f32 0.0, %v1892
      %v1894 = vpop.f32.mrb[0].mxu0
      %v1895 = vadd.f32 0.0, %v1894
      %1896 = vmatprep.mubr.bf16.mxu0 %v1628
      %1897 = vmatmul.mubr.bf16.gmra.mrb[0].mxu0 %v1584
      %v1898 = vpop.f32.mrb[0].mxu0
      %v1899 = vadd.f32 0.0, %v1898
      %v1900 = vpop.f32.mrb[0].mxu0
      %v1901 = vadd.f32 0.0, %v1900
      %v1902 = vpop.f32.mrb[0].mxu0
      %v1903 = vadd.f32 0.0, %v1902
      %v1904 = vpop.f32.mrb[0].mxu0
      %v1905 = vadd.f32 0.0, %v1904
      %1906 = vmatprep.mubr.bf16.mxu0 %v1631
      %1907 = vmatmul.mubr.bf16.gmra.mrb[0].mxu0 %v1586
      %v1908 = vpop.f32.mrb[0].mxu0
      %v1909 = vadd.f32 0.0, %v1908
      %v1910 = vpop.f32.mrb[0].mxu0
      %v1911 = vadd.f32 0.0, %v1910
      %v1912 = vpop.f32.mrb[0].mxu0
      %v1913 = vadd.f32 0.0, %v1912
      %v1914 = vpop.f32.mrb[0].mxu0
      %v1915 = vadd.f32 0.0, %v1914
      %1916 = vmatprep.mubr.bf16.mxu0 %v1634
      %1917 = vmatmul.mubr.bf16.gmra.mrb[0].mxu0 %v1588
      %v1918 = vpop.f32.mrb[0].mxu0
      %v1919 = vadd.f32 0.0, %v1918
      %v1920 = vpop.f32.mrb[0].mxu0
      %v1921 = vadd.f32 0.0, %v1920
      %v1922 = vpop.f32.mrb[0].mxu0
      %v1923 = vadd.f32 0.0, %v1922
      %v1924 = vpop.f32.mrb[0].mxu0
      %v1925 = vadd.f32 0.0, %v1924
      %1926 = vmatprep.mubr.bf16.mxu0 %v1637
      %1927 = vmatmul.mubr.bf16.gmra.mrb[0].mxu0 %v1590
      %v1928 = vpop.f32.mrb[0].mxu0
      %v1929 = vadd.f32 0.0, %v1928
      %v1930 = vpop.f32.mrb[0].mxu0
      %v1931 = vadd.f32 0.0, %v1930
      %v1932 = vpop.f32.mrb[0].mxu0
      %v1933 = vadd.f32 0.0, %v1932
      %v1934 = vpop.f32.mrb[0].mxu0
      %v1935 = vadd.f32 0.0, %v1934
      %1936 = vmatprep.mubr.bf16.mxu0 %v1640
      %1937 = vmatmul.mubr.bf16.gmra.mrb[0].mxu0 %v1592
      %v1938 = vpop.f32.mrb[0].mxu0
      %v1939 = vadd.f32 0.0, %v1938
      %v1940 = vpop.f32.mrb[0].mxu0
      %v1941 = vadd.f32 0.0, %v1940
      %v1942 = vpop.f32.mrb[0].mxu0
      %v1943 = vadd.f32 0.0, %v1942
      %v1944 = vpop.f32.mrb[0].mxu0
      %v1945 = vadd.f32 0.0, %v1944
      %1946 = vmatprep.mubr.bf16.mxu0 %v1643
      %1947 = vmatmul.mubr.bf16.gmra.mrb[0].mxu0 %v1594
      %v1948 = vpop.f32.mrb[0].mxu0
      %v1949 = vadd.f32 0.0, %v1948
      %v1950 = vpop.f32.mrb[0].mxu0
      %v1951 = vadd.f32 0.0, %v1950
      %v1952 = vpop.f32.mrb[0].mxu0
      %v1953 = vadd.f32 0.0, %v1952
      %v1954 = vpop.f32.mrb[0].mxu0
      %v1955 = vadd.f32 0.0, %v1954
      %1956 = vmatprep.mubr.bf16.mxu0 %v1646
      %1957 = vmatmul.mubr.bf16.gmra.mrb[0].mxu0 %v1596
      %v1958 = vpop.f32.mrb[0].mxu0
      %v1959 = vadd.f32 0.0, %v1958
      %v1960 = vpop.f32.mrb[0].mxu0
      %v1961 = vadd.f32 0.0, %v1960
      %v1962 = vpop.f32.mrb[0].mxu0
      %v1963 = vadd.f32 0.0, %v1962
      %v1964 = vpop.f32.mrb[0].mxu0
      %v1965 = vadd.f32 0.0, %v1964
      %1966 = vmatprep.mubr.bf16.mxu0 %v1649
      %1967 = vmatmul.mubr.bf16.gmra.mrb[0].mxu0 %v1598
      %v1968 = vpop.f32.mrb[0].mxu0
      %v1969 = vadd.f32 0.0, %v1968
      %v1970 = vpop.f32.mrb[0].mxu0
      %v1971 = vadd.f32 0.0, %v1970
      %v1972 = vpop.f32.mrb[0].mxu0
      %v1973 = vadd.f32 0.0, %v1972
      %v1974 = vpop.f32.mrb[0].mxu0
      %v1975 = vadd.f32 0.0, %v1974
      %1976 = vmatprep.mubr.bf16.mxu0 %v1652
      %1977 = vmatmul.mubr.bf16.gmra.mrb[0].mxu0 %v1600
      %v1978 = vpop.f32.mrb[0].mxu0
      %v1979 = vadd.f32 0.0, %v1978
      %v1980 = vpop.f32.mrb[0].mxu0
      %v1981 = vadd.f32 0.0, %v1980
      %v1982 = vpop.f32.mrb[0].mxu0
      %v1983 = vadd.f32 0.0, %v1982
      %v1984 = vpop.f32.mrb[0].mxu0
      %v1985 = vadd.f32 0.0, %v1984
      %1986 = vmatprep.mubr.bf16.mxu0 %v1655
      %1987 = vmatmul.mubr.bf16.gmra.mrb[0].mxu0 %v1602
      %v1988 = vpop.f32.mrb[0].mxu0
      %v1989 = vadd.f32 0.0, %v1988
      %v1990 = vpop.f32.mrb[0].mxu0
      %v1991 = vadd.f32 0.0, %v1990
      %v1992 = vpop.f32.mrb[0].mxu0
      %v1993 = vpop.f32.mrb[0].mxu0
      %1994 = vdwg.mxu0
      %1995 = vmatprep.subr.bf16.mxu0 0
      %1996 = vmatpush1.bf16.msra.mxu0 %v1442
      %1997 = vmatprep.subr.bf16.mxu0 0
      %1998 = vmatpush1.bf16.msra.mxu0 %v1447
      %1999 = vmatprep.subr.bf16.mxu0 0
      %2000 = vmatpush1.bf16.msra.mxu0 %v1452
      %2001 = vmatprep.subr.bf16.mxu0 0
      %2002 = vmatpush1.bf16.msra.mxu0 %v1457
      %2003 = vmatprep.subr.bf16.mxu0 0
      %2004 = vmatpush1.bf16.msra.mxu0 %v1462
      %2005 = vmatprep.subr.bf16.mxu0 0
      %2006 = vmatpush1.bf16.msra.mxu0 %v1467
      %2007 = vmatprep.subr.bf16.mxu0 0
      %2008 = vmatpush1.bf16.msra.mxu0 %v1472
      %2009 = vmatprep.subr.bf16.mxu0 0
      %2010 = vmatpush1.bf16.msra.mxu0 %v1477
      %2011 = vmatprep.subr.bf16.mxu0 0
      %2012 = vmatpush1.bf16.msra.mxu0 %v1482
      %2013 = vmatprep.subr.bf16.mxu0 0
      %2014 = vmatpush1.bf16.msra.mxu0 %v1487
      %2015 = vmatprep.subr.bf16.mxu0 0
      %2016 = vmatpush1.bf16.msra.mxu0 %v1492
      %2017 = vmatprep.subr.bf16.mxu0 0
      %2018 = vmatpush1.bf16.msra.mxu0 %v1497
      %2019 = vmatprep.subr.bf16.mxu0 0
      %2020 = vmatpush1.bf16.msra.mxu0 %v1671
      %2021 = vmatprep.subr.bf16.mxu0 0
      %2022 = vmatpush1.bf16.msra.mxu0 0
      %2023 = vmatprep.subr.bf16.mxu0 0
      %2024 = vmatpush1.bf16.msra.mxu0 0
      %2025 = vmatprep.subr.bf16.mxu0 0
      %2026 = vmatpush1.bf16.msra.mxu0 0
      %2027 = vmatprep.mubr.bf16.mxu0 %v1619
      %2028 = vmatmul.mubr.bf16.gmra.mrb[0].mxu0 %v1578
      %v2029 = vpop.f32.mrb[0].mxu0
      %v2030 = vadd.f32 0.0, %v2029
      %v2031 = vpop.f32.mrb[0].mxu0
      %v2032 = vpop.f32.mrb[0].mxu0
      %v2033 = vadd.f32 0.0, %v2032
      %v2034 = vpop.f32.mrb[0].mxu0
      %2035 = vmatprep.mubr.bf16.mxu0 %v1622
      %2036 = vmatmul.mubr.bf16.gmra.mrb[0].mxu0 %v1580
      %v2037 = vpop.f32.mrb[0].mxu0
      %v2038 = vadd.f32 0.0, %v2037
      %v2039 = vpop.f32.mrb[0].mxu0
      %v2040 = vpop.f32.mrb[0].mxu0
      %v2041 = vadd.f32 0.0, %v2040
      %v2042 = vpop.f32.mrb[0].mxu0
      %2043 = vmatprep.mubr.bf16.mxu0 %v1625
      %2044 = vmatmul.mubr.bf16.gmra.mrb[0].mxu0 %v1582
      %v2045 = vpop.f32.mrb[0].mxu0
      %v2046 = vadd.f32 0.0, %v2045
      %v2047 = vpop.f32.mrb[0].mxu0
      %v2048 = vpop.f32.mrb[0].mxu0
      %v2049 = vadd.f32 0.0, %v2048
      %v2050 = vpop.f32.mrb[0].mxu0
      %2051 = vmatprep.mubr.bf16.mxu0 %v1628
      %2052 = vmatmul.mubr.bf16.gmra.mrb[0].mxu0 %v1584
      %v2053 = vpop.f32.mrb[0].mxu0
      %v2054 = vadd.f32 0.0, %v2053
      %v2055 = vpop.f32.mrb[0].mxu0
      %v2056 = vpop.f32.mrb[0].mxu0
      %v2057 = vadd.f32 0.0, %v2056
      %v2058 = vpop.f32.mrb[0].mxu0
      %2059 = vmatprep.mubr.bf16.mxu0 %v1631
      %2060 = vmatmul.mubr.bf16.gmra.mrb[0].mxu0 %v1586
      %v2061 = vpop.f32.mrb[0].mxu0
      %v2062 = vadd.f32 0.0, %v2061
      %v2063 = vpop.f32.mrb[0].mxu0
      %v2064 = vpop.f32.mrb[0].mxu0
      %v2065 = vadd.f32 0.0, %v2064
      %v2066 = vpop.f32.mrb[0].mxu0
      %2067 = vmatprep.mubr.bf16.mxu0 %v1634
      %2068 = vmatmul.mubr.bf16.gmra.mrb[0].mxu0 %v1588
      %v2069 = vpop.f32.mrb[0].mxu0
      %v2070 = vadd.f32 0.0, %v2069
      %v2071 = vpop.f32.mrb[0].mxu0
      %v2072 = vpop.f32.mrb[0].mxu0
      %v2073 = vadd.f32 0.0, %v2072
      %v2074 = vpop.f32.mrb[0].mxu0
      %2075 = vmatprep.mubr.bf16.mxu0 %v1637
      %2076 = vmatmul.mubr.bf16.gmra.mrb[0].mxu0 %v1590
      %v2077 = vpop.f32.mrb[0].mxu0
      %v2078 = vadd.f32 0.0, %v2077
      %v2079 = vpop.f32.mrb[0].mxu0
      %v2080 = vpop.f32.mrb[0].mxu0
      %v2081 = vadd.f32 0.0, %v2080
      %v2082 = vpop.f32.mrb[0].mxu0
      %2083 = vmatprep.mubr.bf16.mxu0 %v1640
      %2084 = vmatmul.mubr.bf16.gmra.mrb[0].mxu0 %v1592
      %v2085 = vpop.f32.mrb[0].mxu0
      %v2086 = vadd.f32 0.0, %v2085
      %v2087 = vpop.f32.mrb[0].mxu0
      %v2088 = vpop.f32.mrb[0].mxu0
      %v2089 = vadd.f32 0.0, %v2088
      %v2090 = vpop.f32.mrb[0].mxu0
      %2091 = vmatprep.mubr.bf16.mxu0 %v1643
      %2092 = vmatmul.mubr.bf16.gmra.mrb[0].mxu0 %v1594
      %v2093 = vpop.f32.mrb[0].mxu0
      %v2094 = vadd.f32 0.0, %v2093
      %v2095 = vpop.f32.mrb[0].mxu0
      %v2096 = vpop.f32.mrb[0].mxu0
      %v2097 = vadd.f32 0.0, %v2096
      %v2098 = vpop.f32.mrb[0].mxu0
      %2099 = vmatprep.mubr.bf16.mxu0 %v1646
      %2100 = vmatmul.mubr.bf16.gmra.mrb[0].mxu0 %v1596
      %v2101 = vpop.f32.mrb[0].mxu0
      %v2102 = vadd.f32 0.0, %v2101
      %v2103 = vpop.f32.mrb[0].mxu0
      %v2104 = vpop.f32.mrb[0].mxu0
      %v2105 = vadd.f32 0.0, %v2104
      %v2106 = vpop.f32.mrb[0].mxu0
      %2107 = vmatprep.mubr.bf16.mxu0 %v1649
      %2108 = vmatmul.mubr.bf16.gmra.mrb[0].mxu0 %v1598
      %v2109 = vpop.f32.mrb[0].mxu0
      %v2110 = vadd.f32 0.0, %v2109
      %v2111 = vpop.f32.mrb[0].mxu0
      %v2112 = vpop.f32.mrb[0].mxu0
      %v2113 = vadd.f32 0.0, %v2112
      %v2114 = vpop.f32.mrb[0].mxu0
      %2115 = vmatprep.mubr.bf16.mxu0 %v1652
      %2116 = vmatmul.mubr.bf16.gmra.mrb[0].mxu0 %v1600
      %v2117 = vpop.f32.mrb[0].mxu0
      %v2118 = vadd.f32 0.0, %v2117
      %v2119 = vpop.f32.mrb[0].mxu0
      %v2120 = vpop.f32.mrb[0].mxu0
      %v2121 = vadd.f32 0.0, %v2120
      %v2122 = vpop.f32.mrb[0].mxu0
      %2123 = vmatprep.mubr.bf16.mxu0 %v1655
      %2124 = vmatmul.mubr.bf16.gmra.mrb[0].mxu0 %v1602
      %v2125 = vpop.f32.mrb[0].mxu0
      %v2126 = vadd.f32 0.0, %v2125
      %v2127 = vpop.f32.mrb[0].mxu0
      %v2128 = vpop.f32.mrb[0].mxu0
      %v2129 = vpop.f32.mrb[0].mxu0
      %2130 = vdwg.mxu0
      %v2131 = vpack.c.bf16 %v1712, %v1708
      %v2132 = vpack.c.bf16 %v1714, %v1710
      %v2133 = vpack.c.bf16 %v1873, %v1869
      %v2134 = vpack.c.bf16 %v1875, %v1871
      %v2135 = vpack.c.bf16 %v2033, %v2030
      %v2136 = vpack.c.bf16 %v1722, %v1718
      %v2137 = vpack.c.bf16 %v1724, %v1720
      %v2138 = vpack.c.bf16 %v1883, %v1879
      %v2139 = vpack.c.bf16 %v1885, %v1881
      %v2140 = vpack.c.bf16 %v2041, %v2038
      %v2141 = vpack.c.bf16 %v1732, %v1728
      %v2142 = vpack.c.bf16 %v1734, %v1730
      %v2143 = vpack.c.bf16 %v1893, %v1889
      %v2144 = vpack.c.bf16 %v1895, %v1891
      %v2145 = vpack.c.bf16 %v2049, %v2046
      %v2146 = vpack.c.bf16 %v1742, %v1738
      %v2147 = vpack.c.bf16 %v1744, %v1740
      %v2148 = vpack.c.bf16 %v1903, %v1899
      %v2149 = vpack.c.bf16 %v1905, %v1901
      %v2150 = vpack.c.bf16 %v2057, %v2054
      %v2151 = vpack.c.bf16 %v1752, %v1748
      %v2152 = vpack.c.bf16 %v1754, %v1750
      %v2153 = vpack.c.bf16 %v1913, %v1909
      %v2154 = vpack.c.bf16 %v1915, %v1911
      %v2155 = vpack.c.bf16 %v2065, %v2062
      %v2156 = vpack.c.bf16 %v1762, %v1758
      %v2157 = vpack.c.bf16 %v1764, %v1760
      %v2158 = vpack.c.bf16 %v1923, %v1919
      %v2159 = vpack.c.bf16 %v1925, %v1921
      %v2160 = vpack.c.bf16 %v2073, %v2070
      %v2161 = vpack.c.bf16 %v1772, %v1768
      %v2162 = vpack.c.bf16 %v1774, %v1770
      %v2163 = vpack.c.bf16 %v1933, %v1929
      %v2164 = vpack.c.bf16 %v1935, %v1931
      %v2165 = vpack.c.bf16 %v2081, %v2078
      %v2166 = vpack.c.bf16 %v1782, %v1778
      %v2167 = vpack.c.bf16 %v1784, %v1780
      %v2168 = vpack.c.bf16 %v1943, %v1939
      %v2169 = vpack.c.bf16 %v1945, %v1941
      %v2170 = vpack.c.bf16 %v2089, %v2086
      %v2171 = vpack.c.bf16 %v1792, %v1788
      %v2172 = vpack.c.bf16 %v1794, %v1790
      %v2173 = vpack.c.bf16 %v1953, %v1949
      %v2174 = vpack.c.bf16 %v1955, %v1951
      %v2175 = vpack.c.bf16 %v2097, %v2094
      %v2176 = vpack.c.bf16 %v1802, %v1798
      %v2177 = vpack.c.bf16 %v1804, %v1800
      %v2178 = vpack.c.bf16 %v1963, %v1959
      %v2179 = vpack.c.bf16 %v1965, %v1961
      %v2180 = vpack.c.bf16 %v2105, %v2102
      %v2181 = vpack.c.bf16 %v1812, %v1808
      %v2182 = vpack.c.bf16 %v1814, %v1810
      %v2183 = vpack.c.bf16 %v1973, %v1969
      %v2184 = vpack.c.bf16 %v1975, %v1971
      %v2185 = vpack.c.bf16 %v2113, %v2110
      %v2186 = vpack.c.bf16 %v1822, %v1818
      %v2187 = vpack.c.bf16 %v1824, %v1820
      %v2188 = vpack.c.bf16 %v1983, %v1979
      %v2189 = vpack.c.bf16 %v1985, %v1981
      %v2190 = vpack.c.bf16 %v2121, %v2118
      %v2191 = vpack.c.bf16 %v1828, %v1828
      %v2192 = vpack.c.bf16 %v1830, %v1830
      %v2193 = vpack.c.bf16 %v1989, %v1989
      %v2194 = vpack.c.bf16 %v1991, %v1991
      %v2195 = vpack.c.bf16 %v2126, %v2126
      %v2196 = vld [vmem:[%s4] sm:$0xff]
      %v2197 = vld [vmem:[%s4 + $0x8] sm:$0xff]
      %v2198 = vld [vmem:[%s4 + $0x10] sm:$0xff]
      %v2199 = vld [vmem:[%s4 + $0x18] sm:$0xff]
      %v2200 = vld [vmem:[%s4 + $0x20] sm:$0xff]
      %v2201 = vld [vmem:[%s4 + $0x28] sm:$0xff]
      %v2202 = vld [vmem:[%s4 + $0x30] sm:$0xff]
      %v2203 = vld [vmem:[%s4 + $0x38] sm:$0xff]
      %v2204 = vld [vmem:[%s4 + $0x40] sm:$0xff]
      %v2205 = vld [vmem:[%s4 + $0x48] sm:$0xff]
      %v2206 = vld [vmem:[%s4 + $0x50] sm:$0xff]
      %v2207 = vld [vmem:[%s4 + $0x58] sm:$0xff]
      %v2208 = vld [vmem:[%s4 + $0x60] sm:$0xff]
      %v2209 = vld [vmem:[%s4 + $0x68] sm:$0xff]
      %v2210 = vld [vmem:[%s4 + $0x70] sm:$0xff]
      %v2211 = vld [vmem:[%s4 + $0x78] sm:$0xff]
      %v2212 = vld [vmem:[%s4 + $0x80] sm:$0xff]
      %v2213 = vld [vmem:[%s4 + $0x88] sm:$0xff]
      %v2214 = vld [vmem:[%s4 + $0x90] sm:$0xff]
      %v2215 = vld [vmem:[%s4 + $0x98] sm:$0xff]
      %v2216 = vld [vmem:[%s4 + $0xa0] sm:$0xff]
      %v2217 = vld [vmem:[%s4 + $0xa8] sm:$0xff]
      %v2218 = vld [vmem:[%s4 + $0xb0] sm:$0xff]
      %v2219 = vld [vmem:[%s4 + $0xb8] sm:$0xff]
      %v2220 = vld [vmem:[%s4 + $0xc0] sm:$0xff]
      %v2221 = vld [vmem:[%s4 + $0xc8] sm:$0xff]
      %v2222 = vld [vmem:[%s4 + $0xd0] sm:$0xff]
      %v2223 = vld [vmem:[%s4 + $0xd8] sm:$0xff]
      %v2224 = vld [vmem:[%s4 + $0xe0] sm:$0xff]
      %v2225 = vld [vmem:[%s4 + $0xe8] sm:$0xff]
      %v2226 = vld [vmem:[%s4 + $0xf0] sm:$0xff]
      %v2227 = vld [vmem:[%s4 + $0xf8] sm:$0xff]
      %v2228 = vld [vmem:[%s5] sm:$0x3]
      %v2230 = vlaneseq
      %v2231 = vshrl.u32 %v2230, 7
      %v2232 = vsub.s32 0, %v2231
      %v2233 = vrot.slane %v2228, %v2232
      %v2234 = vlaneseq
      %v2235 = vshrl.u32 %v2234, 7
      %v2236 = vsub.s32 1, %v2235
      %v2237 = vrot.slane %v2228, %v2236
      %v2272 = vunpack.c.l.b16 %v2196
      %v2273 = vunpack.c.h.b16 %v2196
      %v2274 = vunpack.c.l.b16 %v2197
      %v2275 = vunpack.c.h.b16 %v2197
      %v2276 = vunpack.c.l.b16 %v2198
      %v2277 = vunpack.c.h.b16 %v2198
      %v2278 = vunpack.c.l.b16 %v2199
      %v2279 = vunpack.c.h.b16 %v2199
      %v2280 = vunpack.c.l.b16 %v2200
      %v2281 = vunpack.c.h.b16 %v2200
      %v2282 = vunpack.c.l.b16 %v2201
      %v2283 = vunpack.c.h.b16 %v2201
      %v2284 = vunpack.c.l.b16 %v2202
      %v2285 = vunpack.c.h.b16 %v2202
      %v2286 = vunpack.c.l.b16 %v2203
      %v2287 = vunpack.c.h.b16 %v2203
      %v2288 = vunpack.c.l.b16 %v2204
      %v2289 = vunpack.c.h.b16 %v2204
      %v2290 = vunpack.c.l.b16 %v2205
      %v2291 = vunpack.c.h.b16 %v2205
      %v2292 = vunpack.c.l.b16 %v2206
      %v2293 = vunpack.c.h.b16 %v2206
      %v2294 = vunpack.c.l.b16 %v2207
      %v2295 = vunpack.c.h.b16 %v2207
      %v2296 = vunpack.c.l.b16 %v2208
      %v2297 = vunpack.c.h.b16 %v2208
      %v2298 = vunpack.c.l.b16 %v2209
      %v2299 = vunpack.c.h.b16 %v2209
      %v2300 = vunpack.c.l.b16 %v2210
      %v2301 = vunpack.c.h.b16 %v2210
      %v2302 = vunpack.c.l.b16 %v2211
      %v2303 = vunpack.c.h.b16 %v2211
      %v2304 = vunpack.c.l.b16 %v2212
      %v2305 = vunpack.c.h.b16 %v2212
      %v2306 = vunpack.c.l.b16 %v2213
      %v2307 = vunpack.c.h.b16 %v2213
      %v2308 = vunpack.c.l.b16 %v2214
      %v2309 = vunpack.c.h.b16 %v2214
      %v2310 = vunpack.c.l.b16 %v2215
      %v2311 = vunpack.c.h.b16 %v2215
      %v2312 = vunpack.c.l.b16 %v2216
      %v2313 = vunpack.c.h.b16 %v2216
      %v2314 = vunpack.c.l.b16 %v2217
      %v2315 = vunpack.c.h.b16 %v2217
      %v2316 = vunpack.c.l.b16 %v2218
      %v2317 = vunpack.c.h.b16 %v2218
      %v2318 = vunpack.c.l.b16 %v2219
      %v2319 = vunpack.c.h.b16 %v2219
      %v2320 = vunpack.c.l.b16 %v2220
      %v2321 = vunpack.c.h.b16 %v2220
      %v2322 = vunpack.c.l.b16 %v2221
      %v2323 = vunpack.c.h.b16 %v2221
      %v2324 = vunpack.c.l.b16 %v2222
      %v2325 = vunpack.c.h.b16 %v2222
      %v2326 = vunpack.c.l.b16 %v2223
      %v2327 = vunpack.c.h.b16 %v2223
      %v2328 = vunpack.c.l.b16 %v2224
      %v2329 = vunpack.c.h.b16 %v2224
      %v2330 = vunpack.c.l.b16 %v2225
      %v2331 = vunpack.c.h.b16 %v2225
      %v2332 = vunpack.c.l.b16 %v2226
      %v2333 = vunpack.c.h.b16 %v2226
      %v2334 = vunpack.c.l.b16 %v2227
      %v2335 = vunpack.c.h.b16 %v2227
      %v2336 = vpack.c.b16 %v2274, %v2272
      %v2337 = vpack.c.b16 %v2275, %v2273
      %v2338 = vpack.c.b16 %v2278, %v2276
      %v2339 = vpack.c.b16 %v2279, %v2277
      %v2340 = vpack.c.b16 %v2282, %v2280
      %v2341 = vpack.c.b16 %v2283, %v2281
      %v2342 = vpack.c.b16 %v2286, %v2284
      %v2343 = vpack.c.b16 %v2287, %v2285
      %v2344 = vpack.c.b16 %v2290, %v2288
      %v2345 = vpack.c.b16 %v2291, %v2289
      %v2346 = vpack.c.b16 %v2294, %v2292
      %v2347 = vpack.c.b16 %v2295, %v2293
      %v2348 = vpack.c.b16 %v2298, %v2296
      %v2349 = vpack.c.b16 %v2299, %v2297
      %v2350 = vpack.c.b16 %v2302, %v2300
      %v2351 = vpack.c.b16 %v2303, %v2301
      %v2352 = vpack.c.b16 %v2306, %v2304
      %v2353 = vpack.c.b16 %v2307, %v2305
      %v2354 = vpack.c.b16 %v2310, %v2308
      %v2355 = vpack.c.b16 %v2311, %v2309
      %v2356 = vpack.c.b16 %v2314, %v2312
      %v2357 = vpack.c.b16 %v2315, %v2313
      %v2358 = vpack.c.b16 %v2318, %v2316
      %v2359 = vpack.c.b16 %v2319, %v2317
      %v2360 = vpack.c.b16 %v2322, %v2320
      %v2361 = vpack.c.b16 %v2323, %v2321
      %v2362 = vpack.c.b16 %v2326, %v2324
      %v2363 = vpack.c.b16 %v2327, %v2325
      %v2364 = vpack.c.b16 %v2330, %v2328
      %v2365 = vpack.c.b16 %v2331, %v2329
      %v2366 = vpack.c.b16 %v2334, %v2332
      %v2367 = vpack.c.b16 %v2335, %v2333
      %2400 = vmatprep.subr.bf16.mxu0 %v2337
      %2401 = vmatpush1.bf16.msra.mxu0 %v2336
      %2402 = vmatprep.subr.bf16.mxu0 %v2339
      %2403 = vmatpush1.bf16.msra.mxu0 %v2338
      %2404 = vmatprep.subr.bf16.mxu0 %v2341
      %2405 = vmatpush1.bf16.msra.mxu0 %v2340
      %2406 = vmatprep.subr.bf16.mxu0 %v2343
      %2407 = vmatpush1.bf16.msra.mxu0 %v2342
      %2408 = vmatprep.subr.bf16.mxu0 %v2345
      %2409 = vmatpush1.bf16.msra.mxu0 %v2344
      %2410 = vmatprep.subr.bf16.mxu0 %v2347
      %2411 = vmatpush1.bf16.msra.mxu0 %v2346
      %2412 = vmatprep.subr.bf16.mxu0 %v2349
      %2413 = vmatpush1.bf16.msra.mxu0 %v2348
      %2414 = vmatprep.subr.bf16.mxu0 %v2351
      %2415 = vmatpush1.bf16.msra.mxu0 %v2350
      %2416 = vmatprep.subr.bf16.mxu0 %v2353
      %2417 = vmatpush1.bf16.msra.mxu0 %v2352
      %2418 = vmatprep.subr.bf16.mxu0 %v2355
      %2419 = vmatpush1.bf16.msra.mxu0 %v2354
      %2420 = vmatprep.subr.bf16.mxu0 %v2357
      %2421 = vmatpush1.bf16.msra.mxu0 %v2356
      %2422 = vmatprep.subr.bf16.mxu0 %v2359
      %2423 = vmatpush1.bf16.msra.mxu0 %v2358
      %2424 = vmatprep.subr.bf16.mxu0 %v2361
      %2425 = vmatpush1.bf16.msra.mxu0 %v2360
      %2426 = vmatprep.subr.bf16.mxu0 %v2363
      %2427 = vmatpush1.bf16.msra.mxu0 %v2362
      %2428 = vmatprep.subr.bf16.mxu0 %v2365
      %2429 = vmatpush1.bf16.msra.mxu0 %v2364
      %2430 = vmatprep.subr.bf16.mxu0 %v2367
      %2431 = vmatpush1.bf16.msra.mxu0 %v2366
      %2432 = vmatprep.mubr.bf16.mxu0 %v2132
      %2433 = vmatmul.mubr.bf16.gmra.mrb[0].mxu0 %v2131
      %v2434 = vpop.f32.mrb[0].mxu0
      %v2435 = vadd.f32 %v2233, %v2434
      %v2436 = vpop.f32.mrb[0].mxu0
      %v2437 = vadd.f32 %v2237, %v2436
      %v2438 = vpop.f32.mrb[0].mxu0
      %v2439 = vadd.f32 %v2233, %v2438
      %v2440 = vpop.f32.mrb[0].mxu0
      %v2441 = vadd.f32 %v2237, %v2440
      %2442 = vmatprep.mubr.bf16.mxu0 %v2137
      %2443 = vmatmul.mubr.bf16.gmra.mrb[0].mxu0 %v2136
      %v2444 = vpop.f32.mrb[0].mxu0
      %v2445 = vadd.f32 %v2233, %v2444
      %v2446 = vpop.f32.mrb[0].mxu0
      %v2447 = vadd.f32 %v2237, %v2446
      %v2448 = vpop.f32.mrb[0].mxu0
      %v2449 = vadd.f32 %v2233, %v2448
      %v2450 = vpop.f32.mrb[0].mxu0
      %v2451 = vadd.f32 %v2237, %v2450
      %2452 = vmatprep.mubr.bf16.mxu0 %v2142
      %2453 = vmatmul.mubr.bf16.gmra.mrb[0].mxu0 %v2141
      %v2454 = vpop.f32.mrb[0].mxu0
      %v2455 = vadd.f32 %v2233, %v2454
      %v2456 = vpop.f32.mrb[0].mxu0
      %v2457 = vadd.f32 %v2237, %v2456
      %v2458 = vpop.f32.mrb[0].mxu0
      %v2459 = vadd.f32 %v2233, %v2458
      %v2460 = vpop.f32.mrb[0].mxu0
      %v2461 = vadd.f32 %v2237, %v2460
      %2462 = vmatprep.mubr.bf16.mxu0 %v2147
      %2463 = vmatmul.mubr.bf16.gmra.mrb[0].mxu0 %v2146
      %v2464 = vpop.f32.mrb[0].mxu0
      %v2465 = vadd.f32 %v2233, %v2464
      %v2466 = vpop.f32.mrb[0].mxu0
      %v2467 = vadd.f32 %v2237, %v2466
      %v2468 = vpop.f32.mrb[0].mxu0
      %v2469 = vadd.f32 %v2233, %v2468
      %v2470 = vpop.f32.mrb[0].mxu0
      %v2471 = vadd.f32 %v2237, %v2470
      %2472 = vmatprep.mubr.bf16.mxu0 %v2152
      %2473 = vmatmul.mubr.bf16.gmra.mrb[0].mxu0 %v2151
      %v2474 = vpop.f32.mrb[0].mxu0
      %v2475 = vadd.f32 %v2233, %v2474
      %v2476 = vpop.f32.mrb[0].mxu0
      %v2477 = vadd.f32 %v2237, %v2476
      %v2478 = vpop.f32.mrb[0].mxu0
      %v2479 = vadd.f32 %v2233, %v2478
      %v2480 = vpop.f32.mrb[0].mxu0
      %v2481 = vadd.f32 %v2237, %v2480
      %2482 = vmatprep.mubr.bf16.mxu0 %v2157
      %2483 = vmatmul.mubr.bf16.gmra.mrb[0].mxu0 %v2156
      %v2484 = vpop.f32.mrb[0].mxu0
      %v2485 = vadd.f32 %v2233, %v2484
      %v2486 = vpop.f32.mrb[0].mxu0
      %v2487 = vadd.f32 %v2237, %v2486
      %v2488 = vpop.f32.mrb[0].mxu0
      %v2489 = vadd.f32 %v2233, %v2488
      %v2490 = vpop.f32.mrb[0].mxu0
      %v2491 = vadd.f32 %v2237, %v2490
      %2492 = vmatprep.mubr.bf16.mxu0 %v2162
      %2493 = vmatmul.mubr.bf16.gmra.mrb[0].mxu0 %v2161
      %v2494 = vpop.f32.mrb[0].mxu0
      %v2495 = vadd.f32 %v2233, %v2494
      %v2496 = vpop.f32.mrb[0].mxu0
      %v2497 = vadd.f32 %v2237, %v2496
      %v2498 = vpop.f32.mrb[0].mxu0
      %v2499 = vadd.f32 %v2233, %v2498
      %v2500 = vpop.f32.mrb[0].mxu0
      %v2501 = vadd.f32 %v2237, %v2500
      %2502 = vmatprep.mubr.bf16.mxu0 %v2167
      %2503 = vmatmul.mubr.bf16.gmra.mrb[0].mxu0 %v2166
      %v2504 = vpop.f32.mrb[0].mxu0
      %v2505 = vadd.f32 %v2233, %v2504
      %v2506 = vpop.f32.mrb[0].mxu0
      %v2507 = vadd.f32 %v2237, %v2506
      %v2508 = vpop.f32.mrb[0].mxu0
      %v2509 = vadd.f32 %v2233, %v2508
      %v2510 = vpop.f32.mrb[0].mxu0
      %v2511 = vadd.f32 %v2237, %v2510
      %2512 = vmatprep.mubr.bf16.mxu0 %v2172
      %2513 = vmatmul.mubr.bf16.gmra.mrb[0].mxu0 %v2171
      %v2514 = vpop.f32.mrb[0].mxu0
      %v2515 = vadd.f32 %v2233, %v2514
      %v2516 = vpop.f32.mrb[0].mxu0
      %v2517 = vadd.f32 %v2237, %v2516
      %v2518 = vpop.f32.mrb[0].mxu0
      %v2519 = vadd.f32 %v2233, %v2518
      %v2520 = vpop.f32.mrb[0].mxu0
      %v2521 = vadd.f32 %v2237, %v2520
      %2522 = vmatprep.mubr.bf16.mxu0 %v2177
      %2523 = vmatmul.mubr.bf16.gmra.mrb[0].mxu0 %v2176
      %v2524 = vpop.f32.mrb[0].mxu0
      %v2525 = vadd.f32 %v2233, %v2524
      %v2526 = vpop.f32.mrb[0].mxu0
      %v2527 = vadd.f32 %v2237, %v2526
      %v2528 = vpop.f32.mrb[0].mxu0
      %v2529 = vadd.f32 %v2233, %v2528
      %v2530 = vpop.f32.mrb[0].mxu0
      %v2531 = vadd.f32 %v2237, %v2530
      %2532 = vmatprep.mubr.bf16.mxu0 %v2182
      %2533 = vmatmul.mubr.bf16.gmra.mrb[0].mxu0 %v2181
      %v2534 = vpop.f32.mrb[0].mxu0
      %v2535 = vadd.f32 %v2233, %v2534
      %v2536 = vpop.f32.mrb[0].mxu0
      %v2537 = vadd.f32 %v2237, %v2536
      %v2538 = vpop.f32.mrb[0].mxu0
      %v2539 = vadd.f32 %v2233, %v2538
      %v2540 = vpop.f32.mrb[0].mxu0
      %v2541 = vadd.f32 %v2237, %v2540
      %2542 = vmatprep.mubr.bf16.mxu0 %v2187
      %2543 = vmatmul.mubr.bf16.gmra.mrb[0].mxu0 %v2186
      %v2544 = vpop.f32.mrb[0].mxu0
      %v2545 = vadd.f32 %v2233, %v2544
      %v2546 = vpop.f32.mrb[0].mxu0
      %v2547 = vadd.f32 %v2237, %v2546
      %v2548 = vpop.f32.mrb[0].mxu0
      %v2549 = vadd.f32 %v2233, %v2548
      %v2550 = vpop.f32.mrb[0].mxu0
      %v2551 = vadd.f32 %v2237, %v2550
      %2552 = vmatprep.mubr.bf16.mxu0 %v2192
      %2553 = vmatmul.mubr.bf16.gmra.mrb[0].mxu0 %v2191
      %v2554 = vpop.f32.mrb[0].mxu0
      %v2555 = vadd.f32 %v2233, %v2554
      %v2556 = vpop.f32.mrb[0].mxu0
      %v2557 = vadd.f32 %v2237, %v2556
      %v2558 = vpop.f32.mrb[0].mxu0
      %v2559 = vpop.f32.mrb[0].mxu0
      %2560 = vdwg.mxu0
      %v2561 = vmax.f32 %v2435, 0.0
      %v2562 = vmax.f32 %v2437, 0.0
      %v2563 = vmax.f32 %v2439, 0.0
      %v2564 = vmax.f32 %v2441, 0.0
      %v2565 = vmax.f32 %v2445, 0.0
      %v2566 = vmax.f32 %v2447, 0.0
      %v2567 = vmax.f32 %v2449, 0.0
      %v2568 = vmax.f32 %v2451, 0.0
      %v2569 = vmax.f32 %v2455, 0.0
      %v2570 = vmax.f32 %v2457, 0.0
      %v2571 = vmax.f32 %v2459, 0.0
      %v2572 = vmax.f32 %v2461, 0.0
      %v2573 = vmax.f32 %v2465, 0.0
      %v2574 = vmax.f32 %v2467, 0.0
      %v2575 = vmax.f32 %v2469, 0.0
      %v2576 = vmax.f32 %v2471, 0.0
      %v2577 = vmax.f32 %v2475, 0.0
      %v2578 = vmax.f32 %v2477, 0.0
      %v2579 = vmax.f32 %v2479, 0.0
      %v2580 = vmax.f32 %v2481, 0.0
      %v2581 = vmax.f32 %v2485, 0.0
      %v2582 = vmax.f32 %v2487, 0.0
      %v2583 = vmax.f32 %v2489, 0.0
      %v2584 = vmax.f32 %v2491, 0.0
      %v2585 = vmax.f32 %v2495, 0.0
      %v2586 = vmax.f32 %v2497, 0.0
      %v2587 = vmax.f32 %v2499, 0.0
      %v2588 = vmax.f32 %v2501, 0.0
      %v2589 = vmax.f32 %v2505, 0.0
      %v2590 = vmax.f32 %v2507, 0.0
      %v2591 = vmax.f32 %v2509, 0.0
      %v2592 = vmax.f32 %v2511, 0.0
      %v2593 = vmax.f32 %v2515, 0.0
      %v2594 = vmax.f32 %v2517, 0.0
      %v2595 = vmax.f32 %v2519, 0.0
      %v2596 = vmax.f32 %v2521, 0.0
      %v2597 = vmax.f32 %v2525, 0.0
      %v2598 = vmax.f32 %v2527, 0.0
      %v2599 = vmax.f32 %v2529, 0.0
      %v2600 = vmax.f32 %v2531, 0.0
      %v2601 = vmax.f32 %v2535, 0.0
      %v2602 = vmax.f32 %v2537, 0.0
      %v2603 = vmax.f32 %v2539, 0.0
      %v2604 = vmax.f32 %v2541, 0.0
      %v2605 = vmax.f32 %v2545, 0.0
      %v2606 = vmax.f32 %v2547, 0.0
      %v2607 = vmax.f32 %v2549, 0.0
      %v2608 = vmax.f32 %v2551, 0.0
      %v2609 = vmax.f32 %v2555, 0.0
      %v2610 = vmax.f32 %v2557, 0.0
      %v2611 = vadd.f32 %v2561, 0.0
      %v2612 = vadd.f32 %v2563, 0.0
      %v2613 = vadd.f32 %v2565, 0.0
      %v2614 = vadd.f32 %v2567, 0.0
      %v2615 = vadd.f32 %v2569, 0.0
      %v2616 = vadd.f32 %v2571, 0.0
      %v2617 = vadd.f32 %v2573, 0.0
      %v2618 = vadd.f32 %v2575, 0.0
      %v2619 = vadd.f32 %v2577, 0.0
      %v2620 = vadd.f32 %v2579, 0.0
      %v2621 = vadd.f32 %v2581, 0.0
      %v2622 = vadd.f32 %v2583, 0.0
      %v2623 = vadd.f32 %v2585, 0.0
      %v2624 = vadd.f32 %v2587, 0.0
      %v2625 = vadd.f32 %v2589, 0.0
      %v2626 = vadd.f32 %v2591, 0.0
      %v2627 = vadd.f32 %v2593, 0.0
      %v2628 = vadd.f32 %v2595, 0.0
      %v2629 = vadd.f32 %v2597, 0.0
      %v2630 = vadd.f32 %v2599, 0.0
      %v2631 = vadd.f32 %v2601, 0.0
      %v2632 = vadd.f32 %v2603, 0.0
      %v2633 = vadd.f32 %v2605, 0.0
      %v2634 = vadd.f32 %v2607, 0.0
      %v2635 = vadd.f32 %v2609, 0.0
      %v2636 = vadd.f32 %v2611, %v2562
      %v2637 = vadd.f32 %v2612, %v2564
      %v2638 = vadd.f32 %v2613, %v2566
      %v2639 = vadd.f32 %v2614, %v2568
      %v2640 = vadd.f32 %v2615, %v2570
      %v2641 = vadd.f32 %v2616, %v2572
      %v2642 = vadd.f32 %v2617, %v2574
      %v2643 = vadd.f32 %v2618, %v2576
      %v2644 = vadd.f32 %v2619, %v2578
      %v2645 = vadd.f32 %v2620, %v2580
      %v2646 = vadd.f32 %v2621, %v2582
      %v2647 = vadd.f32 %v2622, %v2584
      %v2648 = vadd.f32 %v2623, %v2586
      %v2649 = vadd.f32 %v2624, %v2588
      %v2650 = vadd.f32 %v2625, %v2590
      %v2651 = vadd.f32 %v2626, %v2592
      %v2652 = vadd.f32 %v2627, %v2594
      %v2653 = vadd.f32 %v2628, %v2596
      %v2654 = vadd.f32 %v2629, %v2598
      %v2655 = vadd.f32 %v2630, %v2600
      %v2656 = vadd.f32 %v2631, %v2602
      %v2657 = vadd.f32 %v2632, %v2604
      %v2658 = vadd.f32 %v2633, %v2606
      %v2659 = vadd.f32 %v2634, %v2608
      %v2660 = vadd.f32 %v2635, %v2610
      %2661 = vmatprep.subr.bf16.mxu0 %v2337
      %2662 = vmatpush1.bf16.msra.mxu0 %v2336
      %2663 = vmatprep.subr.bf16.mxu0 %v2339
      %2664 = vmatpush1.bf16.msra.mxu0 %v2338
      %2665 = vmatprep.subr.bf16.mxu0 %v2341
      %2666 = vmatpush1.bf16.msra.mxu0 %v2340
      %2667 = vmatprep.subr.bf16.mxu0 %v2343
      %2668 = vmatpush1.bf16.msra.mxu0 %v2342
      %2669 = vmatprep.subr.bf16.mxu0 %v2345
      %2670 = vmatpush1.bf16.msra.mxu0 %v2344
      %2671 = vmatprep.subr.bf16.mxu0 %v2347
      %2672 = vmatpush1.bf16.msra.mxu0 %v2346
      %2673 = vmatprep.subr.bf16.mxu0 %v2349
      %2674 = vmatpush1.bf16.msra.mxu0 %v2348
      %2675 = vmatprep.subr.bf16.mxu0 %v2351
      %2676 = vmatpush1.bf16.msra.mxu0 %v2350
      %2677 = vmatprep.subr.bf16.mxu0 %v2353
      %2678 = vmatpush1.bf16.msra.mxu0 %v2352
      %2679 = vmatprep.subr.bf16.mxu0 %v2355
      %2680 = vmatpush1.bf16.msra.mxu0 %v2354
      %2681 = vmatprep.subr.bf16.mxu0 %v2357
      %2682 = vmatpush1.bf16.msra.mxu0 %v2356
      %2683 = vmatprep.subr.bf16.mxu0 %v2359
      %2684 = vmatpush1.bf16.msra.mxu0 %v2358
      %2685 = vmatprep.subr.bf16.mxu0 %v2361
      %2686 = vmatpush1.bf16.msra.mxu0 %v2360
      %2687 = vmatprep.subr.bf16.mxu0 %v2363
      %2688 = vmatpush1.bf16.msra.mxu0 %v2362
      %2689 = vmatprep.subr.bf16.mxu0 %v2365
      %2690 = vmatpush1.bf16.msra.mxu0 %v2364
      %2691 = vmatprep.subr.bf16.mxu0 %v2367
      %2692 = vmatpush1.bf16.msra.mxu0 %v2366
      %2693 = vmatprep.mubr.bf16.mxu0 %v2133
      %2694 = vmatmul.mubr.bf16.gmra.mrb[0].mxu0 %v2132
      %v2695 = vpop.f32.mrb[0].mxu0
      %v2696 = vadd.f32 %v2233, %v2695
      %v2697 = vpop.f32.mrb[0].mxu0
      %v2698 = vadd.f32 %v2237, %v2697
      %v2699 = vpop.f32.mrb[0].mxu0
      %v2700 = vadd.f32 %v2233, %v2699
      %v2701 = vpop.f32.mrb[0].mxu0
      %v2702 = vadd.f32 %v2237, %v2701
      %2703 = vmatprep.mubr.bf16.mxu0 %v2138
      %2704 = vmatmul.mubr.bf16.gmra.mrb[0].mxu0 %v2137
      %v2705 = vpop.f32.mrb[0].mxu0
      %v2706 = vadd.f32 %v2233, %v2705
      %v2707 = vpop.f32.mrb[0].mxu0
      %v2708 = vadd.f32 %v2237, %v2707
      %v2709 = vpop.f32.mrb[0].mxu0
      %v2710 = vadd.f32 %v2233, %v2709
      %v2711 = vpop.f32.mrb[0].mxu0
      %v2712 = vadd.f32 %v2237, %v2711
      %2713 = vmatprep.mubr.bf16.mxu0 %v2143
      %2714 = vmatmul.mubr.bf16.gmra.mrb[0].mxu0 %v2142
      %v2715 = vpop.f32.mrb[0].mxu0
      %v2716 = vadd.f32 %v2233, %v2715
      %v2717 = vpop.f32.mrb[0].mxu0
      %v2718 = vadd.f32 %v2237, %v2717
      %v2719 = vpop.f32.mrb[0].mxu0
      %v2720 = vadd.f32 %v2233, %v2719
      %v2721 = vpop.f32.mrb[0].mxu0
      %v2722 = vadd.f32 %v2237, %v2721
      %2723 = vmatprep.mubr.bf16.mxu0 %v2148
      %2724 = vmatmul.mubr.bf16.gmra.mrb[0].mxu0 %v2147
      %v2725 = vpop.f32.mrb[0].mxu0
      %v2726 = vadd.f32 %v2233, %v2725
      %v2727 = vpop.f32.mrb[0].mxu0
      %v2728 = vadd.f32 %v2237, %v2727
      %v2729 = vpop.f32.mrb[0].mxu0
      %v2730 = vadd.f32 %v2233, %v2729
      %v2731 = vpop.f32.mrb[0].mxu0
      %v2732 = vadd.f32 %v2237, %v2731
      %2733 = vmatprep.mubr.bf16.mxu0 %v2153
      %2734 = vmatmul.mubr.bf16.gmra.mrb[0].mxu0 %v2152
      %v2735 = vpop.f32.mrb[0].mxu0
      %v2736 = vadd.f32 %v2233, %v2735
      %v2737 = vpop.f32.mrb[0].mxu0
      %v2738 = vadd.f32 %v2237, %v2737
      %v2739 = vpop.f32.mrb[0].mxu0
      %v2740 = vadd.f32 %v2233, %v2739
      %v2741 = vpop.f32.mrb[0].mxu0
      %v2742 = vadd.f32 %v2237, %v2741
      %2743 = vmatprep.mubr.bf16.mxu0 %v2158
      %2744 = vmatmul.mubr.bf16.gmra.mrb[0].mxu0 %v2157
      %v2745 = vpop.f32.mrb[0].mxu0
      %v2746 = vadd.f32 %v2233, %v2745
      %v2747 = vpop.f32.mrb[0].mxu0
      %v2748 = vadd.f32 %v2237, %v2747
      %v2749 = vpop.f32.mrb[0].mxu0
      %v2750 = vadd.f32 %v2233, %v2749
      %v2751 = vpop.f32.mrb[0].mxu0
      %v2752 = vadd.f32 %v2237, %v2751
      %2753 = vmatprep.mubr.bf16.mxu0 %v2163
      %2754 = vmatmul.mubr.bf16.gmra.mrb[0].mxu0 %v2162
      %v2755 = vpop.f32.mrb[0].mxu0
      %v2756 = vadd.f32 %v2233, %v2755
      %v2757 = vpop.f32.mrb[0].mxu0
      %v2758 = vadd.f32 %v2237, %v2757
      %v2759 = vpop.f32.mrb[0].mxu0
      %v2760 = vadd.f32 %v2233, %v2759
      %v2761 = vpop.f32.mrb[0].mxu0
      %v2762 = vadd.f32 %v2237, %v2761
      %2763 = vmatprep.mubr.bf16.mxu0 %v2168
      %2764 = vmatmul.mubr.bf16.gmra.mrb[0].mxu0 %v2167
      %v2765 = vpop.f32.mrb[0].mxu0
      %v2766 = vadd.f32 %v2233, %v2765
      %v2767 = vpop.f32.mrb[0].mxu0
      %v2768 = vadd.f32 %v2237, %v2767
      %v2769 = vpop.f32.mrb[0].mxu0
      %v2770 = vadd.f32 %v2233, %v2769
      %v2771 = vpop.f32.mrb[0].mxu0
      %v2772 = vadd.f32 %v2237, %v2771
      %2773 = vmatprep.mubr.bf16.mxu0 %v2173
      %2774 = vmatmul.mubr.bf16.gmra.mrb[0].mxu0 %v2172
      %v2775 = vpop.f32.mrb[0].mxu0
      %v2776 = vadd.f32 %v2233, %v2775
      %v2777 = vpop.f32.mrb[0].mxu0
      %v2778 = vadd.f32 %v2237, %v2777
      %v2779 = vpop.f32.mrb[0].mxu0
      %v2780 = vadd.f32 %v2233, %v2779
      %v2781 = vpop.f32.mrb[0].mxu0
      %v2782 = vadd.f32 %v2237, %v2781
      %2783 = vmatprep.mubr.bf16.mxu0 %v2178
      %2784 = vmatmul.mubr.bf16.gmra.mrb[0].mxu0 %v2177
      %v2785 = vpop.f32.mrb[0].mxu0
      %v2786 = vadd.f32 %v2233, %v2785
      %v2787 = vpop.f32.mrb[0].mxu0
      %v2788 = vadd.f32 %v2237, %v2787
      %v2789 = vpop.f32.mrb[0].mxu0
      %v2790 = vadd.f32 %v2233, %v2789
      %v2791 = vpop.f32.mrb[0].mxu0
      %v2792 = vadd.f32 %v2237, %v2791
      %2793 = vmatprep.mubr.bf16.mxu0 %v2183
      %2794 = vmatmul.mubr.bf16.gmra.mrb[0].mxu0 %v2182
      %v2795 = vpop.f32.mrb[0].mxu0
      %v2796 = vadd.f32 %v2233, %v2795
      %v2797 = vpop.f32.mrb[0].mxu0
      %v2798 = vadd.f32 %v2237, %v2797
      %v2799 = vpop.f32.mrb[0].mxu0
      %v2800 = vadd.f32 %v2233, %v2799
      %v2801 = vpop.f32.mrb[0].mxu0
      %v2802 = vadd.f32 %v2237, %v2801
      %2803 = vmatprep.mubr.bf16.mxu0 %v2188
      %2804 = vmatmul.mubr.bf16.gmra.mrb[0].mxu0 %v2187
      %v2805 = vpop.f32.mrb[0].mxu0
      %v2806 = vadd.f32 %v2233, %v2805
      %v2807 = vpop.f32.mrb[0].mxu0
      %v2808 = vadd.f32 %v2237, %v2807
      %v2809 = vpop.f32.mrb[0].mxu0
      %v2810 = vadd.f32 %v2233, %v2809
      %v2811 = vpop.f32.mrb[0].mxu0
      %v2812 = vadd.f32 %v2237, %v2811
      %2813 = vmatprep.mubr.bf16.mxu0 %v2193
      %2814 = vmatmul.mubr.bf16.gmra.mrb[0].mxu0 %v2192
      %v2815 = vpop.f32.mrb[0].mxu0
      %v2816 = vadd.f32 %v2233, %v2815
      %v2817 = vpop.f32.mrb[0].mxu0
      %v2818 = vadd.f32 %v2237, %v2817
      %v2819 = vpop.f32.mrb[0].mxu0
      %v2820 = vpop.f32.mrb[0].mxu0
      %2821 = vdwg.mxu0
      %v2822 = vmax.f32 %v2696, 0.0
      %v2823 = vmax.f32 %v2698, 0.0
      %v2824 = vmax.f32 %v2700, 0.0
      %v2825 = vmax.f32 %v2702, 0.0
      %v2826 = vmax.f32 %v2706, 0.0
      %v2827 = vmax.f32 %v2708, 0.0
      %v2828 = vmax.f32 %v2710, 0.0
      %v2829 = vmax.f32 %v2712, 0.0
      %v2830 = vmax.f32 %v2716, 0.0
      %v2831 = vmax.f32 %v2718, 0.0
      %v2832 = vmax.f32 %v2720, 0.0
      %v2833 = vmax.f32 %v2722, 0.0
      %v2834 = vmax.f32 %v2726, 0.0
      %v2835 = vmax.f32 %v2728, 0.0
      %v2836 = vmax.f32 %v2730, 0.0
      %v2837 = vmax.f32 %v2732, 0.0
      %v2838 = vmax.f32 %v2736, 0.0
      %v2839 = vmax.f32 %v2738, 0.0
      %v2840 = vmax.f32 %v2740, 0.0
      %v2841 = vmax.f32 %v2742, 0.0
      %v2842 = vmax.f32 %v2746, 0.0
      %v2843 = vmax.f32 %v2748, 0.0
      %v2844 = vmax.f32 %v2750, 0.0
      %v2845 = vmax.f32 %v2752, 0.0
      %v2846 = vmax.f32 %v2756, 0.0
      %v2847 = vmax.f32 %v2758, 0.0
      %v2848 = vmax.f32 %v2760, 0.0
      %v2849 = vmax.f32 %v2762, 0.0
      %v2850 = vmax.f32 %v2766, 0.0
      %v2851 = vmax.f32 %v2768, 0.0
      %v2852 = vmax.f32 %v2770, 0.0
      %v2853 = vmax.f32 %v2772, 0.0
      %v2854 = vmax.f32 %v2776, 0.0
      %v2855 = vmax.f32 %v2778, 0.0
      %v2856 = vmax.f32 %v2780, 0.0
      %v2857 = vmax.f32 %v2782, 0.0
      %v2858 = vmax.f32 %v2786, 0.0
      %v2859 = vmax.f32 %v2788, 0.0
      %v2860 = vmax.f32 %v2790, 0.0
      %v2861 = vmax.f32 %v2792, 0.0
      %v2862 = vmax.f32 %v2796, 0.0
      %v2863 = vmax.f32 %v2798, 0.0
      %v2864 = vmax.f32 %v2800, 0.0
      %v2865 = vmax.f32 %v2802, 0.0
      %v2866 = vmax.f32 %v2806, 0.0
      %v2867 = vmax.f32 %v2808, 0.0
      %v2868 = vmax.f32 %v2810, 0.0
      %v2869 = vmax.f32 %v2812, 0.0
      %v2870 = vmax.f32 %v2816, 0.0
      %v2871 = vmax.f32 %v2818, 0.0
      %v2872 = vadd.f32 %v2636, %v2822
      %v2873 = vadd.f32 %v2637, %v2824
      %v2874 = vadd.f32 %v2638, %v2826
      %v2875 = vadd.f32 %v2639, %v2828
      %v2876 = vadd.f32 %v2640, %v2830
      %v2877 = vadd.f32 %v2641, %v2832
      %v2878 = vadd.f32 %v2642, %v2834
      %v2879 = vadd.f32 %v2643, %v2836
      %v2880 = vadd.f32 %v2644, %v2838
      %v2881 = vadd.f32 %v2645, %v2840
      %v2882 = vadd.f32 %v2646, %v2842
      %v2883 = vadd.f32 %v2647, %v2844
      %v2884 = vadd.f32 %v2648, %v2846
      %v2885 = vadd.f32 %v2649, %v2848
      %v2886 = vadd.f32 %v2650, %v2850
      %v2887 = vadd.f32 %v2651, %v2852
      %v2888 = vadd.f32 %v2652, %v2854
      %v2889 = vadd.f32 %v2653, %v2856
      %v2890 = vadd.f32 %v2654, %v2858
      %v2891 = vadd.f32 %v2655, %v2860
      %v2892 = vadd.f32 %v2656, %v2862
      %v2893 = vadd.f32 %v2657, %v2864
      %v2894 = vadd.f32 %v2658, %v2866
      %v2895 = vadd.f32 %v2659, %v2868
      %v2896 = vadd.f32 %v2660, %v2870
      %v2897 = vadd.f32 %v2872, %v2823
      %v2898 = vadd.f32 %v2873, %v2825
      %v2899 = vadd.f32 %v2874, %v2827
      %v2900 = vadd.f32 %v2875, %v2829
      %v2901 = vadd.f32 %v2876, %v2831
      %v2902 = vadd.f32 %v2877, %v2833
      %v2903 = vadd.f32 %v2878, %v2835
      %v2904 = vadd.f32 %v2879, %v2837
      %v2905 = vadd.f32 %v2880, %v2839
      %v2906 = vadd.f32 %v2881, %v2841
      %v2907 = vadd.f32 %v2882, %v2843
      %v2908 = vadd.f32 %v2883, %v2845
      %v2909 = vadd.f32 %v2884, %v2847
      %v2910 = vadd.f32 %v2885, %v2849
      %v2911 = vadd.f32 %v2886, %v2851
      %v2912 = vadd.f32 %v2887, %v2853
      %v2913 = vadd.f32 %v2888, %v2855
      %v2914 = vadd.f32 %v2889, %v2857
      %v2915 = vadd.f32 %v2890, %v2859
      %v2916 = vadd.f32 %v2891, %v2861
      %v2917 = vadd.f32 %v2892, %v2863
      %v2918 = vadd.f32 %v2893, %v2865
      %v2919 = vadd.f32 %v2894, %v2867
      %v2920 = vadd.f32 %v2895, %v2869
      %v2921 = vadd.f32 %v2896, %v2871
      %2922 = vmatprep.subr.bf16.mxu0 %v2337
      %2923 = vmatpush1.bf16.msra.mxu0 %v2336
      %2924 = vmatprep.subr.bf16.mxu0 %v2339
      %2925 = vmatpush1.bf16.msra.mxu0 %v2338
      %2926 = vmatprep.subr.bf16.mxu0 %v2341
      %2927 = vmatpush1.bf16.msra.mxu0 %v2340
      %2928 = vmatprep.subr.bf16.mxu0 %v2343
      %2929 = vmatpush1.bf16.msra.mxu0 %v2342
      %2930 = vmatprep.subr.bf16.mxu0 %v2345
      %2931 = vmatpush1.bf16.msra.mxu0 %v2344
      %2932 = vmatprep.subr.bf16.mxu0 %v2347
      %2933 = vmatpush1.bf16.msra.mxu0 %v2346
      %2934 = vmatprep.subr.bf16.mxu0 %v2349
      %2935 = vmatpush1.bf16.msra.mxu0 %v2348
      %2936 = vmatprep.subr.bf16.mxu0 %v2351
      %2937 = vmatpush1.bf16.msra.mxu0 %v2350
      %2938 = vmatprep.subr.bf16.mxu0 %v2353
      %2939 = vmatpush1.bf16.msra.mxu0 %v2352
      %2940 = vmatprep.subr.bf16.mxu0 %v2355
      %2941 = vmatpush1.bf16.msra.mxu0 %v2354
      %2942 = vmatprep.subr.bf16.mxu0 %v2357
      %2943 = vmatpush1.bf16.msra.mxu0 %v2356
      %2944 = vmatprep.subr.bf16.mxu0 %v2359
      %2945 = vmatpush1.bf16.msra.mxu0 %v2358
      %2946 = vmatprep.subr.bf16.mxu0 %v2361
      %2947 = vmatpush1.bf16.msra.mxu0 %v2360
      %2948 = vmatprep.subr.bf16.mxu0 %v2363
      %2949 = vmatpush1.bf16.msra.mxu0 %v2362
      %2950 = vmatprep.subr.bf16.mxu0 %v2365
      %2951 = vmatpush1.bf16.msra.mxu0 %v2364
      %2952 = vmatprep.subr.bf16.mxu0 %v2367
      %2953 = vmatpush1.bf16.msra.mxu0 %v2366
      %2954 = vmatprep.mubr.bf16.mxu0 %v2134
      %2955 = vmatmul.mubr.bf16.gmra.mrb[0].mxu0 %v2133
      %v2956 = vpop.f32.mrb[0].mxu0
      %v2957 = vadd.f32 %v2233, %v2956
      %v2958 = vpop.f32.mrb[0].mxu0
      %v2959 = vadd.f32 %v2237, %v2958
      %v2960 = vpop.f32.mrb[0].mxu0
      %v2961 = vadd.f32 %v2233, %v2960
      %v2962 = vpop.f32.mrb[0].mxu0
      %v2963 = vadd.f32 %v2237, %v2962
      %2964 = vmatprep.mubr.bf16.mxu0 %v2139
      %2965 = vmatmul.mubr.bf16.gmra.mrb[0].mxu0 %v2138
      %v2966 = vpop.f32.mrb[0].mxu0
      %v2967 = vadd.f32 %v2233, %v2966
      %v2968 = vpop.f32.mrb[0].mxu0
      %v2969 = vadd.f32 %v2237, %v2968
      %v2970 = vpop.f32.mrb[0].mxu0
      %v2971 = vadd.f32 %v2233, %v2970
      %v2972 = vpop.f32.mrb[0].mxu0
      %v2973 = vadd.f32 %v2237, %v2972
      %2974 = vmatprep.mubr.bf16.mxu0 %v2144
      %2975 = vmatmul.mubr.bf16.gmra.mrb[0].mxu0 %v2143
      %v2976 = vpop.f32.mrb[0].mxu0
      %v2977 = vadd.f32 %v2233, %v2976
      %v2978 = vpop.f32.mrb[0].mxu0
      %v2979 = vadd.f32 %v2237, %v2978
      %v2980 = vpop.f32.mrb[0].mxu0
      %v2981 = vadd.f32 %v2233, %v2980
      %v2982 = vpop.f32.mrb[0].mxu0
      %v2983 = vadd.f32 %v2237, %v2982
      %2984 = vmatprep.mubr.bf16.mxu0 %v2149
      %2985 = vmatmul.mubr.bf16.gmra.mrb[0].mxu0 %v2148
      %v2986 = vpop.f32.mrb[0].mxu0
      %v2987 = vadd.f32 %v2233, %v2986
      %v2988 = vpop.f32.mrb[0].mxu0
      %v2989 = vadd.f32 %v2237, %v2988
      %v2990 = vpop.f32.mrb[0].mxu0
      %v2991 = vadd.f32 %v2233, %v2990
      %v2992 = vpop.f32.mrb[0].mxu0
      %v2993 = vadd.f32 %v2237, %v2992
      %2994 = vmatprep.mubr.bf16.mxu0 %v2154
      %2995 = vmatmul.mubr.bf16.gmra.mrb[0].mxu0 %v2153
      %v2996 = vpop.f32.mrb[0].mxu0
      %v2997 = vadd.f32 %v2233, %v2996
      %v2998 = vpop.f32.mrb[0].mxu0
      %v2999 = vadd.f32 %v2237, %v2998
      %v3000 = vpop.f32.mrb[0].mxu0
      %v3001 = vadd.f32 %v2233, %v3000
      %v3002 = vpop.f32.mrb[0].mxu0
      %v3003 = vadd.f32 %v2237, %v3002
      %3004 = vmatprep.mubr.bf16.mxu0 %v2159
      %3005 = vmatmul.mubr.bf16.gmra.mrb[0].mxu0 %v2158
      %v3006 = vpop.f32.mrb[0].mxu0
      %v3007 = vadd.f32 %v2233, %v3006
      %v3008 = vpop.f32.mrb[0].mxu0
      %v3009 = vadd.f32 %v2237, %v3008
      %v3010 = vpop.f32.mrb[0].mxu0
      %v3011 = vadd.f32 %v2233, %v3010
      %v3012 = vpop.f32.mrb[0].mxu0
      %v3013 = vadd.f32 %v2237, %v3012
      %3014 = vmatprep.mubr.bf16.mxu0 %v2164
      %3015 = vmatmul.mubr.bf16.gmra.mrb[0].mxu0 %v2163
      %v3016 = vpop.f32.mrb[0].mxu0
      %v3017 = vadd.f32 %v2233, %v3016
      %v3018 = vpop.f32.mrb[0].mxu0
      %v3019 = vadd.f32 %v2237, %v3018
      %v3020 = vpop.f32.mrb[0].mxu0
      %v3021 = vadd.f32 %v2233, %v3020
      %v3022 = vpop.f32.mrb[0].mxu0
      %v3023 = vadd.f32 %v2237, %v3022
      %3024 = vmatprep.mubr.bf16.mxu0 %v2169
      %3025 = vmatmul.mubr.bf16.gmra.mrb[0].mxu0 %v2168
      %v3026 = vpop.f32.mrb[0].mxu0
      %v3027 = vadd.f32 %v2233, %v3026
      %v3028 = vpop.f32.mrb[0].mxu0
      %v3029 = vadd.f32 %v2237, %v3028
      %v3030 = vpop.f32.mrb[0].mxu0
      %v3031 = vadd.f32 %v2233, %v3030
      %v3032 = vpop.f32.mrb[0].mxu0
      %v3033 = vadd.f32 %v2237, %v3032
      %3034 = vmatprep.mubr.bf16.mxu0 %v2174
      %3035 = vmatmul.mubr.bf16.gmra.mrb[0].mxu0 %v2173
      %v3036 = vpop.f32.mrb[0].mxu0
      %v3037 = vadd.f32 %v2233, %v3036
      %v3038 = vpop.f32.mrb[0].mxu0
      %v3039 = vadd.f32 %v2237, %v3038
      %v3040 = vpop.f32.mrb[0].mxu0
      %v3041 = vadd.f32 %v2233, %v3040
      %v3042 = vpop.f32.mrb[0].mxu0
      %v3043 = vadd.f32 %v2237, %v3042
      %3044 = vmatprep.mubr.bf16.mxu0 %v2179
      %3045 = vmatmul.mubr.bf16.gmra.mrb[0].mxu0 %v2178
      %v3046 = vpop.f32.mrb[0].mxu0
      %v3047 = vadd.f32 %v2233, %v3046
      %v3048 = vpop.f32.mrb[0].mxu0
      %v3049 = vadd.f32 %v2237, %v3048
      %v3050 = vpop.f32.mrb[0].mxu0
      %v3051 = vadd.f32 %v2233, %v3050
      %v3052 = vpop.f32.mrb[0].mxu0
      %v3053 = vadd.f32 %v2237, %v3052
      %3054 = vmatprep.mubr.bf16.mxu0 %v2184
      %3055 = vmatmul.mubr.bf16.gmra.mrb[0].mxu0 %v2183
      %v3056 = vpop.f32.mrb[0].mxu0
      %v3057 = vadd.f32 %v2233, %v3056
      %v3058 = vpop.f32.mrb[0].mxu0
      %v3059 = vadd.f32 %v2237, %v3058
      %v3060 = vpop.f32.mrb[0].mxu0
      %v3061 = vadd.f32 %v2233, %v3060
      %v3062 = vpop.f32.mrb[0].mxu0
      %v3063 = vadd.f32 %v2237, %v3062
      %3064 = vmatprep.mubr.bf16.mxu0 %v2189
      %3065 = vmatmul.mubr.bf16.gmra.mrb[0].mxu0 %v2188
      %v3066 = vpop.f32.mrb[0].mxu0
      %v3067 = vadd.f32 %v2233, %v3066
      %v3068 = vpop.f32.mrb[0].mxu0
      %v3069 = vadd.f32 %v2237, %v3068
      %v3070 = vpop.f32.mrb[0].mxu0
      %v3071 = vadd.f32 %v2233, %v3070
      %v3072 = vpop.f32.mrb[0].mxu0
      %v3073 = vadd.f32 %v2237, %v3072
      %3074 = vmatprep.mubr.bf16.mxu0 %v2194
      %3075 = vmatmul.mubr.bf16.gmra.mrb[0].mxu0 %v2193
      %v3076 = vpop.f32.mrb[0].mxu0
      %v3077 = vadd.f32 %v2233, %v3076
      %v3078 = vpop.f32.mrb[0].mxu0
      %v3079 = vadd.f32 %v2237, %v3078
      %v3080 = vpop.f32.mrb[0].mxu0
      %v3081 = vpop.f32.mrb[0].mxu0
      %3082 = vdwg.mxu0
      %v3083 = vmax.f32 %v2957, 0.0
      %v3084 = vmax.f32 %v2959, 0.0
      %v3085 = vmax.f32 %v2961, 0.0
      %v3086 = vmax.f32 %v2963, 0.0
      %v3087 = vmax.f32 %v2967, 0.0
      %v3088 = vmax.f32 %v2969, 0.0
      %v3089 = vmax.f32 %v2971, 0.0
      %v3090 = vmax.f32 %v2973, 0.0
      %v3091 = vmax.f32 %v2977, 0.0
      %v3092 = vmax.f32 %v2979, 0.0
      %v3093 = vmax.f32 %v2981, 0.0
      %v3094 = vmax.f32 %v2983, 0.0
      %v3095 = vmax.f32 %v2987, 0.0
      %v3096 = vmax.f32 %v2989, 0.0
      %v3097 = vmax.f32 %v2991, 0.0
      %v3098 = vmax.f32 %v2993, 0.0
      %v3099 = vmax.f32 %v2997, 0.0
      %v3100 = vmax.f32 %v2999, 0.0
      %v3101 = vmax.f32 %v3001, 0.0
      %v3102 = vmax.f32 %v3003, 0.0
      %v3103 = vmax.f32 %v3007, 0.0
      %v3104 = vmax.f32 %v3009, 0.0
      %v3105 = vmax.f32 %v3011, 0.0
      %v3106 = vmax.f32 %v3013, 0.0
      %v3107 = vmax.f32 %v3017, 0.0
      %v3108 = vmax.f32 %v3019, 0.0
      %v3109 = vmax.f32 %v3021, 0.0
      %v3110 = vmax.f32 %v3023, 0.0
      %v3111 = vmax.f32 %v3027, 0.0
      %v3112 = vmax.f32 %v3029, 0.0
      %v3113 = vmax.f32 %v3031, 0.0
      %v3114 = vmax.f32 %v3033, 0.0
      %v3115 = vmax.f32 %v3037, 0.0
      %v3116 = vmax.f32 %v3039, 0.0
      %v3117 = vmax.f32 %v3041, 0.0
      %v3118 = vmax.f32 %v3043, 0.0
      %v3119 = vmax.f32 %v3047, 0.0
      %v3120 = vmax.f32 %v3049, 0.0
      %v3121 = vmax.f32 %v3051, 0.0
      %v3122 = vmax.f32 %v3053, 0.0
      %v3123 = vmax.f32 %v3057, 0.0
      %v3124 = vmax.f32 %v3059, 0.0
      %v3125 = vmax.f32 %v3061, 0.0
      %v3126 = vmax.f32 %v3063, 0.0
      %v3127 = vmax.f32 %v3067, 0.0
      %v3128 = vmax.f32 %v3069, 0.0
      %v3129 = vmax.f32 %v3071, 0.0
      %v3130 = vmax.f32 %v3073, 0.0
      %v3131 = vmax.f32 %v3077, 0.0
      %v3132 = vmax.f32 %v3079, 0.0
      %v3133 = vadd.f32 %v2897, %v3083
      %v3134 = vadd.f32 %v2898, %v3085
      %v3135 = vadd.f32 %v2899, %v3087
      %v3136 = vadd.f32 %v2900, %v3089
      %v3137 = vadd.f32 %v2901, %v3091
      %v3138 = vadd.f32 %v2902, %v3093
      %v3139 = vadd.f32 %v2903, %v3095
      %v3140 = vadd.f32 %v2904, %v3097
      %v3141 = vadd.f32 %v2905, %v3099
      %v3142 = vadd.f32 %v2906, %v3101
      %v3143 = vadd.f32 %v2907, %v3103
      %v3144 = vadd.f32 %v2908, %v3105
      %v3145 = vadd.f32 %v2909, %v3107
      %v3146 = vadd.f32 %v2910, %v3109
      %v3147 = vadd.f32 %v2911, %v3111
      %v3148 = vadd.f32 %v2912, %v3113
      %v3149 = vadd.f32 %v2913, %v3115
      %v3150 = vadd.f32 %v2914, %v3117
      %v3151 = vadd.f32 %v2915, %v3119
      %v3152 = vadd.f32 %v2916, %v3121
      %v3153 = vadd.f32 %v2917, %v3123
      %v3154 = vadd.f32 %v2918, %v3125
      %v3155 = vadd.f32 %v2919, %v3127
      %v3156 = vadd.f32 %v2920, %v3129
      %v3157 = vadd.f32 %v2921, %v3131
      %v3158 = vadd.f32 %v3133, %v3084
      %v3159 = vadd.f32 %v3134, %v3086
      %v3160 = vadd.f32 %v3135, %v3088
      %v3161 = vadd.f32 %v3136, %v3090
      %v3162 = vadd.f32 %v3137, %v3092
      %v3163 = vadd.f32 %v3138, %v3094
      %v3164 = vadd.f32 %v3139, %v3096
      %v3165 = vadd.f32 %v3140, %v3098
      %v3166 = vadd.f32 %v3141, %v3100
      %v3167 = vadd.f32 %v3142, %v3102
      %v3168 = vadd.f32 %v3143, %v3104
      %v3169 = vadd.f32 %v3144, %v3106
      %v3170 = vadd.f32 %v3145, %v3108
      %v3171 = vadd.f32 %v3146, %v3110
      %v3172 = vadd.f32 %v3147, %v3112
      %v3173 = vadd.f32 %v3148, %v3114
      %v3174 = vadd.f32 %v3149, %v3116
      %v3175 = vadd.f32 %v3150, %v3118
      %v3176 = vadd.f32 %v3151, %v3120
      %v3177 = vadd.f32 %v3152, %v3122
      %v3178 = vadd.f32 %v3153, %v3124
      %v3179 = vadd.f32 %v3154, %v3126
      %v3180 = vadd.f32 %v3155, %v3128
      %v3181 = vadd.f32 %v3156, %v3130
      %v3182 = vadd.f32 %v3157, %v3132
      %3183 = vmatprep.subr.bf16.mxu0 %v2337
      %3184 = vmatpush1.bf16.msra.mxu0 %v2336
      %3185 = vmatprep.subr.bf16.mxu0 %v2339
      %3186 = vmatpush1.bf16.msra.mxu0 %v2338
      %3187 = vmatprep.subr.bf16.mxu0 %v2341
      %3188 = vmatpush1.bf16.msra.mxu0 %v2340
      %3189 = vmatprep.subr.bf16.mxu0 %v2343
      %3190 = vmatpush1.bf16.msra.mxu0 %v2342
      %3191 = vmatprep.subr.bf16.mxu0 %v2345
      %3192 = vmatpush1.bf16.msra.mxu0 %v2344
      %3193 = vmatprep.subr.bf16.mxu0 %v2347
      %3194 = vmatpush1.bf16.msra.mxu0 %v2346
      %3195 = vmatprep.subr.bf16.mxu0 %v2349
      %3196 = vmatpush1.bf16.msra.mxu0 %v2348
      %3197 = vmatprep.subr.bf16.mxu0 %v2351
      %3198 = vmatpush1.bf16.msra.mxu0 %v2350
      %3199 = vmatprep.subr.bf16.mxu0 %v2353
      %3200 = vmatpush1.bf16.msra.mxu0 %v2352
      %3201 = vmatprep.subr.bf16.mxu0 %v2355
      %3202 = vmatpush1.bf16.msra.mxu0 %v2354
      %3203 = vmatprep.subr.bf16.mxu0 %v2357
      %3204 = vmatpush1.bf16.msra.mxu0 %v2356
      %3205 = vmatprep.subr.bf16.mxu0 %v2359
      %3206 = vmatpush1.bf16.msra.mxu0 %v2358
      %3207 = vmatprep.subr.bf16.mxu0 %v2361
      %3208 = vmatpush1.bf16.msra.mxu0 %v2360
      %3209 = vmatprep.subr.bf16.mxu0 %v2363
      %3210 = vmatpush1.bf16.msra.mxu0 %v2362
      %3211 = vmatprep.subr.bf16.mxu0 %v2365
      %3212 = vmatpush1.bf16.msra.mxu0 %v2364
      %3213 = vmatprep.subr.bf16.mxu0 %v2367
      %3214 = vmatpush1.bf16.msra.mxu0 %v2366
      %3215 = vmatprep.mubr.bf16.mxu0 %v2135
      %3216 = vmatmul.mubr.bf16.gmra.mrb[0].mxu0 %v2134
      %v3217 = vpop.f32.mrb[0].mxu0
      %v3218 = vadd.f32 %v2233, %v3217
      %v3219 = vpop.f32.mrb[0].mxu0
      %v3220 = vadd.f32 %v2237, %v3219
      %v3221 = vpop.f32.mrb[0].mxu0
      %v3222 = vadd.f32 %v2233, %v3221
      %v3223 = vpop.f32.mrb[0].mxu0
      %v3224 = vadd.f32 %v2237, %v3223
      %3225 = vmatprep.mubr.bf16.mxu0 %v2140
      %3226 = vmatmul.mubr.bf16.gmra.mrb[0].mxu0 %v2139
      %v3227 = vpop.f32.mrb[0].mxu0
      %v3228 = vadd.f32 %v2233, %v3227
      %v3229 = vpop.f32.mrb[0].mxu0
      %v3230 = vadd.f32 %v2237, %v3229
      %v3231 = vpop.f32.mrb[0].mxu0
      %v3232 = vadd.f32 %v2233, %v3231
      %v3233 = vpop.f32.mrb[0].mxu0
      %v3234 = vadd.f32 %v2237, %v3233
      %3235 = vmatprep.mubr.bf16.mxu0 %v2145
      %3236 = vmatmul.mubr.bf16.gmra.mrb[0].mxu0 %v2144
      %v3237 = vpop.f32.mrb[0].mxu0
      %v3238 = vadd.f32 %v2233, %v3237
      %v3239 = vpop.f32.mrb[0].mxu0
      %v3240 = vadd.f32 %v2237, %v3239
      %v3241 = vpop.f32.mrb[0].mxu0
      %v3242 = vadd.f32 %v2233, %v3241
      %v3243 = vpop.f32.mrb[0].mxu0
      %v3244 = vadd.f32 %v2237, %v3243
      %3245 = vmatprep.mubr.bf16.mxu0 %v2150
      %3246 = vmatmul.mubr.bf16.gmra.mrb[0].mxu0 %v2149
      %v3247 = vpop.f32.mrb[0].mxu0
      %v3248 = vadd.f32 %v2233, %v3247
      %v3249 = vpop.f32.mrb[0].mxu0
      %v3250 = vadd.f32 %v2237, %v3249
      %v3251 = vpop.f32.mrb[0].mxu0
      %v3252 = vadd.f32 %v2233, %v3251
      %v3253 = vpop.f32.mrb[0].mxu0
      %v3254 = vadd.f32 %v2237, %v3253
      %3255 = vmatprep.mubr.bf16.mxu0 %v2155
      %3256 = vmatmul.mubr.bf16.gmra.mrb[0].mxu0 %v2154
      %v3257 = vpop.f32.mrb[0].mxu0
      %v3258 = vadd.f32 %v2233, %v3257
      %v3259 = vpop.f32.mrb[0].mxu0
      %v3260 = vadd.f32 %v2237, %v3259
      %v3261 = vpop.f32.mrb[0].mxu0
      %v3262 = vadd.f32 %v2233, %v3261
      %v3263 = vpop.f32.mrb[0].mxu0
      %v3264 = vadd.f32 %v2237, %v3263
      %3265 = vmatprep.mubr.bf16.mxu0 %v2160
      %3266 = vmatmul.mubr.bf16.gmra.mrb[0].mxu0 %v2159
      %v3267 = vpop.f32.mrb[0].mxu0
      %v3268 = vadd.f32 %v2233, %v3267
      %v3269 = vpop.f32.mrb[0].mxu0
      %v3270 = vadd.f32 %v2237, %v3269
      %v3271 = vpop.f32.mrb[0].mxu0
      %v3272 = vadd.f32 %v2233, %v3271
      %v3273 = vpop.f32.mrb[0].mxu0
      %v3274 = vadd.f32 %v2237, %v3273
      %3275 = vmatprep.mubr.bf16.mxu0 %v2165
      %3276 = vmatmul.mubr.bf16.gmra.mrb[0].mxu0 %v2164
      %v3277 = vpop.f32.mrb[0].mxu0
      %v3278 = vadd.f32 %v2233, %v3277
      %v3279 = vpop.f32.mrb[0].mxu0
      %v3280 = vadd.f32 %v2237, %v3279
      %v3281 = vpop.f32.mrb[0].mxu0
      %v3282 = vadd.f32 %v2233, %v3281
      %v3283 = vpop.f32.mrb[0].mxu0
      %v3284 = vadd.f32 %v2237, %v3283
      %3285 = vmatprep.mubr.bf16.mxu0 %v2170
      %3286 = vmatmul.mubr.bf16.gmra.mrb[0].mxu0 %v2169
      %v3287 = vpop.f32.mrb[0].mxu0
      %v3288 = vadd.f32 %v2233, %v3287
      %v3289 = vpop.f32.mrb[0].mxu0
      %v3290 = vadd.f32 %v2237, %v3289
      %v3291 = vpop.f32.mrb[0].mxu0
      %v3292 = vadd.f32 %v2233, %v3291
      %v3293 = vpop.f32.mrb[0].mxu0
      %v3294 = vadd.f32 %v2237, %v3293
      %3295 = vmatprep.mubr.bf16.mxu0 %v2175
      %3296 = vmatmul.mubr.bf16.gmra.mrb[0].mxu0 %v2174
      %v3297 = vpop.f32.mrb[0].mxu0
      %v3298 = vadd.f32 %v2233, %v3297
      %v3299 = vpop.f32.mrb[0].mxu0
      %v3300 = vadd.f32 %v2237, %v3299
      %v3301 = vpop.f32.mrb[0].mxu0
      %v3302 = vadd.f32 %v2233, %v3301
      %v3303 = vpop.f32.mrb[0].mxu0
      %v3304 = vadd.f32 %v2237, %v3303
      %3305 = vmatprep.mubr.bf16.mxu0 %v2180
      %3306 = vmatmul.mubr.bf16.gmra.mrb[0].mxu0 %v2179
      %v3307 = vpop.f32.mrb[0].mxu0
      %v3308 = vadd.f32 %v2233, %v3307
      %v3309 = vpop.f32.mrb[0].mxu0
      %v3310 = vadd.f32 %v2237, %v3309
      %v3311 = vpop.f32.mrb[0].mxu0
      %v3312 = vadd.f32 %v2233, %v3311
      %v3313 = vpop.f32.mrb[0].mxu0
      %v3314 = vadd.f32 %v2237, %v3313
      %3315 = vmatprep.mubr.bf16.mxu0 %v2185
      %3316 = vmatmul.mubr.bf16.gmra.mrb[0].mxu0 %v2184
      %v3317 = vpop.f32.mrb[0].mxu0
      %v3318 = vadd.f32 %v2233, %v3317
      %v3319 = vpop.f32.mrb[0].mxu0
      %v3320 = vadd.f32 %v2237, %v3319
      %v3321 = vpop.f32.mrb[0].mxu0
      %v3322 = vadd.f32 %v2233, %v3321
      %v3323 = vpop.f32.mrb[0].mxu0
      %v3324 = vadd.f32 %v2237, %v3323
      %3325 = vmatprep.mubr.bf16.mxu0 %v2190
      %3326 = vmatmul.mubr.bf16.gmra.mrb[0].mxu0 %v2189
      %v3327 = vpop.f32.mrb[0].mxu0
      %v3328 = vadd.f32 %v2233, %v3327
      %v3329 = vpop.f32.mrb[0].mxu0
      %v3330 = vadd.f32 %v2237, %v3329
      %v3331 = vpop.f32.mrb[0].mxu0
      %v3332 = vadd.f32 %v2233, %v3331
      %v3333 = vpop.f32.mrb[0].mxu0
      %v3334 = vadd.f32 %v2237, %v3333
      %3335 = vmatprep.mubr.bf16.mxu0 %v2195
      %3336 = vmatmul.mubr.bf16.gmra.mrb[0].mxu0 %v2194
      %v3337 = vpop.f32.mrb[0].mxu0
      %v3338 = vadd.f32 %v2233, %v3337
      %v3339 = vpop.f32.mrb[0].mxu0
      %v3340 = vadd.f32 %v2237, %v3339
      %v3341 = vpop.f32.mrb[0].mxu0
      %v3342 = vpop.f32.mrb[0].mxu0
      %3343 = vdwg.mxu0
      %v3344 = vmax.f32 %v3218, 0.0
      %v3345 = vmax.f32 %v3220, 0.0
      %v3346 = vmax.f32 %v3222, 0.0
      %v3347 = vmax.f32 %v3224, 0.0
      %v3348 = vmax.f32 %v3228, 0.0
      %v3349 = vmax.f32 %v3230, 0.0
      %v3350 = vmax.f32 %v3232, 0.0
      %v3351 = vmax.f32 %v3234, 0.0
      %v3352 = vmax.f32 %v3238, 0.0
      %v3353 = vmax.f32 %v3240, 0.0
      %v3354 = vmax.f32 %v3242, 0.0
      %v3355 = vmax.f32 %v3244, 0.0
      %v3356 = vmax.f32 %v3248, 0.0
      %v3357 = vmax.f32 %v3250, 0.0
      %v3358 = vmax.f32 %v3252, 0.0
      %v3359 = vmax.f32 %v3254, 0.0
      %v3360 = vmax.f32 %v3258, 0.0
      %v3361 = vmax.f32 %v3260, 0.0
      %v3362 = vmax.f32 %v3262, 0.0
      %v3363 = vmax.f32 %v3264, 0.0
      %v3364 = vmax.f32 %v3268, 0.0
      %v3365 = vmax.f32 %v3270, 0.0
      %v3366 = vmax.f32 %v3272, 0.0
      %v3367 = vmax.f32 %v3274, 0.0
      %v3368 = vmax.f32 %v3278, 0.0
      %v3369 = vmax.f32 %v3280, 0.0
      %v3370 = vmax.f32 %v3282, 0.0
      %v3371 = vmax.f32 %v3284, 0.0
      %v3372 = vmax.f32 %v3288, 0.0
      %v3373 = vmax.f32 %v3290, 0.0
      %v3374 = vmax.f32 %v3292, 0.0
      %v3375 = vmax.f32 %v3294, 0.0
      %v3376 = vmax.f32 %v3298, 0.0
      %v3377 = vmax.f32 %v3300, 0.0
      %v3378 = vmax.f32 %v3302, 0.0
      %v3379 = vmax.f32 %v3304, 0.0
      %v3380 = vmax.f32 %v3308, 0.0
      %v3381 = vmax.f32 %v3310, 0.0
      %v3382 = vmax.f32 %v3312, 0.0
      %v3383 = vmax.f32 %v3314, 0.0
      %v3384 = vmax.f32 %v3318, 0.0
      %v3385 = vmax.f32 %v3320, 0.0
      %v3386 = vmax.f32 %v3322, 0.0
      %v3387 = vmax.f32 %v3324, 0.0
      %v3388 = vmax.f32 %v3328, 0.0
      %v3389 = vmax.f32 %v3330, 0.0
      %v3390 = vmax.f32 %v3332, 0.0
      %v3391 = vmax.f32 %v3334, 0.0
      %v3392 = vmax.f32 %v3338, 0.0
      %v3393 = vmax.f32 %v3340, 0.0
      %v3394 = vadd.f32 %v3158, %v3344
      %v3395 = vadd.f32 %v3159, %v3346
      %v3396 = vadd.f32 %v3160, %v3348
      %v3397 = vadd.f32 %v3161, %v3350
      %v3398 = vadd.f32 %v3162, %v3352
      %v3399 = vadd.f32 %v3163, %v3354
      %v3400 = vadd.f32 %v3164, %v3356
      %v3401 = vadd.f32 %v3165, %v3358
      %v3402 = vadd.f32 %v3166, %v3360
      %v3403 = vadd.f32 %v3167, %v3362
      %v3404 = vadd.f32 %v3168, %v3364
      %v3405 = vadd.f32 %v3169, %v3366
      %v3406 = vadd.f32 %v3170, %v3368
      %v3407 = vadd.f32 %v3171, %v3370
      %v3408 = vadd.f32 %v3172, %v3372
      %v3409 = vadd.f32 %v3173, %v3374
      %v3410 = vadd.f32 %v3174, %v3376
      %v3411 = vadd.f32 %v3175, %v3378
      %v3412 = vadd.f32 %v3176, %v3380
      %v3413 = vadd.f32 %v3177, %v3382
      %v3414 = vadd.f32 %v3178, %v3384
      %v3415 = vadd.f32 %v3179, %v3386
      %v3416 = vadd.f32 %v3180, %v3388
      %v3417 = vadd.f32 %v3181, %v3390
      %v3418 = vadd.f32 %v3182, %v3392
      %v3419 = vadd.f32 %v3394, %v3345
      %v3420 = vadd.f32 %v3395, %v3347
      %v3421 = vadd.f32 %v3396, %v3349
      %v3422 = vadd.f32 %v3397, %v3351
      %v3423 = vadd.f32 %v3398, %v3353
      %v3424 = vadd.f32 %v3399, %v3355
      %v3425 = vadd.f32 %v3400, %v3357
      %v3426 = vadd.f32 %v3401, %v3359
      %v3427 = vadd.f32 %v3402, %v3361
      %v3428 = vadd.f32 %v3403, %v3363
      %v3429 = vadd.f32 %v3404, %v3365
      %v3430 = vadd.f32 %v3405, %v3367
      %v3431 = vadd.f32 %v3406, %v3369
      %v3432 = vadd.f32 %v3407, %v3371
      %v3433 = vadd.f32 %v3408, %v3373
      %v3434 = vadd.f32 %v3409, %v3375
      %v3435 = vadd.f32 %v3410, %v3377
      %v3436 = vadd.f32 %v3411, %v3379
      %v3437 = vadd.f32 %v3412, %v3381
      %v3438 = vadd.f32 %v3413, %v3383
      %v3439 = vadd.f32 %v3414, %v3385
      %v3440 = vadd.f32 %v3415, %v3387
      %v3441 = vadd.f32 %v3416, %v3389
      %v3442 = vadd.f32 %v3417, %v3391
      %v3443 = vadd.f32 %v3418, %v3393
      %v3444 = vmul.f32 %v3419, 0.125
      %v3445 = vmul.f32 %v3420, 0.125
      %v3446 = vmul.f32 %v3421, 0.125
      %v3447 = vmul.f32 %v3422, 0.125
      %v3448 = vmul.f32 %v3423, 0.125
      %v3449 = vmul.f32 %v3424, 0.125
      %v3450 = vmul.f32 %v3425, 0.125
      %v3451 = vmul.f32 %v3426, 0.125
      %v3452 = vmul.f32 %v3427, 0.125
      %v3453 = vmul.f32 %v3428, 0.125
      %v3454 = vmul.f32 %v3429, 0.125
      %v3455 = vmul.f32 %v3430, 0.125
      %v3456 = vmul.f32 %v3431, 0.125
      %v3457 = vmul.f32 %v3432, 0.125
      %v3458 = vmul.f32 %v3433, 0.125
      %v3459 = vmul.f32 %v3434, 0.125
      %v3460 = vmul.f32 %v3435, 0.125
      %v3461 = vmul.f32 %v3436, 0.125
      %v3462 = vmul.f32 %v3437, 0.125
      %v3463 = vmul.f32 %v3438, 0.125
      %v3464 = vmul.f32 %v3439, 0.125
      %v3465 = vmul.f32 %v3440, 0.125
      %v3466 = vmul.f32 %v3441, 0.125
      %v3467 = vmul.f32 %v3442, 0.125
      %v3468 = vmul.f32 %v3443, 0.125
      %v3469 = vpack.c.bf16 %v3445, %v3444
      %v3470 = vpack.c.bf16 %v3447, %v3446
      %v3471 = vpack.c.bf16 %v3449, %v3448
      %v3472 = vpack.c.bf16 %v3451, %v3450
      %v3473 = vpack.c.bf16 %v3453, %v3452
      %v3474 = vpack.c.bf16 %v3455, %v3454
      %v3475 = vpack.c.bf16 %v3457, %v3456
      %v3476 = vpack.c.bf16 %v3459, %v3458
      %v3477 = vpack.c.bf16 %v3461, %v3460
      %v3478 = vpack.c.bf16 %v3463, %v3462
      %v3479 = vpack.c.bf16 %v3465, %v3464
      %v3480 = vpack.c.bf16 %v3467, %v3466
      %v3481 = vpack.c.bf16 %v3468, %v3468
      %v3483 = vsel %vm1657, %v3481, 0
      %3485 = vmatprep.subr.bf16.mxu0 0
      %3486 = vmatpush1.bf16.msra.mxu0 %v3469
      %3487 = vmatprep.subr.bf16.mxu0 0
      %3488 = vmatpush1.bf16.msra.mxu0 %v3470
      %3489 = vmatprep.subr.bf16.mxu0 0
      %3490 = vmatpush1.bf16.msra.mxu0 %v3471
      %3491 = vmatprep.subr.bf16.mxu0 0
      %3492 = vmatpush1.bf16.msra.mxu0 %v3472
      %3493 = vmatprep.subr.bf16.mxu0 0
      %3494 = vmatpush1.bf16.msra.mxu0 %v3473
      %3495 = vmatprep.subr.bf16.mxu0 0
      %3496 = vmatpush1.bf16.msra.mxu0 %v3474
      %3497 = vmatprep.subr.bf16.mxu0 0
      %3498 = vmatpush1.bf16.msra.mxu0 %v3475
      %3499 = vmatprep.subr.bf16.mxu0 0
      %3500 = vmatpush1.bf16.msra.mxu0 %v3476
      %3501 = vmatprep.subr.bf16.mxu0 0
      %3502 = vmatpush1.bf16.msra.mxu0 %v3477
      %3503 = vmatprep.subr.bf16.mxu0 0
      %3504 = vmatpush1.bf16.msra.mxu0 %v3478
      %3505 = vmatprep.subr.bf16.mxu0 0
      %3506 = vmatpush1.bf16.msra.mxu0 %v3479
      %3507 = vmatprep.subr.bf16.mxu0 0
      %3508 = vmatpush1.bf16.msra.mxu0 %v3480
      %3509 = vmatprep.subr.bf16.mxu0 0
      %3510 = vmatpush1.bf16.msra.mxu0 %v3483
      %3511 = vmatprep.subr.bf16.mxu0 0
      %3512 = vmatpush1.bf16.msra.mxu0 0
      %3513 = vmatprep.subr.bf16.mxu0 0
      %3514 = vmatpush1.bf16.msra.mxu0 0
      %3515 = vmatprep.subr.bf16.mxu0 0
      %3516 = vmatpush1.bf16.msra.mxu0 0
      %3517 = vmatprep.mubr.bf16.mxu0 %v1619
      %3518 = vmatmul.mubr.bf16.gmra.mrb[0].mxu0 %v1578
      %v3519 = vpop.f32.mrb[0].mxu0
      %v3520 = vadd.f32 0.0, %v3519
      %v3521 = vpop.f32.mrb[0].mxu0
      %v3522 = vpop.f32.mrb[0].mxu0
      %v3523 = vadd.f32 0.0, %v3522
      %v3524 = vpop.f32.mrb[0].mxu0
      %3525 = vmatprep.mubr.bf16.mxu0 %v1622
      %3526 = vmatmul.mubr.bf16.gmra.mrb[0].mxu0 %v1580
      %v3527 = vpop.f32.mrb[0].mxu0
      %v3528 = vadd.f32 0.0, %v3527
      %v3529 = vpop.f32.mrb[0].mxu0
      %v3530 = vpop.f32.mrb[0].mxu0
      %v3531 = vadd.f32 0.0, %v3530
      %v3532 = vpop.f32.mrb[0].mxu0
      %3533 = vmatprep.mubr.bf16.mxu0 %v1625
      %3534 = vmatmul.mubr.bf16.gmra.mrb[0].mxu0 %v1582
      %v3535 = vpop.f32.mrb[0].mxu0
      %v3536 = vadd.f32 0.0, %v3535
      %v3537 = vpop.f32.mrb[0].mxu0
      %v3538 = vpop.f32.mrb[0].mxu0
      %v3539 = vadd.f32 0.0, %v3538
      %v3540 = vpop.f32.mrb[0].mxu0
      %3541 = vmatprep.mubr.bf16.mxu0 %v1628
      %3542 = vmatmul.mubr.bf16.gmra.mrb[0].mxu0 %v1584
      %v3543 = vpop.f32.mrb[0].mxu0
      %v3544 = vadd.f32 0.0, %v3543
      %v3545 = vpop.f32.mrb[0].mxu0
      %v3546 = vpop.f32.mrb[0].mxu0
      %v3547 = vadd.f32 0.0, %v3546
      %v3548 = vpop.f32.mrb[0].mxu0
      %3549 = vmatprep.mubr.bf16.mxu0 %v1631
      %3550 = vmatmul.mubr.bf16.gmra.mrb[0].mxu0 %v1586
      %v3551 = vpop.f32.mrb[0].mxu0
      %v3552 = vadd.f32 0.0, %v3551
      %v3553 = vpop.f32.mrb[0].mxu0
      %v3554 = vpop.f32.mrb[0].mxu0
      %v3555 = vadd.f32 0.0, %v3554
      %v3556 = vpop.f32.mrb[0].mxu0
      %3557 = vmatprep.mubr.bf16.mxu0 %v1634
      %3558 = vmatmul.mubr.bf16.gmra.mrb[0].mxu0 %v1588
      %v3559 = vpop.f32.mrb[0].mxu0
      %v3560 = vadd.f32 0.0, %v3559
      %v3561 = vpop.f32.mrb[0].mxu0
      %v3562 = vpop.f32.mrb[0].mxu0
      %v3563 = vadd.f32 0.0, %v3562
      %v3564 = vpop.f32.mrb[0].mxu0
      %3565 = vmatprep.mubr.bf16.mxu0 %v1637
      %3566 = vmatmul.mubr.bf16.gmra.mrb[0].mxu0 %v1590
      %v3567 = vpop.f32.mrb[0].mxu0
      %v3568 = vadd.f32 0.0, %v3567
      %v3569 = vpop.f32.mrb[0].mxu0
      %v3570 = vpop.f32.mrb[0].mxu0
      %v3571 = vadd.f32 0.0, %v3570
      %v3572 = vpop.f32.mrb[0].mxu0
      %3573 = vmatprep.mubr.bf16.mxu0 %v1640
      %3574 = vmatmul.mubr.bf16.gmra.mrb[0].mxu0 %v1592
      %v3575 = vpop.f32.mrb[0].mxu0
      %v3576 = vadd.f32 0.0, %v3575
      %v3577 = vpop.f32.mrb[0].mxu0
      %v3578 = vpop.f32.mrb[0].mxu0
      %v3579 = vadd.f32 0.0, %v3578
      %v3580 = vpop.f32.mrb[0].mxu0
      %3581 = vmatprep.mubr.bf16.mxu0 %v1643
      %3582 = vmatmul.mubr.bf16.gmra.mrb[0].mxu0 %v1594
      %v3583 = vpop.f32.mrb[0].mxu0
      %v3584 = vadd.f32 0.0, %v3583
      %v3585 = vpop.f32.mrb[0].mxu0
      %v3586 = vpop.f32.mrb[0].mxu0
      %v3587 = vadd.f32 0.0, %v3586
      %v3588 = vpop.f32.mrb[0].mxu0
      %3589 = vmatprep.mubr.bf16.mxu0 %v1646
      %3590 = vmatmul.mubr.bf16.gmra.mrb[0].mxu0 %v1596
      %v3591 = vpop.f32.mrb[0].mxu0
      %v3592 = vadd.f32 0.0, %v3591
      %v3593 = vpop.f32.mrb[0].mxu0
      %v3594 = vpop.f32.mrb[0].mxu0
      %v3595 = vadd.f32 0.0, %v3594
      %v3596 = vpop.f32.mrb[0].mxu0
      %3597 = vmatprep.mubr.bf16.mxu0 %v1649
      %3598 = vmatmul.mubr.bf16.gmra.mrb[0].mxu0 %v1598
      %v3599 = vpop.f32.mrb[0].mxu0
      %v3600 = vadd.f32 0.0, %v3599
      %v3601 = vpop.f32.mrb[0].mxu0
      %v3602 = vpop.f32.mrb[0].mxu0
      %v3603 = vadd.f32 0.0, %v3602
      %v3604 = vpop.f32.mrb[0].mxu0
      %3605 = vmatprep.mubr.bf16.mxu0 %v1652
      %3606 = vmatmul.mubr.bf16.gmra.mrb[0].mxu0 %v1600
      %v3607 = vpop.f32.mrb[0].mxu0
      %v3608 = vadd.f32 0.0, %v3607
      %v3609 = vpop.f32.mrb[0].mxu0
      %v3610 = vpop.f32.mrb[0].mxu0
      %v3611 = vadd.f32 0.0, %v3610
      %v3612 = vpop.f32.mrb[0].mxu0
      %3613 = vmatprep.mubr.bf16.mxu0 %v1655
      %3614 = vmatmul.mubr.bf16.gmra.mrb[0].mxu0 %v1602
      %v3615 = vpop.f32.mrb[0].mxu0
      %v3616 = vadd.f32 0.0, %v3615
      %v3617 = vpop.f32.mrb[0].mxu0
      %v3618 = vpop.f32.mrb[0].mxu0
      %v3619 = vpop.f32.mrb[0].mxu0
      %3620 = vdwg.mxu0
      %3621 = vst [vmem:[%s444] sm:$0xff] %v3520
      %3622 = vst [vmem:[%s444 + $0x8] sm:$0xff] %v3523
      %3623 = vst [vmem:[%s444 + $0x10] sm:$0xff] %v3528
      %3624 = vst [vmem:[%s444 + $0x18] sm:$0xff] %v3531
      %3625 = vst [vmem:[%s444 + $0x20] sm:$0xff] %v3536
      %3626 = vst [vmem:[%s444 + $0x28] sm:$0xff] %v3539
      %3627 = vst [vmem:[%s444 + $0x30] sm:$0xff] %v3544
      %3628 = vst [vmem:[%s444 + $0x38] sm:$0xff] %v3547
      %3629 = vst [vmem:[%s444 + $0x40] sm:$0xff] %v3552
      %3630 = vst [vmem:[%s444 + $0x48] sm:$0xff] %v3555
      %3631 = vst [vmem:[%s444 + $0x50] sm:$0xff] %v3560
      %3632 = vst [vmem:[%s444 + $0x58] sm:$0xff] %v3563
      %3633 = vst [vmem:[%s444 + $0x60] sm:$0xff] %v3568
      %3634 = vst [vmem:[%s444 + $0x68] sm:$0xff] %v3571
      %3635 = vst [vmem:[%s444 + $0x70] sm:$0xff] %v3576
      %3636 = vst [vmem:[%s444 + $0x78] sm:$0xff] %v3579
      %3637 = vst [vmem:[%s444 + $0x80] sm:$0xff] %v3584
      %3638 = vst [vmem:[%s444 + $0x88] sm:$0xff] %v3587
      %3639 = vst [vmem:[%s444 + $0x90] sm:$0xff] %v3592
      %3640 = vst [vmem:[%s444 + $0x98] sm:$0xff] %v3595
      %3641 = vst [vmem:[%s444 + $0xa0] sm:$0xff] %v3600
      %3642 = vst [vmem:[%s444 + $0xa8] sm:$0xff] %v3603
      %3643 = vst [vmem:[%s444 + $0xb0] sm:$0xff] %v3608
      %3644 = vst [vmem:[%s444 + $0xb8] sm:$0xff] %v3611
      %3645 = vst [vmem:[%s444 + $0xc0] sm:$0xff] %v3616
      %v3646 = vpack.c.bf16 %v3523, %v3520
      %v3647 = vpack.c.bf16 %v3531, %v3528
      %v3648 = vpack.c.bf16 %v3539, %v3536
      %v3649 = vpack.c.bf16 %v3547, %v3544
      %v3650 = vpack.c.bf16 %v3555, %v3552
      %v3651 = vpack.c.bf16 %v3563, %v3560
      %v3652 = vpack.c.bf16 %v3571, %v3568
      %v3653 = vpack.c.bf16 %v3579, %v3576
      %v3654 = vpack.c.bf16 %v3587, %v3584
      %v3655 = vpack.c.bf16 %v3595, %v3592
      %v3656 = vpack.c.bf16 %v3603, %v3600
      %v3657 = vpack.c.bf16 %v3611, %v3608
      %v3658 = vpack.c.bf16 %v3616, %v3616
      %v3659 = vld [vmem:[%s6] sm:$0xf]
      %v3660 = vld [vmem:[%s6 + $0x4] sm:$0xf]
      %v3661 = vld [vmem:[%s6 + $0x8] sm:$0xf]
      %v3662 = vld [vmem:[%s6 + $0xc] sm:$0xf]
      %v3663 = vld [vmem:[%s6 + $0x10] sm:$0xf]
      %v3664 = vld [vmem:[%s6 + $0x14] sm:$0xf]
      %v3665 = vld [vmem:[%s6 + $0x18] sm:$0xf]
      %v3666 = vld [vmem:[%s6 + $0x1c] sm:$0xf]
      %v3667 = vld [vmem:[%s6 + $0x20] sm:$0xf]
      %v3668 = vld [vmem:[%s6 + $0x24] sm:$0xf]
      %v3669 = vld [vmem:[%s6 + $0x28] sm:$0xf]
      %v3670 = vld [vmem:[%s6 + $0x2c] sm:$0xf]
      %v3671 = vld [vmem:[%s6 + $0x30] sm:$0xf]
      %v3672 = vld [vmem:[%s6 + $0x34] sm:$0xf]
      %v3673 = vld [vmem:[%s6 + $0x38] sm:$0xf]
      %v3674 = vld [vmem:[%s6 + $0x3c] sm:$0xf]
      %v3691 = vunpack.c.l.b16 %v3659
      %v3692 = vunpack.c.l.b16 %v3660
      %v3693 = vunpack.c.l.b16 %v3661
      %v3694 = vunpack.c.l.b16 %v3662
      %v3695 = vunpack.c.l.b16 %v3663
      %v3696 = vunpack.c.l.b16 %v3664
      %v3697 = vunpack.c.l.b16 %v3665
      %v3698 = vunpack.c.l.b16 %v3666
      %v3699 = vunpack.c.l.b16 %v3667
      %v3700 = vunpack.c.l.b16 %v3668
      %v3701 = vunpack.c.l.b16 %v3669
      %v3702 = vunpack.c.l.b16 %v3670
      %v3703 = vunpack.c.l.b16 %v3671
      %v3704 = vunpack.c.l.b16 %v3672
      %v3705 = vunpack.c.l.b16 %v3673
      %v3706 = vunpack.c.l.b16 %v3674
      %v3707 = vpack.c.b16 %v3692, %v3691
      %v3708 = vpack.c.b16 %v3694, %v3693
      %v3709 = vpack.c.b16 %v3696, %v3695
      %v3710 = vpack.c.b16 %v3698, %v3697
      %v3711 = vpack.c.b16 %v3700, %v3699
      %v3712 = vpack.c.b16 %v3702, %v3701
      %v3713 = vpack.c.b16 %v3704, %v3703
      %v3714 = vpack.c.b16 %v3706, %v3705
      %3723 = vmatprep.subr.bf16.mxu0 0
      %3724 = vmatpush1.bf16.msra.mxu0 %v3707
      %3725 = vmatprep.subr.bf16.mxu0 0
      %3726 = vmatpush1.bf16.msra.mxu0 %v3708
      %3727 = vmatprep.subr.bf16.mxu0 0
      %3728 = vmatpush1.bf16.msra.mxu0 %v3709
      %3729 = vmatprep.subr.bf16.mxu0 0
      %3730 = vmatpush1.bf16.msra.mxu0 %v3710
      %3731 = vmatprep.subr.bf16.mxu0 0
      %3732 = vmatpush1.bf16.msra.mxu0 %v3711
      %3733 = vmatprep.subr.bf16.mxu0 0
      %3734 = vmatpush1.bf16.msra.mxu0 %v3712
      %3735 = vmatprep.subr.bf16.mxu0 0
      %3736 = vmatpush1.bf16.msra.mxu0 %v3713
      %3737 = vmatprep.subr.bf16.mxu0 0
      %3738 = vmatpush1.bf16.msra.mxu0 %v3714
      %3739 = vmatprep.subr.bf16.mxu0 0
      %3740 = vmatpush1.bf16.msra.mxu0 0
      %3741 = vmatprep.subr.bf16.mxu0 0
      %3742 = vmatpush1.bf16.msra.mxu0 0
      %3743 = vmatprep.subr.bf16.mxu0 0
      %3744 = vmatpush1.bf16.msra.mxu0 0
      %3745 = vmatprep.subr.bf16.mxu0 0
      %3746 = vmatpush1.bf16.msra.mxu0 0
      %3747 = vmatprep.subr.bf16.mxu0 0
      %3748 = vmatpush1.bf16.msra.mxu0 0
      %3749 = vmatprep.subr.bf16.mxu0 0
      %3750 = vmatpush1.bf16.msra.mxu0 0
      %3751 = vmatprep.subr.bf16.mxu0 0
      %3752 = vmatpush1.bf16.msra.mxu0 0
      %3753 = vmatprep.subr.bf16.mxu0 0
      %3754 = vmatpush1.bf16.msra.mxu0 0
      %3755 = vmatprep.mubr.bf16.mxu0 0
      %3756 = vmatmul.mubr.bf16.gmra.mrb[0].mxu0 %v3646
      %v3757 = vpop.f32.mrb[0].mxu0
      %v3758 = vadd.f32 0.0, %v3757
      %v3759 = vpop.f32.mrb[0].mxu0
      %v3760 = vpop.f32.mrb[0].mxu0
      %v3761 = vadd.f32 0.0, %v3760
      %v3762 = vpop.f32.mrb[0].mxu0
      %3763 = vmatprep.mubr.bf16.mxu0 0
      %3764 = vmatmul.mubr.bf16.gmra.mrb[0].mxu0 %v3647
      %v3765 = vpop.f32.mrb[0].mxu0
      %v3766 = vadd.f32 0.0, %v3765
      %v3767 = vpop.f32.mrb[0].mxu0
      %v3768 = vpop.f32.mrb[0].mxu0
      %v3769 = vadd.f32 0.0, %v3768
      %v3770 = vpop.f32.mrb[0].mxu0
      %3771 = vmatprep.mubr.bf16.mxu0 0
      %3772 = vmatmul.mubr.bf16.gmra.mrb[0].mxu0 %v3648
      %v3773 = vpop.f32.mrb[0].mxu0
      %v3774 = vadd.f32 0.0, %v3773
      %v3775 = vpop.f32.mrb[0].mxu0
      %v3776 = vpop.f32.mrb[0].mxu0
      %v3777 = vadd.f32 0.0, %v3776
      %v3778 = vpop.f32.mrb[0].mxu0
      %3779 = vmatprep.mubr.bf16.mxu0 0
      %3780 = vmatmul.mubr.bf16.gmra.mrb[0].mxu0 %v3649
      %v3781 = vpop.f32.mrb[0].mxu0
      %v3782 = vadd.f32 0.0, %v3781
      %v3783 = vpop.f32.mrb[0].mxu0
      %v3784 = vpop.f32.mrb[0].mxu0
      %v3785 = vadd.f32 0.0, %v3784
      %v3786 = vpop.f32.mrb[0].mxu0
      %3787 = vmatprep.mubr.bf16.mxu0 0
      %3788 = vmatmul.mubr.bf16.gmra.mrb[0].mxu0 %v3650
      %v3789 = vpop.f32.mrb[0].mxu0
      %v3790 = vadd.f32 0.0, %v3789
      %v3791 = vpop.f32.mrb[0].mxu0
      %v3792 = vpop.f32.mrb[0].mxu0
      %v3793 = vadd.f32 0.0, %v3792
      %v3794 = vpop.f32.mrb[0].mxu0
      %3795 = vmatprep.mubr.bf16.mxu0 0
      %3796 = vmatmul.mubr.bf16.gmra.mrb[0].mxu0 %v3651
      %v3797 = vpop.f32.mrb[0].mxu0
      %v3798 = vadd.f32 0.0, %v3797
      %v3799 = vpop.f32.mrb[0].mxu0
      %v3800 = vpop.f32.mrb[0].mxu0
      %v3801 = vadd.f32 0.0, %v3800
      %v3802 = vpop.f32.mrb[0].mxu0
      %3803 = vmatprep.mubr.bf16.mxu0 0
      %3804 = vmatmul.mubr.bf16.gmra.mrb[0].mxu0 %v3652
      %v3805 = vpop.f32.mrb[0].mxu0
      %v3806 = vadd.f32 0.0, %v3805
      %v3807 = vpop.f32.mrb[0].mxu0
      %v3808 = vpop.f32.mrb[0].mxu0
      %v3809 = vadd.f32 0.0, %v3808
      %v3810 = vpop.f32.mrb[0].mxu0
      %3811 = vmatprep.mubr.bf16.mxu0 0
      %3812 = vmatmul.mubr.bf16.gmra.mrb[0].mxu0 %v3653
      %v3813 = vpop.f32.mrb[0].mxu0
      %v3814 = vadd.f32 0.0, %v3813
      %v3815 = vpop.f32.mrb[0].mxu0
      %v3816 = vpop.f32.mrb[0].mxu0
      %v3817 = vadd.f32 0.0, %v3816
      %v3818 = vpop.f32.mrb[0].mxu0
      %3819 = vmatprep.mubr.bf16.mxu0 0
      %3820 = vmatmul.mubr.bf16.gmra.mrb[0].mxu0 %v3654
      %v3821 = vpop.f32.mrb[0].mxu0
      %v3822 = vadd.f32 0.0, %v3821
      %v3823 = vpop.f32.mrb[0].mxu0
      %v3824 = vpop.f32.mrb[0].mxu0
      %v3825 = vadd.f32 0.0, %v3824
      %v3826 = vpop.f32.mrb[0].mxu0
      %3827 = vmatprep.mubr.bf16.mxu0 0
      %3828 = vmatmul.mubr.bf16.gmra.mrb[0].mxu0 %v3655
      %v3829 = vpop.f32.mrb[0].mxu0
      %v3830 = vadd.f32 0.0, %v3829
      %v3831 = vpop.f32.mrb[0].mxu0
      %v3832 = vpop.f32.mrb[0].mxu0
      %v3833 = vadd.f32 0.0, %v3832
      %v3834 = vpop.f32.mrb[0].mxu0
      %3835 = vmatprep.mubr.bf16.mxu0 0
      %3836 = vmatmul.mubr.bf16.gmra.mrb[0].mxu0 %v3656
      %v3837 = vpop.f32.mrb[0].mxu0
      %v3838 = vadd.f32 0.0, %v3837
      %v3839 = vpop.f32.mrb[0].mxu0
      %v3840 = vpop.f32.mrb[0].mxu0
      %v3841 = vadd.f32 0.0, %v3840
      %v3842 = vpop.f32.mrb[0].mxu0
      %3843 = vmatprep.mubr.bf16.mxu0 0
      %3844 = vmatmul.mubr.bf16.gmra.mrb[0].mxu0 %v3657
      %v3845 = vpop.f32.mrb[0].mxu0
      %v3846 = vadd.f32 0.0, %v3845
      %v3847 = vpop.f32.mrb[0].mxu0
      %v3848 = vpop.f32.mrb[0].mxu0
      %v3849 = vadd.f32 0.0, %v3848
      %v3850 = vpop.f32.mrb[0].mxu0
      %3851 = vmatprep.mubr.bf16.mxu0 0
      %3852 = vmatmul.mubr.bf16.gmra.mrb[0].mxu0 %v3658
      %v3853 = vpop.f32.mrb[0].mxu0
      %v3854 = vadd.f32 0.0, %v3853
      %v3855 = vpop.f32.mrb[0].mxu0
      %v3856 = vpop.f32.mrb[0].mxu0
      %v3857 = vpop.f32.mrb[0].mxu0
      %3858 = vdwg.mxu0
      %v3859 = vpack.c.bf16 %v3761, %v3758
      %v3860 = vpack.c.bf16 %v3769, %v3766
      %v3861 = vpack.c.bf16 %v3777, %v3774
      %v3862 = vpack.c.bf16 %v3785, %v3782
      %v3863 = vpack.c.bf16 %v3793, %v3790
      %v3864 = vpack.c.bf16 %v3801, %v3798
      %v3865 = vpack.c.bf16 %v3809, %v3806
      %v3866 = vpack.c.bf16 %v3817, %v3814
      %v3867 = vpack.c.bf16 %v3825, %v3822
      %v3868 = vpack.c.bf16 %v3833, %v3830
      %v3869 = vpack.c.bf16 %v3841, %v3838
      %v3870 = vpack.c.bf16 %v3849, %v3846
      %v3871 = vpack.c.bf16 %v3854, %v3854
      %v3872 = vld [vmem:[%s7] sm:$0xf]
      %v3873 = vld [vmem:[%s7 + $0x4] sm:$0xf]
      %v3874 = vld [vmem:[%s7 + $0x8] sm:$0xf]
      %v3875 = vld [vmem:[%s7 + $0xc] sm:$0xf]
      %v3876 = vld [vmem:[%s7 + $0x10] sm:$0xf]
      %v3877 = vld [vmem:[%s7 + $0x14] sm:$0xf]
      %v3878 = vld [vmem:[%s7 + $0x18] sm:$0xf]
      %v3879 = vld [vmem:[%s7 + $0x1c] sm:$0xf]
      %v3880 = vld [vmem:[%s7 + $0x20] sm:$0xf]
      %v3881 = vld [vmem:[%s7 + $0x24] sm:$0xf]
      %v3882 = vld [vmem:[%s7 + $0x28] sm:$0xf]
      %v3883 = vld [vmem:[%s7 + $0x2c] sm:$0xf]
      %v3884 = vld [vmem:[%s7 + $0x30] sm:$0xf]
      %v3885 = vld [vmem:[%s7 + $0x34] sm:$0xf]
      %v3886 = vld [vmem:[%s7 + $0x38] sm:$0xf]
      %v3887 = vld [vmem:[%s7 + $0x3c] sm:$0xf]
      %v3888 = vld [vmem:[%s7 + $0x40] sm:$0xf]
      %v3889 = vld [vmem:[%s7 + $0x44] sm:$0xf]
      %v3890 = vld [vmem:[%s7 + $0x48] sm:$0xf]
      %v3891 = vld [vmem:[%s7 + $0x4c] sm:$0xf]
      %v3892 = vld [vmem:[%s7 + $0x50] sm:$0xf]
      %v3893 = vld [vmem:[%s7 + $0x54] sm:$0xf]
      %v3894 = vld [vmem:[%s7 + $0x58] sm:$0xf]
      %v3895 = vld [vmem:[%s7 + $0x5c] sm:$0xf]
      %v3896 = vld [vmem:[%s7 + $0x60] sm:$0xf]
      %v3922 = vunpack.c.l.b16 %v3872
      %v3923 = vunpack.c.l.b16 %v3873
      %v3924 = vunpack.c.l.b16 %v3874
      %v3925 = vunpack.c.l.b16 %v3875
      %v3926 = vunpack.c.l.b16 %v3876
      %v3927 = vunpack.c.l.b16 %v3877
      %v3928 = vunpack.c.l.b16 %v3878
      %v3929 = vunpack.c.l.b16 %v3879
      %v3930 = vunpack.c.l.b16 %v3880
      %v3931 = vunpack.c.l.b16 %v3881
      %v3932 = vunpack.c.l.b16 %v3882
      %v3933 = vunpack.c.l.b16 %v3883
      %v3934 = vunpack.c.l.b16 %v3884
      %v3935 = vunpack.c.l.b16 %v3885
      %v3936 = vunpack.c.l.b16 %v3886
      %v3937 = vunpack.c.l.b16 %v3887
      %v3938 = vunpack.c.l.b16 %v3888
      %v3939 = vunpack.c.l.b16 %v3889
      %v3940 = vunpack.c.l.b16 %v3890
      %v3941 = vunpack.c.l.b16 %v3891
      %v3942 = vunpack.c.l.b16 %v3892
      %v3943 = vunpack.c.l.b16 %v3893
      %v3944 = vunpack.c.l.b16 %v3894
      %v3945 = vunpack.c.l.b16 %v3895
      %v3946 = vunpack.c.l.b16 %v3896
      %v3947 = vpack.c.b16 %v3923, %v3922
      %v3948 = vpack.c.b16 %v3925, %v3924
      %v3949 = vpack.c.b16 %v3927, %v3926
      %v3950 = vpack.c.b16 %v3929, %v3928
      %v3951 = vpack.c.b16 %v3931, %v3930
      %v3952 = vpack.c.b16 %v3933, %v3932
      %v3953 = vpack.c.b16 %v3935, %v3934
      %v3954 = vpack.c.b16 %v3937, %v3936
      %v3955 = vpack.c.b16 %v3939, %v3938
      %v3956 = vpack.c.b16 %v3941, %v3940
      %v3957 = vpack.c.b16 %v3943, %v3942
      %v3958 = vpack.c.b16 %v3945, %v3944
      %v3959 = vpack.c.b16 %v3946, %v3946
      %v3973 = vmul.bf16 %v3859, %v3947
      %v3974 = vmul.bf16 %v3860, %v3948
      %v3975 = vmul.bf16 %v3861, %v3949
      %v3976 = vmul.bf16 %v3862, %v3950
      %v3977 = vmul.bf16 %v3863, %v3951
      %v3978 = vmul.bf16 %v3864, %v3952
      %v3979 = vmul.bf16 %v3865, %v3953
      %v3980 = vmul.bf16 %v3866, %v3954
      %v3981 = vmul.bf16 %v3867, %v3955
      %v3982 = vmul.bf16 %v3868, %v3956
      %v3983 = vmul.bf16 %v3869, %v3957
      %v3984 = vmul.bf16 %v3870, %v3958
      %v3985 = vmul.bf16 %v3871, %v3959
      %v3986 = vld [vmem:[%s8] sm:$0xff]
      %v3988 = vunpack.c.l.b16 %v3986
      %v3989 = vunpack.c.h.b16 %v3986
      %v3990 = vpack.c.b16 %v3988, %v3988
      %v3991 = vpack.c.b16 %v3989, %v3989
      %v3994 = vsel %vm1617, %v3991, 0
      %v3997 = vsel %vm1657, %v3985, 0
      %3999 = vmatprep.subr.bf16.mxu0 0
      %4000 = vmatpush1.bf16.msra.mxu0 %v3973
      %4001 = vmatprep.subr.bf16.mxu0 0
      %4002 = vmatpush1.bf16.msra.mxu0 %v3974
      %4003 = vmatprep.subr.bf16.mxu0 0
      %4004 = vmatpush1.bf16.msra.mxu0 %v3975
      %4005 = vmatprep.subr.bf16.mxu0 0
      %4006 = vmatpush1.bf16.msra.mxu0 %v3976
      %4007 = vmatprep.subr.bf16.mxu0 0
      %4008 = vmatpush1.bf16.msra.mxu0 %v3977
      %4009 = vmatprep.subr.bf16.mxu0 0
      %4010 = vmatpush1.bf16.msra.mxu0 %v3978
      %4011 = vmatprep.subr.bf16.mxu0 0
      %4012 = vmatpush1.bf16.msra.mxu0 %v3979
      %4013 = vmatprep.subr.bf16.mxu0 0
      %4014 = vmatpush1.bf16.msra.mxu0 %v3980
      %4015 = vmatprep.subr.bf16.mxu0 0
      %4016 = vmatpush1.bf16.msra.mxu0 %v3981
      %4017 = vmatprep.subr.bf16.mxu0 0
      %4018 = vmatpush1.bf16.msra.mxu0 %v3982
      %4019 = vmatprep.subr.bf16.mxu0 0
      %4020 = vmatpush1.bf16.msra.mxu0 %v3983
      %4021 = vmatprep.subr.bf16.mxu0 0
      %4022 = vmatpush1.bf16.msra.mxu0 %v3984
      %4023 = vmatprep.subr.bf16.mxu0 0
      %4024 = vmatpush1.bf16.msra.mxu0 %v3997
      %4025 = vmatprep.subr.bf16.mxu0 0
      %4026 = vmatpush1.bf16.msra.mxu0 0
      %4027 = vmatprep.subr.bf16.mxu0 0
      %4028 = vmatpush1.bf16.msra.mxu0 0
      %4029 = vmatprep.subr.bf16.mxu0 0
      %4030 = vmatpush1.bf16.msra.mxu0 0
      %4031 = vmatprep.mubr.bf16.mxu0 %v3994
      %4032 = vmatmul.mubr.bf16.gmra.mrb[0].mxu0 %v3990
      %v4033 = vpop.f32.mrb[0].mxu0
      %v4034 = vadd.f32 0.0, %v4033
      %v4035 = vpop.f32.mrb[0].mxu0
      %v4036 = vpop.f32.mrb[0].mxu0
      %v4037 = vpop.f32.mrb[0].mxu0
      %4038 = vdwg.mxu0
      %v4039 = vpack.c.bf16 %v4034, %v4034
      %v4040 = vld [vmem:[%s9] sm:$0xf]
      %v4041 = vld [vmem:[%s9 + $0x4] sm:$0xf]
      %v4042 = vld [vmem:[%s9 + $0x8] sm:$0xf]
      %v4043 = vld [vmem:[%s9 + $0xc] sm:$0xf]
      %v4044 = vld [vmem:[%s9 + $0x10] sm:$0xf]
      %v4045 = vld [vmem:[%s9 + $0x14] sm:$0xf]
      %v4046 = vld [vmem:[%s9 + $0x18] sm:$0xf]
      %v4047 = vld [vmem:[%s9 + $0x1c] sm:$0xf]
      %v4048 = vld [vmem:[%s9 + $0x20] sm:$0xf]
      %v4049 = vld [vmem:[%s9 + $0x24] sm:$0xf]
      %v4050 = vld [vmem:[%s9 + $0x28] sm:$0xf]
      %v4051 = vld [vmem:[%s9 + $0x2c] sm:$0xf]
      %v4052 = vld [vmem:[%s9 + $0x30] sm:$0xf]
      %v4053 = vld [vmem:[%s9 + $0x34] sm:$0xf]
      %v4054 = vld [vmem:[%s9 + $0x38] sm:$0xf]
      %v4055 = vld [vmem:[%s9 + $0x3c] sm:$0xf]
      %v4056 = vld [vmem:[%s10] sm:$0x1]
      %v4058 = vlaneseq
      %v4059 = vshrl.u32 %v4058, 7
      %v4060 = vsub.s32 0, %v4059
      %v4061 = vrot.slane %v4056, %v4060
      %v4079 = vunpack.c.l.b16 %v4040
      %v4080 = vunpack.c.l.b16 %v4041
      %v4081 = vunpack.c.l.b16 %v4042
      %v4082 = vunpack.c.l.b16 %v4043
      %v4083 = vunpack.c.l.b16 %v4044
      %v4084 = vunpack.c.l.b16 %v4045
      %v4085 = vunpack.c.l.b16 %v4046
      %v4086 = vunpack.c.l.b16 %v4047
      %v4087 = vunpack.c.l.b16 %v4048
      %v4088 = vunpack.c.l.b16 %v4049
      %v4089 = vunpack.c.l.b16 %v4050
      %v4090 = vunpack.c.l.b16 %v4051
      %v4091 = vunpack.c.l.b16 %v4052
      %v4092 = vunpack.c.l.b16 %v4053
      %v4093 = vunpack.c.l.b16 %v4054
      %v4094 = vunpack.c.l.b16 %v4055
      %v4095 = vpack.c.b16 %v4080, %v4079
      %v4096 = vpack.c.b16 %v4082, %v4081
      %v4097 = vpack.c.b16 %v4084, %v4083
      %v4098 = vpack.c.b16 %v4086, %v4085
      %v4099 = vpack.c.b16 %v4088, %v4087
      %v4100 = vpack.c.b16 %v4090, %v4089
      %v4101 = vpack.c.b16 %v4092, %v4091
      %v4102 = vpack.c.b16 %v4094, %v4093
      %4111 = vmatprep.subr.bf16.mxu0 0
      %4112 = vmatpush1.bf16.msra.mxu0 %v4095
      %4113 = vmatprep.subr.bf16.mxu0 0
      %4114 = vmatpush1.bf16.msra.mxu0 %v4096
      %4115 = vmatprep.subr.bf16.mxu0 0
      %4116 = vmatpush1.bf16.msra.mxu0 %v4097
      %4117 = vmatprep.subr.bf16.mxu0 0
      %4118 = vmatpush1.bf16.msra.mxu0 %v4098
      %4119 = vmatprep.subr.bf16.mxu0 0
      %4120 = vmatpush1.bf16.msra.mxu0 %v4099
      %4121 = vmatprep.subr.bf16.mxu0 0
      %4122 = vmatpush1.bf16.msra.mxu0 %v4100
      %4123 = vmatprep.subr.bf16.mxu0 0
      %4124 = vmatpush1.bf16.msra.mxu0 %v4101
      %4125 = vmatprep.subr.bf16.mxu0 0
      %4126 = vmatpush1.bf16.msra.mxu0 %v4102
      %4127 = vmatprep.subr.bf16.mxu0 0
      %4128 = vmatpush1.bf16.msra.mxu0 0
      %4129 = vmatprep.subr.bf16.mxu0 0
      %4130 = vmatpush1.bf16.msra.mxu0 0
      %4131 = vmatprep.subr.bf16.mxu0 0
      %4132 = vmatpush1.bf16.msra.mxu0 0
      %4133 = vmatprep.subr.bf16.mxu0 0
      %4134 = vmatpush1.bf16.msra.mxu0 0
      %4135 = vmatprep.subr.bf16.mxu0 0
      %4136 = vmatpush1.bf16.msra.mxu0 0
      %4137 = vmatprep.subr.bf16.mxu0 0
      %4138 = vmatpush1.bf16.msra.mxu0 0
      %4139 = vmatprep.subr.bf16.mxu0 0
      %4140 = vmatpush1.bf16.msra.mxu0 0
      %4141 = vmatprep.subr.bf16.mxu0 0
      %4142 = vmatpush1.bf16.msra.mxu0 0
      %4143 = vmatprep.mubr.bf16.mxu0 0
      %4144 = vmatmul.mubr.bf16.gmra.mrb[0].mxu0 %v4039
      %v4145 = vpop.f32.mrb[0].mxu0
      %v4146 = vadd.f32 %v4061, %v4145
      %v4147 = vpop.f32.mrb[0].mxu0
      %v4148 = vpop.f32.mrb[0].mxu0
      %v4149 = vpop.f32.mrb[0].mxu0
      %4150 = vdwg.mxu0
      %4151 = vst [vmem:[%s439] sm:$0xff] %v4146
      %p4152 = scmp.lt.s32.totalorder %s24, 1
      %s4153 = scalar_select %p4152, %s24, 1
      %s4154 = smul.addr %s4153, 8
      %s4155 = scalar_lea.vmem %s11, %s4154
      %p4156 = scmp.lt.s32.totalorder %s24, 1
      %s4157 = scalar_select %p4156, %s24, 1
      %s4158 = smul.addr %s4157, 25
      %s4159 = smul.addr %s4158, 8
      %s4160 = scalar_lea.vmem %s12, %s4159
      // Predicated region
      $region65: #{learner_forward_pallas.1} parent=63 // pred_check
        %p4161 = pneg %p283
      $region66: #{learner_forward_pallas.1} parent=63 // pred_check_branch
        %4163 = sbr.rel (%p4161) target = $region68
      $region67: #{learner_forward_pallas.1} parent=63 // pred_region
        _
      $region68: #{learner_forward_pallas.1} parent=63 // pred_fallthru
        _
      // Predicated region
      $region69: #{learner_forward_pallas.1} parent=63 // pred_check
        %p4164 = pneg %p309
      $region70: #{learner_forward_pallas.1} parent=63 // pred_check_branch
        %4166 = sbr.rel (%p4164) target = $region72
      $region71: #{learner_forward_pallas.1} parent=63 // pred_region
        _
      $region72: #{learner_forward_pallas.1} parent=63 // pred_fallthru
        _
    $region64: #{learner_forward_pallas.1} parent=5 // pred_fallthru
      _
    %p4167 = scmp.le.s32.totalorder 2, %s19
    // Predicated region
    $region73: #{learner_forward_pallas.1} parent=5 // pred_check
      %p4168 = pneg %p4167
    $region74: #{learner_forward_pallas.1} parent=5 // pred_check_branch
      %4170 = sbr.rel (%p4168) target = $region76
    $region75: #{learner_forward_pallas.1} parent=5 // pred_region
      %s4171 = ssub.s32 %s19, 2
      // Predicated region
      $region77: #{learner_forward_pallas.1} parent=75 // pred_check
        %p4172 = pneg %p289
      $region78: #{learner_forward_pallas.1} parent=75 // pred_check_branch
        %4174 = sbr.rel (%p4172) target = $region80
      $region79: #{learner_forward_pallas.1} parent=75 // pred_region
        %p4175 = scmp.lt.s32.totalorder %s25, 1
        %s4176 = scalar_select %p4175, %s25, 1
        %s4177 = smul.addr %s4176, 8
        %s4178 = scalar_lea.vmem %s11, %s4177
      $region80: #{learner_forward_pallas.1} parent=75 // pred_fallthru
        _
      // Predicated region
      $region81: #{learner_forward_pallas.1} parent=75 // pred_check
        %p4179 = pneg %p315
      $region82: #{learner_forward_pallas.1} parent=75 // pred_check_branch
        %4181 = sbr.rel (%p4179) target = $region84
      $region83: #{learner_forward_pallas.1} parent=75 // pred_region
        %p4182 = scmp.lt.s32.totalorder %s25, 1
        %s4183 = scalar_select %p4182, %s25, 1
        %s4184 = smul.addr %s4183, 25
        %s4185 = smul.addr %s4184, 8
        %s4186 = scalar_lea.vmem %s12, %s4185
      $region84: #{learner_forward_pallas.1} parent=75 // pred_fallthru
        _
    $region76: #{learner_forward_pallas.1} parent=5 // pred_fallthru
      _
  $region6: #{learner_forward_pallas.1} parent=0 // loop_footer
    %s23 = sadd.s32 1, %s19
  $region7: #{learner_forward_pallas.1} parent=0 // loop_footer_branch
    %18 = sbr.rel target = $region3
  $region8: #{learner_forward_pallas.1} parent=0 // loop_exit
    _

</llo_original>
